<compile_context>
chip_gen: v6e
topology: v6e:2x2x1
jax: 0.10.0
libtpu: 0.0.40
codegen_flags: <defaults>
</compile_context>

<pallas_src>
import jax
import jax.numpy as jnp
from jax.experimental import pallas as pl
from jax.experimental.pallas import tpu as pltpu

_MIB = 1024 * 1024


def attn_decoder_qa_kernel(
    p_ref, q_ref, mask_ref, ent_ref,
    a1p_w, a1q_w, ab1, a2_w,
    l1p_w, l1q_w, lb1, l2_w, l2_b,
    attn_out, pred_out,
    d_scratch,
):
    BB, T = mask_ref.shape
    H = q_ref.shape[1]
    H2 = a1p_w.shape[1]
    neg_inf = jnp.float32(-jnp.inf)

    # ---- attention + context + decode-hidden: once per batch block (first O tile only) ----
    @pl.when(pl.program_id(1) == 0)
    def _():
        P2 = p_ref[...]                                   # (BB*T, H) bf16
        q = q_ref[...]                                    # (BB, H)   bf16
        m = mask_ref[...]                                 # (BB, T)   f32, 1.0 == padded position

        # TanhQA attention scores: one fused bf16 MXU matmul over all BB*T rows.
        hp = jnp.dot(P2, a1p_w[...], preferred_element_type=jnp.float32)   # (BB*T, H2)
        hq = jnp.dot(q, a1q_w[...], preferred_element_type=jnp.float32)    # (BB, H2)
        a1 = jnp.tanh(hp.reshape(BB, T, H2) + hq[:, None, :] + ab1[...])   # (BB, T, H2)
        # attn2 weight as a (1, H2) row -> lane reduce gives lane-dense (BB, T) scores.
        scores = jnp.sum(a1 * a2_w[...], axis=-1)                          # (BB, T)

        # masked softmax along the sequence (lane) axis.
        # NOTE: a fully-padded row yields 0/0 = NaN, same as the PyTorch reference.
        scores = jnp.where(m > 0, neg_inf, scores)
        mx = jnp.max(scores, axis=-1, keepdims=True)
        ex = jnp.exp(scores - mx)
        denom = jnp.sum(ex, axis=-1, keepdims=True)
        attn = ex * pl.reciprocal(denom, approx=True)                      # (BB, T)
        attn_out[...] = attn

        # context[b] = sum_t attn[b,t] * P[b,t,:]  -> VPU multiply + XLU sublane reduce
        # (replaces the previous block-diagonal MXU matmul; only the useful MACs remain).
        context = jnp.sum(attn[:, :, None] * P2.reshape(BB, T, H), axis=1)  # (BB, H) f32

        # decode hidden: tanh(linear_1p(context) + linear_1q(Qoutput) + folded bias)
        dp = jnp.dot(context.astype(jnp.bfloat16), l1p_w[...],
                     preferred_element_type=jnp.float32)
        dq = jnp.dot(q, l1q_w[...], preferred_element_type=jnp.float32)
        d_scratch[...] = jnp.tanh(dp + dq + lb1[...]).astype(d_scratch.dtype)   # (BB, H2)

    # ---- linear_2 over the current entity-vocabulary tile (runs for every O tile) ----
    pred = jnp.dot(d_scratch[...], l2_w[...],
                   preferred_element_type=jnp.float32) + l2_b[...]          # (BB, TO)
    # predict.masked_fill_((1 - entity_mask).bool(), -inf)
    pred = jnp.where(ent_ref[...] > 0, pred, neg_inf)
    pred_out[...] = pred


def _chip_config():
    """Per-generation VMEM budget and whether to keep >= 2 grid steps (v7x megacore)."""
    try:
        kind = jax.devices()[0].device_kind.lower()
    except Exception:
        kind = ""
    if "v7" in kind:
        return {"vmem_cap": 48 * _MIB, "two_steps": True}    # 64 MiB/TC, 2 TCs
    if "v6" in kind:
        return {"vmem_cap": 96 * _MIB, "two_steps": False}   # 128 MiB, 1 TC
    if "v5" in kind:
        return {"vmem_cap": 96 * _MIB, "two_steps": False}   # 128 MiB, 1 TC
    # Unknown chip: size for the smallest VMEM and assume multiple cores (safe everywhere).
    return {"vmem_cap": 48 * _MIB, "two_steps": True}


def _vmem_bytes_estimate(BB, T, H, H2, TO):
    """Shared VMEM arithmetic for block sizing and the compiler vmem limit."""
    bf16, f32 = 2, 4
    pipelined = 2 * (BB * T * H * bf16      # P tile (bf16, double-buffered)
                     + BB * H * bf16        # Qoutput
                     + BB * T * f32         # padding mask
                     + BB * TO * f32        # entity-mask tile
                     + BB * T * f32         # attn output
                     + BB * TO * f32        # predict output tile
                     + H2 * TO * bf16       # linear_2 weight tile
                     + TO * f32)            # linear_2 bias tile
    resident = (4 * H * H2 * bf16           # single-buffered bf16 weights
                + 3 * H2 * f32              # folded biases + attn2 row
                + BB * H2 * bf16)           # decode-hidden scratch
    temps = (BB * T * (2 * H2 + 6) + BB * (2 * H + 4 * H2)) * f32
    return pipelined + resident + temps


def _pick_block_b(B, T, H, H2, TO, cfg):
    """Largest batch block fitting the per-core VMEM budget; single grid step on v5e/v6e,
    >= 2 parallel steps on v7x; sublane dim kept at a multiple of 8 (or the full batch)."""
    if B <= 8:
        return B
    bb = pl.cdiv(B, 2) if cfg["two_steps"] else B
    while bb > 8 and _vmem_bytes_estimate(bb, T, H, H2, TO) > cfg["vmem_cap"]:
        bb = pl.cdiv(bb, 2)
    if bb < B:
        bb = max(8, (bb // 8) * 8)
    return min(bb, B)


def _pad_axis0(x, Bp):
    B = x.shape[0]
    if Bp == B:
        return x
    return jnp.pad(x, [(0, Bp - B)] + [(0, 0)] * (x.ndim - 1))


def _build_call(BB, T, H, H2, TO, Bp, Op, cfg, single_buffer_weights):
    grid = (Bp // BB, Op // TO)

    if single_buffer_weights:
        # Constant blocks never change across the grid -> no need for double buffering.
        def wspec(shape):
            return pl.BlockSpec(shape, lambda i, j: (0, 0), pipeline_mode=pl.Buffered(1))
    else:
        def wspec(shape):
            return pl.BlockSpec(shape, lambda i, j: (0, 0))

    in_specs = [
        pl.BlockSpec((BB * T, H), lambda i, j: (i, 0)),    # P rows (bf16): BB batches x T steps
        pl.BlockSpec((BB, H), lambda i, j: (i, 0)),        # Qoutput (bf16)
        pl.BlockSpec((BB, T), lambda i, j: (i, 0)),        # padding mask (lane-dense)
        pl.BlockSpec((BB, TO), lambda i, j: (i, j)),       # entity mask tile (lane-dense)
        wspec((H, H2)),                                    # attention.attn1p weight (bf16)
        wspec((H, H2)),                                    # attention.attn1q weight (bf16)
        wspec((1, H2)),                                    # folded attn1p+attn1q bias (f32)
        wspec((1, H2)),                                    # attention.attn2 weight row (f32)
        wspec((H, H2)),                                    # linear_1p weight (bf16)
        wspec((H, H2)),                                    # linear_1q weight (bf16)
        wspec((1, H2)),                                    # folded linear_1p+linear_1q bias (f32)
        pl.BlockSpec((H2, TO), lambda i, j: (0, j)),       # linear_2 weight tile (bf16)
        pl.BlockSpec((1, TO), lambda i, j: (0, j)),        # linear_2 bias tile (f32)
    ]
    out_specs = (
        pl.BlockSpec((BB, T), lambda i, j: (i, 0)),        # attn    (lane-dense)
        pl.BlockSpec((BB, TO), lambda i, j: (i, j)),       # predict (lane-dense tiles)
    )
    out_shape = (
        jax.ShapeDtypeStruct((Bp, T), jnp.float32),
        jax.ShapeDtypeStruct((Bp, Op), jnp.float32),
    )

    est = _vmem_bytes_estimate(BB, T, H, H2, TO)
    vmem_limit = int(min(cfg["vmem_cap"], max(16 * _MIB, 2 * est)))

    return pl.pallas_call(
        attn_decoder_qa_kernel,
        grid=grid,
        in_specs=in_specs,
        out_specs=out_specs,
        out_shape=out_shape,
        scratch_shapes=[pltpu.VMEM((BB, H2), jnp.bfloat16)],   # decode hidden, reused over O tiles
        compiler_params=pltpu.CompilerParams(
            dimension_semantics=("parallel", "arbitrary"),
            vmem_limit_bytes=vmem_limit,
        ),
    )


def attn_decoder_qa(Poutput, Qoutput, masks, entity_mask, params, *, block_b=None):
    B, T, H = Poutput.shape
    O = entity_mask.shape[-1]
    H2 = H // 2

    (a1p_w, a1p_b, a1q_w, a1q_b, a2_w,
     l1p_w, l1p_b, l1q_w, l1q_b, l2_w, l2_b) = params

    cfg = _chip_config()

    # --- entity-vocabulary tiling for linear_2 (single tile for small O) ---
    if O <= 512:
        TO, Op = O, O
    else:
        TO = 512
        Op = pl.cdiv(O, TO) * TO

    BB = _pick_block_b(B, T, H, H2, TO, cfg) if block_b is None else block_b
    Bp = pl.cdiv(B, BB) * BB            # pad the batch instead of asserting divisibility

    # --- operand prep: bf16 for every MXU operand; masks, biases and accumulation stay f32 ---
    to16 = lambda w: w.astype(jnp.bfloat16)
    p_flat = to16(_pad_axis0(Poutput, Bp)).reshape(Bp * T, H)
    q2 = to16(_pad_axis0(Qoutput, Bp))
    m2 = _pad_axis0(masks.astype(jnp.float32), Bp)
    e2 = _pad_axis0(entity_mask.astype(jnp.float32), Bp)

    a1p_w16, a1q_w16, l1p_w16, l1q_w16, l2_w16 = map(
        to16, (a1p_w, a1q_w, l1p_w, l1q_w, l2_w))
    ab1 = (a1p_b + a1q_b).astype(jnp.float32).reshape(1, H2)   # fold paired biases host-side
    lb1 = (l1p_b + l1q_b).astype(jnp.float32).reshape(1, H2)
    a2_row = a2_w.reshape(1, H2).astype(jnp.float32)           # attn2 weight as lane-dense row
    l2_b2 = l2_b.astype(jnp.float32).reshape(1, O)
    # TODO(synk): concatenating a1q_w/l1q_w into one (H, 2*H2) q-side matmul is only worthwhile
    #             when H2 is a multiple of 128 (clean lane split); skipped here.

    if Op != O:
        e2 = jnp.pad(e2, ((0, 0), (0, Op - O)))
        l2_w16 = jnp.pad(l2_w16, ((0, 0), (0, Op - O)))
        l2_b2 = jnp.pad(l2_b2, ((0, 0), (0, Op - O)))

    args = (p_flat, q2, m2, e2,
            a1p_w16, a1q_w16, ab1, a2_row,
            l1p_w16, l1q_w16, lb1, l2_w16, l2_b2)

    try:
        attn, pred = _build_call(BB, T, H, H2, TO, Bp, Op, cfg, True)(*args)
    except Exception:
        # Fallback for jax versions without single-buffer (pl.Buffered(1)) BlockSpec support.
        attn, pred = _build_call(BB, T, H, H2, TO, Bp, Op, cfg, False)(*args)

    return attn[:B], pred[:B, :O]


def reference(Poutput, Qoutput, masks, entity_mask, params):
    (a1p_w, a1p_b, a1q_w, a1q_b, a2_w,
     l1p_w, l1p_b, l1q_w, l1q_b, l2_w, l2_b) = params
    hp = Poutput @ a1p_w + a1p_b                       # (B, T, H2)
    hq = Qoutput @ a1q_w + a1q_b                       # (B, H2)
    a1 = jnp.tanh(hp + hq[:, None, :])
    scores = (a1 @ a2_w)[..., 0]                       # (B, T)
    scores = jnp.where(masks > 0, -jnp.inf, scores)
    attn = jax.nn.softmax(scores, axis=-1)
    context = jnp.sum(attn[..., None] * Poutput, axis=1)
    d = jnp.tanh(context @ l1p_w + l1p_b + Qoutput @ l1q_w + l1q_b)
    pred = d @ l2_w + l2_b
    pred = jnp.where(entity_mask > 0, pred, -jnp.inf)
    return attn, pred


def init_params(key, H, O):
    H2 = H // 2
    shapes = [
        (H, H2), (1, H2),      # attn1p
        (H, H2), (1, H2),      # attn1q
        (H2, 1),               # attn2 (bias=False)
        (H, H2), (1, H2),      # linear_1p
        (H, H2), (1, H2),      # linear_1q
        (H2, O), (1, O),       # linear_2
    ]
    keys = jax.random.split(key, len(shapes))
    return [jax.random.uniform(k, s, jnp.float32, -0.1, 0.1) for k, s in zip(keys, shapes)]


if __name__ == "__main__":
    B, T, H, O = 16, 16, 32, 8
    key = jax.random.PRNGKey(0)
    kp, kq, kparams = jax.random.split(key, 3)

    Poutput = jax.random.normal(kp, (B, T, H), jnp.float32)            # data.P.hidden
    Qoutput = jax.random.normal(kq, (B, H), jnp.float32)               # data.Q.last_hidden
    # padding mask: 1.0 == padded position (a few padded tails, never a fully padded row)
    masks = jnp.zeros((B, T), jnp.float32)
    masks = masks.at[1, -2:].set(1.0).at[5, -5:].set(1.0).at[11, -1:].set(1.0)
    # entity mask: 1.0 == valid candidate entity
    entity_mask = jnp.ones((B, O), jnp.float32)
    entity_mask = entity_mask.at[0, 3].set(0.0).at[7, 0].set(0.0)

    params = init_params(kparams, H, O)

    attn, predict = attn_decoder_qa(Poutput, Qoutput, masks, entity_mask, params)
    jax.block_until_ready(attn)
    jax.block_until_ready(predict)

    ref_attn, ref_pred = reference(Poutput, Qoutput, masks, entity_mask, params)
    # bf16 MXU operands (P, Q, all weights) + approx reciprocal -> compare to the f32
    # reference at bf16-level tolerances.
    assert jnp.allclose(attn, ref_attn, rtol=3e-2, atol=3e-3), "attention mismatch"
    assert jnp.allclose(predict, ref_pred, rtol=3e-2, atol=2e-2), "prediction mismatch"

    print("KERNEL_OK")
</pallas_src>

<mosaic_0001>
module attributes {stable_mosaic.version = 11 : i64} {
  func.func @attn_decoder_qa_kernel(%arg0: i32, %arg1: i32, %arg2: memref<128x32xbf16, #tpu.memory_space<vmem>>, %arg3: memref<8x32xbf16, #tpu.memory_space<vmem>>, %arg4: memref<8x16xf32, #tpu.memory_space<vmem>>, %arg5: memref<8x8xf32, #tpu.memory_space<vmem>>, %arg6: memref<32x16xbf16, #tpu.memory_space<vmem>>, %arg7: memref<32x16xbf16, #tpu.memory_space<vmem>>, %arg8: memref<1x16xf32, #tpu.memory_space<vmem>>, %arg9: memref<1x16xf32, #tpu.memory_space<vmem>>, %arg10: memref<32x16xbf16, #tpu.memory_space<vmem>>, %arg11: memref<32x16xbf16, #tpu.memory_space<vmem>>, %arg12: memref<1x16xf32, #tpu.memory_space<vmem>>, %arg13: memref<16x8xbf16, #tpu.memory_space<vmem>>, %arg14: memref<1x8xf32, #tpu.memory_space<vmem>>, %arg15: memref<8x16xf32, #tpu.memory_space<vmem>>, %arg16: memref<8x8xf32, #tpu.memory_space<vmem>>, %arg17: memref<8x16xbf16, #tpu.memory_space<vmem>>) attributes {dimension_semantics = [#tpu.dimension_semantics<parallel>, #tpu.dimension_semantics<arbitrary>], iteration_bounds = array<i64: 2, 1>, scalar_prefetch = 0 : i64, scratch_operands = 1 : i64, tpu.core_type = #tpu.core_type<tc>, window_params = [{transform_indices = @transform_0, window_bounds = array<i64: 128, 32>}, {transform_indices = @transform_1, window_bounds = array<i64: 8, 32>}, {transform_indices = @transform_2, window_bounds = array<i64: 8, 16>}, {transform_indices = @transform_3, window_bounds = array<i64: 8, 8>}, {pipeline_mode = #tpu.pipeline_mode<synchronous>, transform_indices = @transform_4, window_bounds = array<i64: 32, 16>}, {pipeline_mode = #tpu.pipeline_mode<synchronous>, transform_indices = @transform_5, window_bounds = array<i64: 32, 16>}, {pipeline_mode = #tpu.pipeline_mode<synchronous>, transform_indices = @transform_6, window_bounds = array<i64: 1, 16>}, {pipeline_mode = #tpu.pipeline_mode<synchronous>, transform_indices = @transform_7, window_bounds = array<i64: 1, 16>}, {pipeline_mode = #tpu.pipeline_mode<synchronous>, transform_indices = @transform_8, window_bounds = array<i64: 32, 16>}, {pipeline_mode = #tpu.pipeline_mode<synchronous>, transform_indices = @transform_9, window_bounds = array<i64: 32, 16>}, {pipeline_mode = #tpu.pipeline_mode<synchronous>, transform_indices = @transform_10, window_bounds = array<i64: 1, 16>}, {transform_indices = @transform_11, window_bounds = array<i64: 16, 8>}, {transform_indices = @transform_12, window_bounds = array<i64: 1, 8>}, {transform_indices = @transform_13, window_bounds = array<i64: 8, 16>}, {transform_indices = @transform_14, window_bounds = array<i64: 8, 8>}]} {
    %c0_i32 = arith.constant 0 : i32
    %0 = arith.cmpi eq, %arg1, %c0_i32 : i32
    %1 = arith.extui %0 : i1 to i32
    %cst = arith.constant 0xFF800000 : f32
    %c0_i32_0 = arith.constant 0 : i32
    %2 = arith.cmpi ne, %1, %c0_i32_0 : i32
    scf.if %2 {
      %c0_13 = arith.constant 0 : index
      %c0_14 = arith.constant 0 : index
      %15 = vector.load %arg2[%c0_13, %c0_14] : memref<128x32xbf16, #tpu.memory_space<vmem>>, vector<128x32xbf16>
      %c0_15 = arith.constant 0 : index
      %c0_16 = arith.constant 0 : index
      %16 = vector.load %arg3[%c0_15, %c0_16] : memref<8x32xbf16, #tpu.memory_space<vmem>>, vector<8x32xbf16>
      %c0_17 = arith.constant 0 : index
      %c0_18 = arith.constant 0 : index
      %17 = vector.load %arg4[%c0_17, %c0_18] : memref<8x16xf32, #tpu.memory_space<vmem>>, vector<8x16xf32>
      %c0_19 = arith.constant 0 : index
      %c0_20 = arith.constant 0 : index
      %18 = vector.load %arg6[%c0_19, %c0_20] : memref<32x16xbf16, #tpu.memory_space<vmem>>, vector<32x16xbf16>
      %cst_21 = arith.constant dense<0.000000e+00> : vector<128x16xf32>
      %19 = tpu.matmul %15, %18, %cst_21 {dimension_numbers = #tpu.dot_dimension_numbers<[1], [0], [0], [1], [0, 0, 1, 1], [], []>} : vector<128x32xbf16>, vector<32x16xbf16>, vector<128x16xf32> -> vector<128x16xf32>
      %c0_22 = arith.constant 0 : index
      %c0_23 = arith.constant 0 : index
      %20 = vector.load %arg7[%c0_22, %c0_23] : memref<32x16xbf16, #tpu.memory_space<vmem>>, vector<32x16xbf16>
      %cst_24 = arith.constant dense<0.000000e+00> : vector<8x16xf32>
      %21 = tpu.matmul %16, %20, %cst_24 {dimension_numbers = #tpu.dot_dimension_numbers<[1], [0], [0], [1], [0, 0, 1, 1], [], []>} : vector<8x32xbf16>, vector<32x16xbf16>, vector<8x16xf32> -> vector<8x16xf32>
      %22 = vector.shape_cast %19 : vector<128x16xf32> to vector<8x16x16xf32>
      %23 = vector.shape_cast %21 : vector<8x16xf32> to vector<8x1x16xf32>
      %24 = vector.broadcast %23 : vector<8x1x16xf32> to vector<8x16x16xf32>
      %25 = arith.addf %22, %24 : vector<8x16x16xf32>
      %c0_25 = arith.constant 0 : index
      %c0_26 = arith.constant 0 : index
      %26 = vector.load %arg8[%c0_25, %c0_26] : memref<1x16xf32, #tpu.memory_space<vmem>>, vector<1x16xf32>
      %27 = vector.shape_cast %26 : vector<1x16xf32> to vector<1x1x16xf32>
      %28 = vector.broadcast %27 : vector<1x1x16xf32> to vector<8x16x16xf32>
      %29 = arith.addf %25, %28 : vector<8x16x16xf32>
      %30 = math.tanh %29 : vector<8x16x16xf32>
      %c0_27 = arith.constant 0 : index
      %c0_28 = arith.constant 0 : index
      %31 = vector.load %arg9[%c0_27, %c0_28] : memref<1x16xf32, #tpu.memory_space<vmem>>, vector<1x16xf32>
      %32 = vector.shape_cast %31 : vector<1x16xf32> to vector<1x1x16xf32>
      %33 = vector.broadcast %32 : vector<1x1x16xf32> to vector<8x16x16xf32>
      %34 = arith.mulf %30, %33 : vector<8x16x16xf32>
      %cst_29 = arith.constant dense<0.000000e+00> : vector<8x16xf32>
      %35 = vector.multi_reduction <add>, %34, %cst_29 [2] : vector<8x16x16xf32> to vector<8x16xf32>
      %cst_30 = arith.constant 0.000000e+00 : f32
      %36 = vector.broadcast %cst_30 : f32 to vector<8x16xf32>
      %37 = arith.cmpf ogt, %17, %36 : vector<8x16xf32>
      %38 = vector.broadcast %cst : f32 to vector<8x16xf32>
      %39 = arith.select %37, %38, %35 : vector<8x16xi1>, vector<8x16xf32>
      %cst_31 = arith.constant dense<0xFF800000> : vector<8xf32>
      %40 = vector.multi_reduction <maximumf>, %39, %cst_31 [1] : vector<8x16xf32> to vector<8xf32>
      %41 = vector.shape_cast %40 : vector<8xf32> to vector<8x1xf32>
      %42 = vector.broadcast %41 : vector<8x1xf32> to vector<8x16xf32>
      %43 = arith.subf %39, %42 : vector<8x16xf32>
      %44 = math.exp %43 : vector<8x16xf32>
      %cst_32 = arith.constant dense<0.000000e+00> : vector<8xf32>
      %45 = vector.multi_reduction <add>, %44, %cst_32 [1] : vector<8x16xf32> to vector<8xf32>
      %46 = vector.shape_cast %45 : vector<8xf32> to vector<8x1xf32>
      %47 = tpu.reciprocal %46 {approx = true} : vector<8x1xf32> -> vector<8x1xf32>
      %48 = vector.broadcast %47 : vector<8x1xf32> to vector<8x16xf32>
      %49 = arith.mulf %44, %48 : vector<8x16xf32>
      %c0_33 = arith.constant 0 : index
      %c0_34 = arith.constant 0 : index
      %50 = vector.load %arg15[%c0_33, %c0_34] : memref<8x16xf32, #tpu.memory_space<vmem>>, vector<8x16xf32>
      tpu.vector_store %arg15[%c0_33, %c0_34], %49 {strides = array<i32>} : memref<8x16xf32, #tpu.memory_space<vmem>>, vector<8x16xf32>,
      %51 = vector.shape_cast %49 : vector<8x16xf32> to vector<8x16x1xf32>
      %52 = vector.shape_cast %15 : vector<128x32xbf16> to vector<8x16x32xbf16>
      %53 = arith.extf %52 : vector<8x16x32xbf16> to vector<8x16x32xf32>
      %54 = vector.broadcast %51 : vector<8x16x1xf32> to vector<8x16x32xf32>
      %55 = arith.mulf %54, %53 : vector<8x16x32xf32>
      %cst_35 = arith.constant dense<0.000000e+00> : vector<8x32xf32>
      %56 = vector.multi_reduction <add>, %55, %cst_35 [1] : vector<8x16x32xf32> to vector<8x32xf32>
      %57 = arith.truncf %56 : vector<8x32xf32> to vector<8x32xbf16>
      %c0_36 = arith.constant 0 : index
      %c0_37 = arith.constant 0 : index
      %58 = vector.load %arg10[%c0_36, %c0_37] : memref<32x16xbf16, #tpu.memory_space<vmem>>, vector<32x16xbf16>
      %cst_38 = arith.constant dense<0.000000e+00> : vector<8x16xf32>
      %59 = tpu.matmul %57, %58, %cst_38 {dimension_numbers = #tpu.dot_dimension_numbers<[1], [0], [0], [1], [0, 0, 1, 1], [], []>} : vector<8x32xbf16>, vector<32x16xbf16>, vector<8x16xf32> -> vector<8x16xf32>
      %c0_39 = arith.constant 0 : index
      %c0_40 = arith.constant 0 : index
      %60 = vector.load %arg11[%c0_39, %c0_40] : memref<32x16xbf16, #tpu.memory_space<vmem>>, vector<32x16xbf16>
      %cst_41 = arith.constant dense<0.000000e+00> : vector<8x16xf32>
      %61 = tpu.matmul %16, %60, %cst_41 {dimension_numbers = #tpu.dot_dimension_numbers<[1], [0], [0], [1], [0, 0, 1, 1], [], []>} : vector<8x32xbf16>, vector<32x16xbf16>, vector<8x16xf32> -> vector<8x16xf32>
      %62 = arith.addf %59, %61 : vector<8x16xf32>
      %c0_42 = arith.constant 0 : index
      %c0_43 = arith.constant 0 : index
      %63 = vector.load %arg12[%c0_42, %c0_43] : memref<1x16xf32, #tpu.memory_space<vmem>>, vector<1x16xf32>
      %64 = vector.broadcast %63 : vector<1x16xf32> to vector<8x16xf32>
      %65 = arith.addf %62, %64 : vector<8x16xf32>
      %66 = math.tanh %65 : vector<8x16xf32>
      %67 = arith.truncf %66 : vector<8x16xf32> to vector<8x16xbf16>
      %c0_44 = arith.constant 0 : index
      %c0_45 = arith.constant 0 : index
      %68 = vector.load %arg17[%c0_44, %c0_45] : memref<8x16xbf16, #tpu.memory_space<vmem>>, vector<8x16xbf16>
      tpu.vector_store %arg17[%c0_44, %c0_45], %67 {strides = array<i32>} : memref<8x16xbf16, #tpu.memory_space<vmem>>, vector<8x16xbf16>,
    } else {
    }
    %c0 = arith.constant 0 : index
    %c0_1 = arith.constant 0 : index
    %3 = vector.load %arg17[%c0, %c0_1] : memref<8x16xbf16, #tpu.memory_space<vmem>>, vector<8x16xbf16>
    %c0_2 = arith.constant 0 : index
    %c0_3 = arith.constant 0 : index
    %4 = vector.load %arg13[%c0_2, %c0_3] : memref<16x8xbf16, #tpu.memory_space<vmem>>, vector<16x8xbf16>
    %cst_4 = arith.constant dense<0.000000e+00> : vector<8x8xf32>
    %5 = tpu.matmul %3, %4, %cst_4 {dimension_numbers = #tpu.dot_dimension_numbers<[1], [0], [0], [1], [0, 0, 1, 1], [], []>} : vector<8x16xbf16>, vector<16x8xbf16>, vector<8x8xf32> -> vector<8x8xf32>
    %c0_5 = arith.constant 0 : index
    %c0_6 = arith.constant 0 : index
    %6 = vector.load %arg14[%c0_5, %c0_6] : memref<1x8xf32, #tpu.memory_space<vmem>>, vector<1x8xf32>
    %7 = vector.broadcast %6 : vector<1x8xf32> to vector<8x8xf32>
    %8 = arith.addf %5, %7 : vector<8x8xf32>
    %c0_7 = arith.constant 0 : index
    %c0_8 = arith.constant 0 : index
    %9 = vector.load %arg5[%c0_7, %c0_8] : memref<8x8xf32, #tpu.memory_space<vmem>>, vector<8x8xf32>
    %cst_9 = arith.constant 0.000000e+00 : f32
    %10 = vector.broadcast %cst_9 : f32 to vector<8x8xf32>
    %11 = arith.cmpf ogt, %9, %10 : vector<8x8xf32>
    %cst_10 = arith.constant 0xFF800000 : f32
    %12 = vector.broadcast %cst_10 : f32 to vector<8x8xf32>
    %13 = arith.select %11, %8, %12 : vector<8x8xi1>, vector<8x8xf32>
    %c0_11 = arith.constant 0 : index
    %c0_12 = arith.constant 0 : index
    %14 = vector.load %arg16[%c0_11, %c0_12] : memref<8x8xf32, #tpu.memory_space<vmem>>, vector<8x8xf32>
    tpu.vector_store %arg16[%c0_11, %c0_12], %13 {strides = array<i32>} : memref<8x8xf32, #tpu.memory_space<vmem>>, vector<8x8xf32>,
    return
  }
  func.func @transform_0(%arg0: i32, %arg1: i32) -> (i32, i32) {
    %c0_i32 = arith.constant 0 : i32
    %c0_i32_0 = arith.constant 0 : i32
    return %arg0, %c0_i32 : i32, i32
  }
  func.func @transform_1(%arg0: i32, %arg1: i32) -> (i32, i32) {
    %c0_i32 = arith.constant 0 : i32
    %c0_i32_0 = arith.constant 0 : i32
    return %arg0, %c0_i32 : i32, i32
  }
  func.func @transform_2(%arg0: i32, %arg1: i32) -> (i32, i32) {
    %c0_i32 = arith.constant 0 : i32
    %c0_i32_0 = arith.constant 0 : i32
    return %arg0, %c0_i32 : i32, i32
  }
  func.func @transform_3(%arg0: i32, %arg1: i32) -> (i32, i32) {
    %c0_i32 = arith.constant 0 : i32
    return %arg0, %arg1 : i32, i32
  }
  func.func @transform_4(%arg0: i32, %arg1: i32) -> (i32, i32) {
    %c0_i32 = arith.constant 0 : i32
    %c0_i32_0 = arith.constant 0 : i32
    %c0_i32_1 = arith.constant 0 : i32
    return %c0_i32, %c0_i32_0 : i32, i32
  }
  func.func @transform_5(%arg0: i32, %arg1: i32) -> (i32, i32) {
    %c0_i32 = arith.constant 0 : i32
    %c0_i32_0 = arith.constant 0 : i32
    %c0_i32_1 = arith.constant 0 : i32
    return %c0_i32, %c0_i32_0 : i32, i32
  }
  func.func @transform_6(%arg0: i32, %arg1: i32) -> (i32, i32) {
    %c0_i32 = arith.constant 0 : i32
    %c0_i32_0 = arith.constant 0 : i32
    %c0_i32_1 = arith.constant 0 : i32
    return %c0_i32, %c0_i32_0 : i32, i32
  }
  func.func @transform_7(%arg0: i32, %arg1: i32) -> (i32, i32) {
    %c0_i32 = arith.constant 0 : i32
    %c0_i32_0 = arith.constant 0 : i32
    %c0_i32_1 = arith.constant 0 : i32
    return %c0_i32, %c0_i32_0 : i32, i32
  }
  func.func @transform_8(%arg0: i32, %arg1: i32) -> (i32, i32) {
    %c0_i32 = arith.constant 0 : i32
    %c0_i32_0 = arith.constant 0 : i32
    %c0_i32_1 = arith.constant 0 : i32
    return %c0_i32, %c0_i32_0 : i32, i32
  }
  func.func @transform_9(%arg0: i32, %arg1: i32) -> (i32, i32) {
    %c0_i32 = arith.constant 0 : i32
    %c0_i32_0 = arith.constant 0 : i32
    %c0_i32_1 = arith.constant 0 : i32
    return %c0_i32, %c0_i32_0 : i32, i32
  }
  func.func @transform_10(%arg0: i32, %arg1: i32) -> (i32, i32) {
    %c0_i32 = arith.constant 0 : i32
    %c0_i32_0 = arith.constant 0 : i32
    %c0_i32_1 = arith.constant 0 : i32
    return %c0_i32, %c0_i32_0 : i32, i32
  }
  func.func @transform_11(%arg0: i32, %arg1: i32) -> (i32, i32) {
    %c0_i32 = arith.constant 0 : i32
    %c0_i32_0 = arith.constant 0 : i32
    return %c0_i32, %arg1 : i32, i32
  }
  func.func @transform_12(%arg0: i32, %arg1: i32) -> (i32, i32) {
    %c0_i32 = arith.constant 0 : i32
    %c0_i32_0 = arith.constant 0 : i32
    return %c0_i32, %arg1 : i32, i32
  }
  func.func @transform_13(%arg0: i32, %arg1: i32) -> (i32, i32) {
    %c0_i32 = arith.constant 0 : i32
    %c0_i32_0 = arith.constant 0 : i32
    return %arg0, %c0_i32 : i32, i32
  }
  func.func @transform_14(%arg0: i32, %arg1: i32) -> (i32, i32) {
    %c0_i32 = arith.constant 0 : i32
    return %arg0, %arg1 : i32, i32
  }
}

module attributes {stable_mosaic.version = 11 : i64} {
  func.func @attn_decoder_qa_kernel(%arg0: i32, %arg1: i32, %arg2: memref<128x32xbf16, #tpu.memory_space<vmem>>, %arg3: memref<8x32xbf16, #tpu.memory_space<vmem>>, %arg4: memref<8x16xf32, #tpu.memory_space<vmem>>, %arg5: memref<8x8xf32, #tpu.memory_space<vmem>>, %arg6: memref<32x16xbf16, #tpu.memory_space<vmem>>, %arg7: memref<32x16xbf16, #tpu.memory_space<vmem>>, %arg8: memref<1x16xf32, #tpu.memory_space<vmem>>, %arg9: memref<1x16xf32, #tpu.memory_space<vmem>>, %arg10: memref<32x16xbf16, #tpu.memory_space<vmem>>, %arg11: memref<32x16xbf16, #tpu.memory_space<vmem>>, %arg12: memref<1x16xf32, #tpu.memory_space<vmem>>, %arg13: memref<16x8xbf16, #tpu.memory_space<vmem>>, %arg14: memref<1x8xf32, #tpu.memory_space<vmem>>, %arg15: memref<8x16xf32, #tpu.memory_space<vmem>>, %arg16: memref<8x8xf32, #tpu.memory_space<vmem>>, %arg17: memref<8x16xbf16, #tpu.memory_space<vmem>>) attributes {dimension_semantics = [#tpu.dimension_semantics<parallel>, #tpu.dimension_semantics<arbitrary>], iteration_bounds = array<i64: 2, 1>, scalar_prefetch = 0 : i64, scratch_operands = 1 : i64, tpu.core_type = #tpu.core_type<tc>, window_params = [{transform_indices = @transform_0, window_bounds = array<i64: 128, 32>}, {transform_indices = @transform_1, window_bounds = array<i64: 8, 32>}, {transform_indices = @transform_2, window_bounds = array<i64: 8, 16>}, {transform_indices = @transform_3, window_bounds = array<i64: 8, 8>}, {pipeline_mode = #tpu.pipeline_mode<synchronous>, transform_indices = @transform_4, window_bounds = array<i64: 32, 16>}, {pipeline_mode = #tpu.pipeline_mode<synchronous>, transform_indices = @transform_5, window_bounds = array<i64: 32, 16>}, {pipeline_mode = #tpu.pipeline_mode<synchronous>, transform_indices = @transform_6, window_bounds = array<i64: 1, 16>}, {pipeline_mode = #tpu.pipeline_mode<synchronous>, transform_indices = @transform_7, window_bounds = array<i64: 1, 16>}, {pipeline_mode = #tpu.pipeline_mode<synchronous>, transform_indices = @transform_8, window_bounds = array<i64: 32, 16>}, {pipeline_mode = #tpu.pipeline_mode<synchronous>, transform_indices = @transform_9, window_bounds = array<i64: 32, 16>}, {pipeline_mode = #tpu.pipeline_mode<synchronous>, transform_indices = @transform_10, window_bounds = array<i64: 1, 16>}, {transform_indices = @transform_11, window_bounds = array<i64: 16, 8>}, {transform_indices = @transform_12, window_bounds = array<i64: 1, 8>}, {transform_indices = @transform_13, window_bounds = array<i64: 8, 16>}, {transform_indices = @transform_14, window_bounds = array<i64: 8, 8>}]} {
    %c0_i32 = arith.constant 0 : i32
    %0 = arith.cmpi eq, %arg1, %c0_i32 : i32
    %1 = arith.extui %0 : i1 to i32
    %cst = arith.constant 0xFF800000 : f32
    %c0_i32_0 = arith.constant 0 : i32
    %2 = arith.cmpi ne, %1, %c0_i32_0 : i32
    scf.if %2 {
      %c0_13 = arith.constant 0 : index
      %c0_14 = arith.constant 0 : index
      %15 = vector.load %arg2[%c0_13, %c0_14] : memref<128x32xbf16, #tpu.memory_space<vmem>>, vector<128x32xbf16>
      %c0_15 = arith.constant 0 : index
      %c0_16 = arith.constant 0 : index
      %16 = vector.load %arg3[%c0_15, %c0_16] : memref<8x32xbf16, #tpu.memory_space<vmem>>, vector<8x32xbf16>
      %c0_17 = arith.constant 0 : index
      %c0_18 = arith.constant 0 : index
      %17 = vector.load %arg4[%c0_17, %c0_18] : memref<8x16xf32, #tpu.memory_space<vmem>>, vector<8x16xf32>
      %c0_19 = arith.constant 0 : index
      %c0_20 = arith.constant 0 : index
      %18 = vector.load %arg6[%c0_19, %c0_20] : memref<32x16xbf16, #tpu.memory_space<vmem>>, vector<32x16xbf16>
      %cst_21 = arith.constant dense<0.000000e+00> : vector<128x16xf32>
      %19 = tpu.matmul %15, %18, %cst_21 {dimension_numbers = #tpu.dot_dimension_numbers<[1], [0], [0], [1], [0, 0, 1, 1], [], []>} : vector<128x32xbf16>, vector<32x16xbf16>, vector<128x16xf32> -> vector<128x16xf32>
      %c0_22 = arith.constant 0 : index
      %c0_23 = arith.constant 0 : index
      %20 = vector.load %arg7[%c0_22, %c0_23] : memref<32x16xbf16, #tpu.memory_space<vmem>>, vector<32x16xbf16>
      %cst_24 = arith.constant dense<0.000000e+00> : vector<8x16xf32>
      %21 = tpu.matmul %16, %20, %cst_24 {dimension_numbers = #tpu.dot_dimension_numbers<[1], [0], [0], [1], [0, 0, 1, 1], [], []>} : vector<8x32xbf16>, vector<32x16xbf16>, vector<8x16xf32> -> vector<8x16xf32>
      %22 = vector.shape_cast %19 : vector<128x16xf32> to vector<8x16x16xf32>
      %23 = vector.shape_cast %21 : vector<8x16xf32> to vector<8x1x16xf32>
      %24 = vector.broadcast %23 : vector<8x1x16xf32> to vector<8x16x16xf32>
      %25 = arith.addf %22, %24 : vector<8x16x16xf32>
      %c0_25 = arith.constant 0 : index
      %c0_26 = arith.constant 0 : index
      %26 = vector.load %arg8[%c0_25, %c0_26] : memref<1x16xf32, #tpu.memory_space<vmem>>, vector<1x16xf32>
      %27 = vector.shape_cast %26 : vector<1x16xf32> to vector<1x1x16xf32>
      %28 = vector.broadcast %27 : vector<1x1x16xf32> to vector<8x16x16xf32>
      %29 = arith.addf %25, %28 : vector<8x16x16xf32>
      %30 = math.tanh %29 : vector<8x16x16xf32>
      %c0_27 = arith.constant 0 : index
      %c0_28 = arith.constant 0 : index
      %31 = vector.load %arg9[%c0_27, %c0_28] : memref<1x16xf32, #tpu.memory_space<vmem>>, vector<1x16xf32>
      %32 = vector.shape_cast %31 : vector<1x16xf32> to vector<1x1x16xf32>
      %33 = vector.broadcast %32 : vector<1x1x16xf32> to vector<8x16x16xf32>
      %34 = arith.mulf %30, %33 : vector<8x16x16xf32>
      %cst_29 = arith.constant dense<0.000000e+00> : vector<8x16xf32>
      %35 = vector.multi_reduction <add>, %34, %cst_29 [2] : vector<8x16x16xf32> to vector<8x16xf32>
      %cst_30 = arith.constant 0.000000e+00 : f32
      %36 = vector.broadcast %cst_30 : f32 to vector<8x16xf32>
      %37 = arith.cmpf ogt, %17, %36 : vector<8x16xf32>
      %38 = vector.broadcast %cst : f32 to vector<8x16xf32>
      %39 = arith.select %37, %38, %35 : vector<8x16xi1>, vector<8x16xf32>
      %cst_31 = arith.constant dense<0xFF800000> : vector<8xf32>
      %40 = vector.multi_reduction <maximumf>, %39, %cst_31 [1] : vector<8x16xf32> to vector<8xf32>
      %41 = vector.shape_cast %40 : vector<8xf32> to vector<8x1xf32>
      %42 = vector.broadcast %41 : vector<8x1xf32> to vector<8x16xf32>
      %43 = arith.subf %39, %42 : vector<8x16xf32>
      %44 = math.exp %43 : vector<8x16xf32>
      %cst_32 = arith.constant dense<0.000000e+00> : vector<8xf32>
      %45 = vector.multi_reduction <add>, %44, %cst_32 [1] : vector<8x16xf32> to vector<8xf32>
      %46 = vector.shape_cast %45 : vector<8xf32> to vector<8x1xf32>
      %47 = tpu.reciprocal %46 {approx = true} : vector<8x1xf32> -> vector<8x1xf32>
      %48 = vector.broadcast %47 : vector<8x1xf32> to vector<8x16xf32>
      %49 = arith.mulf %44, %48 : vector<8x16xf32>
      %c0_33 = arith.constant 0 : index
      %c0_34 = arith.constant 0 : index
      %50 = vector.load %arg15[%c0_33, %c0_34] : memref<8x16xf32, #tpu.memory_space<vmem>>, vector<8x16xf32>
      tpu.vector_store %arg15[%c0_33, %c0_34], %49 {strides = array<i32>} : memref<8x16xf32, #tpu.memory_space<vmem>>, vector<8x16xf32>,
      %51 = vector.shape_cast %49 : vector<8x16xf32> to vector<8x16x1xf32>
      %52 = vector.shape_cast %15 : vector<128x32xbf16> to vector<8x16x32xbf16>
      %53 = arith.extf %52 : vector<8x16x32xbf16> to vector<8x16x32xf32>
      %54 = vector.broadcast %51 : vector<8x16x1xf32> to vector<8x16x32xf32>
      %55 = arith.mulf %54, %53 : vector<8x16x32xf32>
      %cst_35 = arith.constant dense<0.000000e+00> : vector<8x32xf32>
      %56 = vector.multi_reduction <add>, %55, %cst_35 [1] : vector<8x16x32xf32> to vector<8x32xf32>
      %57 = arith.truncf %56 : vector<8x32xf32> to vector<8x32xbf16>
      %c0_36 = arith.constant 0 : index
      %c0_37 = arith.constant 0 : index
      %58 = vector.load %arg10[%c0_36, %c0_37] : memref<32x16xbf16, #tpu.memory_space<vmem>>, vector<32x16xbf16>
      %cst_38 = arith.constant dense<0.000000e+00> : vector<8x16xf32>
      %59 = tpu.matmul %57, %58, %cst_38 {dimension_numbers = #tpu.dot_dimension_numbers<[1], [0], [0], [1], [0, 0, 1, 1], [], []>} : vector<8x32xbf16>, vector<32x16xbf16>, vector<8x16xf32> -> vector<8x16xf32>
      %c0_39 = arith.constant 0 : index
      %c0_40 = arith.constant 0 : index
      %60 = vector.load %arg11[%c0_39, %c0_40] : memref<32x16xbf16, #tpu.memory_space<vmem>>, vector<32x16xbf16>
      %cst_41 = arith.constant dense<0.000000e+00> : vector<8x16xf32>
      %61 = tpu.matmul %16, %60, %cst_41 {dimension_numbers = #tpu.dot_dimension_numbers<[1], [0], [0], [1], [0, 0, 1, 1], [], []>} : vector<8x32xbf16>, vector<32x16xbf16>, vector<8x16xf32> -> vector<8x16xf32>
      %62 = arith.addf %59, %61 : vector<8x16xf32>
      %c0_42 = arith.constant 0 : index
      %c0_43 = arith.constant 0 : index
      %63 = vector.load %arg12[%c0_42, %c0_43] : memref<1x16xf32, #tpu.memory_space<vmem>>, vector<1x16xf32>
      %64 = vector.broadcast %63 : vector<1x16xf32> to vector<8x16xf32>
      %65 = arith.addf %62, %64 : vector<8x16xf32>
      %66 = math.tanh %65 : vector<8x16xf32>
      %67 = arith.truncf %66 : vector<8x16xf32> to vector<8x16xbf16>
      %c0_44 = arith.constant 0 : index
      %c0_45 = arith.constant 0 : index
      %68 = vector.load %arg17[%c0_44, %c0_45] : memref<8x16xbf16, #tpu.memory_space<vmem>>, vector<8x16xbf16>
      tpu.vector_store %arg17[%c0_44, %c0_45], %67 {strides = array<i32>} : memref<8x16xbf16, #tpu.memory_space<vmem>>, vector<8x16xbf16>,
    } else {
    }
    %c0 = arith.constant 0 : index
    %c0_1 = arith.constant 0 : index
    %3 = vector.load %arg17[%c0, %c0_1] : memref<8x16xbf16, #tpu.memory_space<vmem>>, vector<8x16xbf16>
    %c0_2 = arith.constant 0 : index
    %c0_3 = arith.constant 0 : index
    %4 = vector.load %arg13[%c0_2, %c0_3] : memref<16x8xbf16, #tpu.memory_space<vmem>>, vector<16x8xbf16>
    %cst_4 = arith.constant dense<0.000000e+00> : vector<8x8xf32>
    %5 = tpu.matmul %3, %4, %cst_4 {dimension_numbers = #tpu.dot_dimension_numbers<[1], [0], [0], [1], [0, 0, 1, 1], [], []>} : vector<8x16xbf16>, vector<16x8xbf16>, vector<8x8xf32> -> vector<8x8xf32>
    %c0_5 = arith.constant 0 : index
    %c0_6 = arith.constant 0 : index
    %6 = vector.load %arg14[%c0_5, %c0_6] : memref<1x8xf32, #tpu.memory_space<vmem>>, vector<1x8xf32>
    %7 = vector.broadcast %6 : vector<1x8xf32> to vector<8x8xf32>
    %8 = arith.addf %5, %7 : vector<8x8xf32>
    %c0_7 = arith.constant 0 : index
    %c0_8 = arith.constant 0 : index
    %9 = vector.load %arg5[%c0_7, %c0_8] : memref<8x8xf32, #tpu.memory_space<vmem>>, vector<8x8xf32>
    %cst_9 = arith.constant 0.000000e+00 : f32
    %10 = vector.broadcast %cst_9 : f32 to vector<8x8xf32>
    %11 = arith.cmpf ogt, %9, %10 : vector<8x8xf32>
    %cst_10 = arith.constant 0xFF800000 : f32
    %12 = vector.broadcast %cst_10 : f32 to vector<8x8xf32>
    %13 = arith.select %11, %8, %12 : vector<8x8xi1>, vector<8x8xf32>
    %c0_11 = arith.constant 0 : index
    %c0_12 = arith.constant 0 : index
    %14 = vector.load %arg16[%c0_11, %c0_12] : memref<8x8xf32, #tpu.memory_space<vmem>>, vector<8x8xf32>
    tpu.vector_store %arg16[%c0_11, %c0_12], %13 {strides = array<i32>} : memref<8x8xf32, #tpu.memory_space<vmem>>, vector<8x8xf32>,
    return
  }
  func.func @transform_0(%arg0: i32, %arg1: i32) -> (i32, i32) {
    %c0_i32 = arith.constant 0 : i32
    %c0_i32_0 = arith.constant 0 : i32
    return %arg0, %c0_i32 : i32, i32
  }
  func.func @transform_1(%arg0: i32, %arg1: i32) -> (i32, i32) {
    %c0_i32 = arith.constant 0 : i32
    %c0_i32_0 = arith.constant 0 : i32
    return %arg0, %c0_i32 : i32, i32
  }
  func.func @transform_2(%arg0: i32, %arg1: i32) -> (i32, i32) {
    %c0_i32 = arith.constant 0 : i32
    %c0_i32_0 = arith.constant 0 : i32
    return %arg0, %c0_i32 : i32, i32
  }
  func.func @transform_3(%arg0: i32, %arg1: i32) -> (i32, i32) {
    %c0_i32 = arith.constant 0 : i32
    return %arg0, %arg1 : i32, i32
  }
  func.func @transform_4(%arg0: i32, %arg1: i32) -> (i32, i32) {
    %c0_i32 = arith.constant 0 : i32
    %c0_i32_0 = arith.constant 0 : i32
    %c0_i32_1 = arith.constant 0 : i32
    return %c0_i32, %c0_i32_0 : i32, i32
  }
  func.func @transform_5(%arg0: i32, %arg1: i32) -> (i32, i32) {
    %c0_i32 = arith.constant 0 : i32
    %c0_i32_0 = arith.constant 0 : i32
    %c0_i32_1 = arith.constant 0 : i32
    return %c0_i32, %c0_i32_0 : i32, i32
  }
  func.func @transform_6(%arg0: i32, %arg1: i32) -> (i32, i32) {
    %c0_i32 = arith.constant 0 : i32
    %c0_i32_0 = arith.constant 0 : i32
    %c0_i32_1 = arith.constant 0 : i32
    return %c0_i32, %c0_i32_0 : i32, i32
  }
  func.func @transform_7(%arg0: i32, %arg1: i32) -> (i32, i32) {
    %c0_i32 = arith.constant 0 : i32
    %c0_i32_0 = arith.constant 0 : i32
    %c0_i32_1 = arith.constant 0 : i32
    return %c0_i32, %c0_i32_0 : i32, i32
  }
  func.func @transform_8(%arg0: i32, %arg1: i32) -> (i32, i32) {
    %c0_i32 = arith.constant 0 : i32
    %c0_i32_0 = arith.constant 0 : i32
    %c0_i32_1 = arith.constant 0 : i32
    return %c0_i32, %c0_i32_0 : i32, i32
  }
  func.func @transform_9(%arg0: i32, %arg1: i32) -> (i32, i32) {
    %c0_i32 = arith.constant 0 : i32
    %c0_i32_0 = arith.constant 0 : i32
    %c0_i32_1 = arith.constant 0 : i32
    return %c0_i32, %c0_i32_0 : i32, i32
  }
  func.func @transform_10(%arg0: i32, %arg1: i32) -> (i32, i32) {
    %c0_i32 = arith.constant 0 : i32
    %c0_i32_0 = arith.constant 0 : i32
    %c0_i32_1 = arith.constant 0 : i32
    return %c0_i32, %c0_i32_0 : i32, i32
  }
  func.func @transform_11(%arg0: i32, %arg1: i32) -> (i32, i32) {
    %c0_i32 = arith.constant 0 : i32
    %c0_i32_0 = arith.constant 0 : i32
    return %c0_i32, %arg1 : i32, i32
  }
  func.func @transform_12(%arg0: i32, %arg1: i32) -> (i32, i32) {
    %c0_i32 = arith.constant 0 : i32
    %c0_i32_0 = arith.constant 0 : i32
    return %c0_i32, %arg1 : i32, i32
  }
  func.func @transform_13(%arg0: i32, %arg1: i32) -> (i32, i32) {
    %c0_i32 = arith.constant 0 : i32
    %c0_i32_0 = arith.constant 0 : i32
    return %arg0, %c0_i32 : i32, i32
  }
  func.func @transform_14(%arg0: i32, %arg1: i32) -> (i32, i32) {
    %c0_i32 = arith.constant 0 : i32
    return %arg0, %arg1 : i32, i32
  }
}

</mosaic_0001>

<llo_original>
// kernel: tpu_custom_call.1
$region0: #{tpu_custom_call.1}
  #allocation0 [shape = 'u32[]', space=smem, size = 0x4, offset = 0x4, fixed_abs, tag = 'smem constant byte address 0x4 - core index']
  #allocation1 [shape = 'u32[144,128]{1,0:T(1,128)}', space=vmem, size = 0x12000, scoped, tag = 'internal scratch']
  #allocation2 [shape = 'bf16[8,16]{1,0:T(8,128)(2,1)}', space=vmem, size = 0x800, scoped, tag = 'scratch operand']
  %s0 = inlined_call_operand.vmem [shape: bf16[256,32], index: 0, kind: input, shape index: {}]
  %s1 = inlined_call_operand.vmem [shape: bf16[16,32], index: 1, kind: input, shape index: {}]
  %s2 = inlined_call_operand.vmem [shape: f32[16,16], index: 2, kind: input, shape index: {}]
  %s3 = inlined_call_operand.vmem [shape: f32[16,8], index: 3, kind: input, shape index: {}]
  %s4 = inlined_call_operand.vmem [shape: bf16[32,16], index: 4, kind: input, shape index: {}]
  %s5 = inlined_call_operand.vmem [shape: bf16[32,16], index: 5, kind: input, shape index: {}]
  %s6 = inlined_call_operand.vmem [shape: f32[1,16], index: 6, kind: input, shape index: {}]
  %s7 = inlined_call_operand.vmem [shape: f32[1,16], index: 7, kind: input, shape index: {}]
  %s8 = inlined_call_operand.vmem [shape: bf16[32,16], index: 8, kind: input, shape index: {}]
  %s9 = inlined_call_operand.vmem [shape: bf16[32,16], index: 9, kind: input, shape index: {}]
  %s10 = inlined_call_operand.vmem [shape: f32[1,16], index: 10, kind: input, shape index: {}]
  %s11 = inlined_call_operand.vmem [shape: bf16[16,8], index: 11, kind: input, shape index: {}]
  %s12 = inlined_call_operand.vmem [shape: f32[1,8], index: 12, kind: input, shape index: {}]
  %s13 = inlined_call_operand.hbm [shape: f32[16,16], index: 13, kind: output, shape index: {0}]
  %s14 = inlined_call_operand.vmem [shape: f32[16,8], index: 14, kind: output, shape index: {1}]
  %15 = xla_tuple %s13, %s14
  %s16 = sld [smem:[#allocation0]]
  $region97: #{tpu_custom_call.1} parent=0
    _
  %s18 = ssub.s32 1, %s16
  %s19 = scalar_select 0, %s18, %s16
  $region1: #{tpu_custom_call.1} parent=0
    #allocation3 [shape = 'u8[8192]{0}', space=vmem, size = 0x2000, scoped, tag = 'output window, operand 0']
    #allocation4 [shape = 's32[2]{0}', space=sflag, size = 0x8, scoped, tag = 'scoped memory for tpu_custom_call.1']
    %20 = vsyncpa [#allocation4], 0
    %s21 = scalar_lea.sflag [#allocation4], 1
    %22 = vsyncpa %s21, 0
    loop: start=0, step=1, limit=4
    $region2: #{tpu_custom_call.1} parent=1 // loop_pre_header
      _
    $region3: #{tpu_custom_call.1} parent=1 // loop_header
      %s24 = sphi 0, %s28
      %p25 = scmp.ge.s32.totalorder %s24, 4
      %s31 = sphi 0, %s43
      %s32 = sphi 0, %s39
      %s33 = sphi 0, %s31
      %s34 = sphi 0, %s32
      %s35 = sphi 0, %s33
      %s36 = sphi 0, %s34
      %s46 = sphi 0, %s48
      %s49 = sphi 0, %s46
      %s50 = sphi 0, %s49
      %s66 = sphi 0, %s50
      %s72 = sphi 0, %s74
      %s75 = sphi 0, %s72
      %s76 = sphi 0, %s75
      %s92 = sphi 0, %s76
      %s98 = sphi 0, %s100
      %s101 = sphi 0, %s98
      %s102 = sphi 0, %s101
      %s118 = sphi 0, %s102
      %s126 = sphi 0, %s128
      %s129 = sphi 0, %s126
      %s130 = sphi 0, %s129
      %s146 = sphi 0, %s130
      %s150 = sphi 0, %s150
      %s152 = sphi 0, %s150
      %s153 = sphi 0, %s152
      %s167 = sphi 0, %s153
      %s171 = sphi 0, %s171
      %s173 = sphi 0, %s171
      %s174 = sphi 0, %s173
      %s188 = sphi 0, %s174
      %s192 = sphi 0, %s192
      %s194 = sphi 0, %s192
      %s195 = sphi 0, %s194
      %s209 = sphi 0, %s195
      %s213 = sphi 0, %s213
      %s215 = sphi 0, %s213
      %s216 = sphi 0, %s215
      %s230 = sphi 0, %s216
      %s234 = sphi 0, %s234
      %s236 = sphi 0, %s234
      %s237 = sphi 0, %s236
      %s251 = sphi 0, %s237
      %s255 = sphi 0, %s255
      %s257 = sphi 0, %s255
      %s258 = sphi 0, %s257
      %s272 = sphi 0, %s258
      %s276 = sphi 0, %s276
      %s278 = sphi 0, %s276
      %s279 = sphi 0, %s278
      %s293 = sphi 0, %s279
      %s299 = sphi 0, %s301
      %s302 = sphi 0, %s299
      %s303 = sphi 0, %s302
      %s319 = sphi 0, %s303
      %s325 = sphi 0, %s327
      %s328 = sphi 0, %s325
      %s329 = sphi 0, %s328
      %s345 = sphi 0, %s329
      %s351 = sphi 0, %s353
      %s354 = sphi 0, %s351
      %s355 = sphi 0, %s354
      %s371 = sphi 0, %s355
      %s379 = sphi 0, %s381
      %s382 = sphi 0, %s379
      %s383 = sphi 0, %s382
      %s399 = sphi 0, %s383
    $region4: #{tpu_custom_call.1} parent=1 // loop_header_branch
      %27 = sbr.rel (%p25) target = $region8
    $region5: #{tpu_custom_call.1} parent=1 // loop_body
      %s29 = ssub.s32 %s24, 1
      %s30 = ssub.s32 %s24, 2
      %s37 = sadd.s32 1, %s32
      %p38 = scmp.ge.s32.totalorder %s37, 1
      %s39 = scalar_select %p38, 0, %s37
      %s40 = sadd.s32 1, %s31
      %s41 = scalar_select %p38, %s40, %s31
      %p42 = scmp.ge.s32.totalorder %s41, 2
      %s43 = scalar_select %p42, 0, %s41
      %s44 = ssub.s32 %s31, %s43
      %p45 = scmp.eq.s32.totalorder %s44, 0
      %s47 = sadd.s32 %s46, 1
      %s48 = scalar_select %p45, %s46, %s47
      %p51 = pneg %p45
      %p52 = scmp.eq.s32.totalorder %s24, 1
      %p53 = por %p51, %p52
      %p54 = scmp.ne.s32.totalorder %s46, %s49
      %p55 = scmp.eq.s32.totalorder %s24, 0
      %p56 = por %p54, %p55
      %p57 = scmp.ne.s32.totalorder %s46, %s49
      %p58 = scmp.eq.s32.totalorder %s29, 1
      %p59 = por %p57, %p58
      %p60 = scmp.ne.s32.totalorder %s49, %s50
      %p61 = scmp.eq.s32.totalorder %s29, 0
      %p62 = por %p60, %p61
      %p63 = scmp.ne.s32.totalorder %s49, %s50
      %p64 = scmp.eq.s32.totalorder %s30, 1
      %p65 = por %p63, %p64
      %p67 = scmp.ne.s32.totalorder %s50, %s66
      %p68 = scmp.eq.s32.totalorder %s30, 0
      %p69 = por %p67, %p68
      %s70 = ssub.s32 %s31, %s43
      %p71 = scmp.eq.s32.totalorder %s70, 0
      %s73 = sadd.s32 %s72, 1
      %s74 = scalar_select %p71, %s72, %s73
      %p77 = pneg %p71
      %p78 = scmp.eq.s32.totalorder %s24, 1
      %p79 = por %p77, %p78
      %p80 = scmp.ne.s32.totalorder %s72, %s75
      %p81 = scmp.eq.s32.totalorder %s24, 0
      %p82 = por %p80, %p81
      %p83 = scmp.ne.s32.totalorder %s72, %s75
      %p84 = scmp.eq.s32.totalorder %s29, 1
      %p85 = por %p83, %p84
      %p86 = scmp.ne.s32.totalorder %s75, %s76
      %p87 = scmp.eq.s32.totalorder %s29, 0
      %p88 = por %p86, %p87
      %p89 = scmp.ne.s32.totalorder %s75, %s76
      %p90 = scmp.eq.s32.totalorder %s30, 1
      %p91 = por %p89, %p90
      %p93 = scmp.ne.s32.totalorder %s76, %s92
      %p94 = scmp.eq.s32.totalorder %s30, 0
      %p95 = por %p93, %p94
      %s96 = ssub.s32 %s31, %s43
      %p97 = scmp.eq.s32.totalorder %s96, 0
      %s99 = sadd.s32 %s98, 1
      %s100 = scalar_select %p97, %s98, %s99
      %p103 = pneg %p97
      %p104 = scmp.eq.s32.totalorder %s24, 1
      %p105 = por %p103, %p104
      %p106 = scmp.ne.s32.totalorder %s98, %s101
      %p107 = scmp.eq.s32.totalorder %s24, 0
      %p108 = por %p106, %p107
      %p109 = scmp.ne.s32.totalorder %s98, %s101
      %p110 = scmp.eq.s32.totalorder %s29, 1
      %p111 = por %p109, %p110
      %p112 = scmp.ne.s32.totalorder %s101, %s102
      %p113 = scmp.eq.s32.totalorder %s29, 0
      %p114 = por %p112, %p113
      %p115 = scmp.ne.s32.totalorder %s101, %s102
      %p116 = scmp.eq.s32.totalorder %s30, 1
      %p117 = por %p115, %p116
      %p119 = scmp.ne.s32.totalorder %s102, %s118
      %p120 = scmp.eq.s32.totalorder %s30, 0
      %p121 = por %p119, %p120
      %s122 = ssub.s32 %s31, %s43
      %s123 = ssub.s32 %s32, %s39
      %s124 = sor.u32 %s122, %s123
      %p125 = scmp.eq.s32.totalorder %s124, 0
      %s127 = sadd.s32 %s126, 1
      %s128 = scalar_select %p125, %s126, %s127
      %p131 = pneg %p125
      %p132 = scmp.eq.s32.totalorder %s24, 1
      %p133 = por %p131, %p132
      %p134 = scmp.ne.s32.totalorder %s126, %s129
      %p135 = scmp.eq.s32.totalorder %s24, 0
      %p136 = por %p134, %p135
      %p137 = scmp.ne.s32.totalorder %s126, %s129
      %p138 = scmp.eq.s32.totalorder %s29, 1
      %p139 = por %p137, %p138
      %p140 = scmp.ne.s32.totalorder %s129, %s130
      %p141 = scmp.eq.s32.totalorder %s29, 0
      %p142 = por %p140, %p141
      %p143 = scmp.ne.s32.totalorder %s129, %s130
      %p144 = scmp.eq.s32.totalorder %s30, 1
      %p145 = por %p143, %p144
      %p147 = scmp.ne.s32.totalorder %s130, %s146
      %p148 = scmp.eq.s32.totalorder %s30, 0
      %p149 = por %p147, %p148
      %s151 = sadd.s32 %s150, 1
      %p154 = scmp.eq.s32.totalorder %s24, 1
      %p155 = scmp.ne.s32.totalorder %s150, %s152
      %p156 = scmp.eq.s32.totalorder %s24, 0
      %p157 = por %p155, %p156
      %p158 = scmp.ne.s32.totalorder %s150, %s152
      %p159 = scmp.eq.s32.totalorder %s29, 1
      %p160 = por %p158, %p159
      %p161 = scmp.ne.s32.totalorder %s152, %s153
      %p162 = scmp.eq.s32.totalorder %s29, 0
      %p163 = por %p161, %p162
      %p164 = scmp.ne.s32.totalorder %s152, %s153
      %p165 = scmp.eq.s32.totalorder %s30, 1
      %p166 = por %p164, %p165
      %p168 = scmp.ne.s32.totalorder %s153, %s167
      %p169 = scmp.eq.s32.totalorder %s30, 0
      %p170 = por %p168, %p169
      %s172 = sadd.s32 %s171, 1
      %p175 = scmp.eq.s32.totalorder %s24, 1
      %p176 = scmp.ne.s32.totalorder %s171, %s173
      %p177 = scmp.eq.s32.totalorder %s24, 0
      %p178 = por %p176, %p177
      %p179 = scmp.ne.s32.totalorder %s171, %s173
      %p180 = scmp.eq.s32.totalorder %s29, 1
      %p181 = por %p179, %p180
      %p182 = scmp.ne.s32.totalorder %s173, %s174
      %p183 = scmp.eq.s32.totalorder %s29, 0
      %p184 = por %p182, %p183
      %p185 = scmp.ne.s32.totalorder %s173, %s174
      %p186 = scmp.eq.s32.totalorder %s30, 1
      %p187 = por %p185, %p186
      %p189 = scmp.ne.s32.totalorder %s174, %s188
      %p190 = scmp.eq.s32.totalorder %s30, 0
      %p191 = por %p189, %p190
      %s193 = sadd.s32 %s192, 1
      %p196 = scmp.eq.s32.totalorder %s24, 1
      %p197 = scmp.ne.s32.totalorder %s192, %s194
      %p198 = scmp.eq.s32.totalorder %s24, 0
      %p199 = por %p197, %p198
      %p200 = scmp.ne.s32.totalorder %s192, %s194
      %p201 = scmp.eq.s32.totalorder %s29, 1
      %p202 = por %p200, %p201
      %p203 = scmp.ne.s32.totalorder %s194, %s195
      %p204 = scmp.eq.s32.totalorder %s29, 0
      %p205 = por %p203, %p204
      %p206 = scmp.ne.s32.totalorder %s194, %s195
      %p207 = scmp.eq.s32.totalorder %s30, 1
      %p208 = por %p206, %p207
      %p210 = scmp.ne.s32.totalorder %s195, %s209
      %p211 = scmp.eq.s32.totalorder %s30, 0
      %p212 = por %p210, %p211
      %s214 = sadd.s32 %s213, 1
      %p217 = scmp.eq.s32.totalorder %s24, 1
      %p218 = scmp.ne.s32.totalorder %s213, %s215
      %p219 = scmp.eq.s32.totalorder %s24, 0
      %p220 = por %p218, %p219
      %p221 = scmp.ne.s32.totalorder %s213, %s215
      %p222 = scmp.eq.s32.totalorder %s29, 1
      %p223 = por %p221, %p222
      %p224 = scmp.ne.s32.totalorder %s215, %s216
      %p225 = scmp.eq.s32.totalorder %s29, 0
      %p226 = por %p224, %p225
      %p227 = scmp.ne.s32.totalorder %s215, %s216
      %p228 = scmp.eq.s32.totalorder %s30, 1
      %p229 = por %p227, %p228
      %p231 = scmp.ne.s32.totalorder %s216, %s230
      %p232 = scmp.eq.s32.totalorder %s30, 0
      %p233 = por %p231, %p232
      %s235 = sadd.s32 %s234, 1
      %p238 = scmp.eq.s32.totalorder %s24, 1
      %p239 = scmp.ne.s32.totalorder %s234, %s236
      %p240 = scmp.eq.s32.totalorder %s24, 0
      %p241 = por %p239, %p240
      %p242 = scmp.ne.s32.totalorder %s234, %s236
      %p243 = scmp.eq.s32.totalorder %s29, 1
      %p244 = por %p242, %p243
      %p245 = scmp.ne.s32.totalorder %s236, %s237
      %p246 = scmp.eq.s32.totalorder %s29, 0
      %p247 = por %p245, %p246
      %p248 = scmp.ne.s32.totalorder %s236, %s237
      %p249 = scmp.eq.s32.totalorder %s30, 1
      %p250 = por %p248, %p249
      %p252 = scmp.ne.s32.totalorder %s237, %s251
      %p253 = scmp.eq.s32.totalorder %s30, 0
      %p254 = por %p252, %p253
      %s256 = sadd.s32 %s255, 1
      %p259 = scmp.eq.s32.totalorder %s24, 1
      %p260 = scmp.ne.s32.totalorder %s255, %s257
      %p261 = scmp.eq.s32.totalorder %s24, 0
      %p262 = por %p260, %p261
      %p263 = scmp.ne.s32.totalorder %s255, %s257
      %p264 = scmp.eq.s32.totalorder %s29, 1
      %p265 = por %p263, %p264
      %p266 = scmp.ne.s32.totalorder %s257, %s258
      %p267 = scmp.eq.s32.totalorder %s29, 0
      %p268 = por %p266, %p267
      %p269 = scmp.ne.s32.totalorder %s257, %s258
      %p270 = scmp.eq.s32.totalorder %s30, 1
      %p271 = por %p269, %p270
      %p273 = scmp.ne.s32.totalorder %s258, %s272
      %p274 = scmp.eq.s32.totalorder %s30, 0
      %p275 = por %p273, %p274
      %s277 = sadd.s32 %s276, 1
      %p280 = scmp.eq.s32.totalorder %s24, 1
      %p281 = scmp.ne.s32.totalorder %s276, %s278
      %p282 = scmp.eq.s32.totalorder %s24, 0
      %p283 = por %p281, %p282
      %p284 = scmp.ne.s32.totalorder %s276, %s278
      %p285 = scmp.eq.s32.totalorder %s29, 1
      %p286 = por %p284, %p285
      %p287 = scmp.ne.s32.totalorder %s278, %s279
      %p288 = scmp.eq.s32.totalorder %s29, 0
      %p289 = por %p287, %p288
      %p290 = scmp.ne.s32.totalorder %s278, %s279
      %p291 = scmp.eq.s32.totalorder %s30, 1
      %p292 = por %p290, %p291
      %p294 = scmp.ne.s32.totalorder %s279, %s293
      %p295 = scmp.eq.s32.totalorder %s30, 0
      %p296 = por %p294, %p295
      %s297 = ssub.s32 %s32, %s39
      %p298 = scmp.eq.s32.totalorder %s297, 0
      %s300 = sadd.s32 %s299, 1
      %s301 = scalar_select %p298, %s299, %s300
      %p304 = pneg %p298
      %p305 = scmp.eq.s32.totalorder %s24, 1
      %p306 = por %p304, %p305
      %p307 = scmp.ne.s32.totalorder %s299, %s302
      %p308 = scmp.eq.s32.totalorder %s24, 0
      %p309 = por %p307, %p308
      %p310 = scmp.ne.s32.totalorder %s299, %s302
      %p311 = scmp.eq.s32.totalorder %s29, 1
      %p312 = por %p310, %p311
      %p313 = scmp.ne.s32.totalorder %s302, %s303
      %p314 = scmp.eq.s32.totalorder %s29, 0
      %p315 = por %p313, %p314
      %p316 = scmp.ne.s32.totalorder %s302, %s303
      %p317 = scmp.eq.s32.totalorder %s30, 1
      %p318 = por %p316, %p317
      %p320 = scmp.ne.s32.totalorder %s303, %s319
      %p321 = scmp.eq.s32.totalorder %s30, 0
      %p322 = por %p320, %p321
      %s323 = ssub.s32 %s32, %s39
      %p324 = scmp.eq.s32.totalorder %s323, 0
      %s326 = sadd.s32 %s325, 1
      %s327 = scalar_select %p324, %s325, %s326
      %p330 = pneg %p324
      %p331 = scmp.eq.s32.totalorder %s24, 1
      %p332 = por %p330, %p331
      %p333 = scmp.ne.s32.totalorder %s325, %s328
      %p334 = scmp.eq.s32.totalorder %s24, 0
      %p335 = por %p333, %p334
      %p336 = scmp.ne.s32.totalorder %s325, %s328
      %p337 = scmp.eq.s32.totalorder %s29, 1
      %p338 = por %p336, %p337
      %p339 = scmp.ne.s32.totalorder %s328, %s329
      %p340 = scmp.eq.s32.totalorder %s29, 0
      %p341 = por %p339, %p340
      %p342 = scmp.ne.s32.totalorder %s328, %s329
      %p343 = scmp.eq.s32.totalorder %s30, 1
      %p344 = por %p342, %p343
      %p346 = scmp.ne.s32.totalorder %s329, %s345
      %p347 = scmp.eq.s32.totalorder %s30, 0
      %p348 = por %p346, %p347
      %s349 = ssub.s32 %s31, %s43
      %p350 = scmp.eq.s32.totalorder %s349, 0
      %s352 = sadd.s32 %s351, 1
      %s353 = scalar_select %p350, %s351, %s352
      %p356 = pneg %p350
      %p357 = scmp.eq.s32.totalorder %s24, 1
      %p358 = por %p356, %p357
      %p359 = scmp.ne.s32.totalorder %s351, %s354
      %p360 = scmp.eq.s32.totalorder %s24, 0
      %p361 = por %p359, %p360
      %p362 = scmp.ne.s32.totalorder %s351, %s354
      %p363 = scmp.eq.s32.totalorder %s29, 1
      %p364 = por %p362, %p363
      %p365 = scmp.ne.s32.totalorder %s354, %s355
      %p366 = scmp.eq.s32.totalorder %s29, 0
      %p367 = por %p365, %p366
      %p368 = scmp.ne.s32.totalorder %s354, %s355
      %p369 = scmp.eq.s32.totalorder %s30, 1
      %p370 = por %p368, %p369
      %p372 = scmp.ne.s32.totalorder %s355, %s371
      %p373 = scmp.eq.s32.totalorder %s30, 0
      %p374 = por %p372, %p373
      %s375 = ssub.s32 %s31, %s43
      %s376 = ssub.s32 %s32, %s39
      %s377 = sor.u32 %s375, %s376
      %p378 = scmp.eq.s32.totalorder %s377, 0
      %s380 = sadd.s32 %s379, 1
      %s381 = scalar_select %p378, %s379, %s380
      %p384 = pneg %p378
      %p385 = scmp.eq.s32.totalorder %s24, 1
      %p386 = por %p384, %p385
      %p387 = scmp.ne.s32.totalorder %s379, %s382
      %p388 = scmp.eq.s32.totalorder %s24, 0
      %p389 = por %p387, %p388
      %p390 = scmp.ne.s32.totalorder %s379, %s382
      %p391 = scmp.eq.s32.totalorder %s29, 1
      %p392 = por %p390, %p391
      %p393 = scmp.ne.s32.totalorder %s382, %s383
      %p394 = scmp.eq.s32.totalorder %s29, 0
      %p395 = por %p393, %p394
      %p396 = scmp.ne.s32.totalorder %s382, %s383
      %p397 = scmp.eq.s32.totalorder %s30, 1
      %p398 = por %p396, %p397
      %p400 = scmp.ne.s32.totalorder %s383, %s399
      %p401 = scmp.eq.s32.totalorder %s30, 0
      %p402 = por %p400, %p401
      %p403 = scmp.le.s32.totalorder 1, %s24
      %p404 = scmp.lt.s32.totalorder %s24, 3
      %p405 = pnand %p403, %p404
      %p406 = pneg %p405
      // Predicated region
      $region9: #{tpu_custom_call.1} parent=5 // pred_check
        _
      $region10: #{tpu_custom_call.1} parent=5 // pred_check_branch
        %408 = sbr.rel (%p405) target = $region12
      $region11: #{tpu_custom_call.1} parent=5 // pred_region
        %s409 = ssub.s32 %s24, 1
        // Predicated region
        $region13: #{tpu_custom_call.1} parent=11 // pred_check
          %p410 = pneg %p163
        $region14: #{tpu_custom_call.1} parent=11 // pred_check_branch
          %412 = sbr.rel (%p410) target = $region16
        $region15: #{tpu_custom_call.1} parent=11 // pred_region
          _
        $region16: #{tpu_custom_call.1} parent=11 // pred_fallthru
          _
        // Predicated region
        $region17: #{tpu_custom_call.1} parent=11 // pred_check
          %p413 = pneg %p184
        $region18: #{tpu_custom_call.1} parent=11 // pred_check_branch
          %415 = sbr.rel (%p413) target = $region20
        $region19: #{tpu_custom_call.1} parent=11 // pred_region
          _
        $region20: #{tpu_custom_call.1} parent=11 // pred_fallthru
          _
        // Predicated region
        $region21: #{tpu_custom_call.1} parent=11 // pred_check
          %p416 = pneg %p205
        $region22: #{tpu_custom_call.1} parent=11 // pred_check_branch
          %418 = sbr.rel (%p416) target = $region24
        $region23: #{tpu_custom_call.1} parent=11 // pred_region
          _
        $region24: #{tpu_custom_call.1} parent=11 // pred_fallthru
          _
        // Predicated region
        $region25: #{tpu_custom_call.1} parent=11 // pred_check
          %p419 = pneg %p226
        $region26: #{tpu_custom_call.1} parent=11 // pred_check_branch
          %421 = sbr.rel (%p419) target = $region28
        $region27: #{tpu_custom_call.1} parent=11 // pred_region
          _
        $region28: #{tpu_custom_call.1} parent=11 // pred_fallthru
          _
        // Predicated region
        $region29: #{tpu_custom_call.1} parent=11 // pred_check
          %p422 = pneg %p247
        $region30: #{tpu_custom_call.1} parent=11 // pred_check_branch
          %424 = sbr.rel (%p422) target = $region32
        $region31: #{tpu_custom_call.1} parent=11 // pred_region
          _
        $region32: #{tpu_custom_call.1} parent=11 // pred_fallthru
          _
        // Predicated region
        $region33: #{tpu_custom_call.1} parent=11 // pred_check
          %p425 = pneg %p268
        $region34: #{tpu_custom_call.1} parent=11 // pred_check_branch
          %427 = sbr.rel (%p425) target = $region36
        $region35: #{tpu_custom_call.1} parent=11 // pred_region
          _
        $region36: #{tpu_custom_call.1} parent=11 // pred_fallthru
          _
        // Predicated region
        $region37: #{tpu_custom_call.1} parent=11 // pred_check
          %p428 = pneg %p289
        $region38: #{tpu_custom_call.1} parent=11 // pred_check_branch
          %430 = sbr.rel (%p428) target = $region40
        $region39: #{tpu_custom_call.1} parent=11 // pred_region
          _
        $region40: #{tpu_custom_call.1} parent=11 // pred_fallthru
          _
        // Predicated region
        $region41: #{tpu_custom_call.1} parent=11 // pred_check
          %p431 = pneg %p315
        $region42: #{tpu_custom_call.1} parent=11 // pred_check_branch
          %433 = sbr.rel (%p431) target = $region44
        $region43: #{tpu_custom_call.1} parent=11 // pred_region
          %p434 = scmp.lt.s32.totalorder %s34, 0
          %s435 = scalar_select %p434, %s34, 0
          %s436 = smul.addr %s435, 4
          %s437 = scalar_lea.vmem %s11, %s436
        $region44: #{tpu_custom_call.1} parent=11 // pred_fallthru
          _
        // Predicated region
        $region45: #{tpu_custom_call.1} parent=11 // pred_check
          %p438 = pneg %p341
        $region46: #{tpu_custom_call.1} parent=11 // pred_check_branch
          %440 = sbr.rel (%p438) target = $region48
        $region47: #{tpu_custom_call.1} parent=11 // pred_region
          %p441 = scmp.lt.s32.totalorder %s34, 0
          %s442 = scalar_select %p441, %s34, 0
          %s443 = scalar_lea.vmem %s12, %s442
        $region48: #{tpu_custom_call.1} parent=11 // pred_fallthru
          _
      $region12: #{tpu_custom_call.1} parent=5 // pred_fallthru
        _
      %p444 = scmp.lt.s32.totalorder %s24, 2
      // Predicated region
      $region49: #{tpu_custom_call.1} parent=5 // pred_check
        %p445 = pneg %p444
      $region50: #{tpu_custom_call.1} parent=5 // pred_check_branch
        %447 = sbr.rel (%p445) target = $region52
      $region51: #{tpu_custom_call.1} parent=5 // pred_region
        // Predicated region
        $region53: #{tpu_custom_call.1} parent=51 // pred_check
          %p448 = pneg %p56
        $region54: #{tpu_custom_call.1} parent=51 // pred_check_branch
          %450 = sbr.rel (%p448) target = $region56
        $region55: #{tpu_custom_call.1} parent=51 // pred_region
          %s451 = smul.u32 16, %s31
          %p452 = scmp.lt.s32.totalorder %s451, 31
          %s453 = scalar_select %p452, %s451, 31
          %s454 = smul.addr %s453, 4
          %s455 = scalar_lea.vmem %s0, %s454
          %s456 = smul.u32 16, %s31
        $region56: #{tpu_custom_call.1} parent=51 // pred_fallthru
          _
        // Predicated region
        $region57: #{tpu_custom_call.1} parent=51 // pred_check
          %p457 = pneg %p82
        $region58: #{tpu_custom_call.1} parent=51 // pred_check_branch
          %459 = sbr.rel (%p457) target = $region60
        $region59: #{tpu_custom_call.1} parent=51 // pred_region
          %p460 = scmp.lt.s32.totalorder %s31, 1
          %s461 = scalar_select %p460, %s31, 1
          %s462 = smul.addr %s461, 4
          %s463 = scalar_lea.vmem %s1, %s462
        $region60: #{tpu_custom_call.1} parent=51 // pred_fallthru
          _
        // Predicated region
        $region61: #{tpu_custom_call.1} parent=51 // pred_check
          %p464 = pneg %p108
        $region62: #{tpu_custom_call.1} parent=51 // pred_check_branch
          %466 = sbr.rel (%p464) target = $region64
        $region63: #{tpu_custom_call.1} parent=51 // pred_region
          %p467 = scmp.lt.s32.totalorder %s31, 1
          %s468 = scalar_select %p467, %s31, 1
          %s469 = smul.addr %s468, 8
          %s470 = scalar_lea.vmem %s2, %s469
        $region64: #{tpu_custom_call.1} parent=51 // pred_fallthru
          _
        // Predicated region
        $region65: #{tpu_custom_call.1} parent=51 // pred_check
          %p471 = pneg %p136
        $region66: #{tpu_custom_call.1} parent=51 // pred_check_branch
          %473 = sbr.rel (%p471) target = $region68
        $region67: #{tpu_custom_call.1} parent=51 // pred_region
          %p474 = scmp.lt.s32.totalorder %s31, 1
          %s475 = scalar_select %p474, %s31, 1
          %p476 = scmp.lt.s32.totalorder %s32, 0
          %s477 = scalar_select %p476, %s32, 0
          %s478 = sadd.s32 %s477, %s475
          %s479 = smul.addr %s478, 8
          %s480 = scalar_lea.vmem %s3, %s479
        $region68: #{tpu_custom_call.1} parent=51 // pred_fallthru
          _
      $region52: #{tpu_custom_call.1} parent=5 // pred_fallthru
        _
      %p481 = scmp.le.s32.totalorder 1, %s24
      %p482 = scmp.lt.s32.totalorder %s24, 3
      %p483 = pnand %p481, %p482
      %p484 = pneg %p483
      // Predicated region
      $region69: #{tpu_custom_call.1} parent=5 // pred_check
        _
      $region70: #{tpu_custom_call.1} parent=5 // pred_check_branch
        %486 = sbr.rel (%p483) target = $region72
      $region71: #{tpu_custom_call.1} parent=5 // pred_region
        %s487 = ssub.s32 %s24, 1
        %s488 = smul.u32 16, %s33
        %p489 = scmp.lt.s32.totalorder %s488, 31
        %s490 = scalar_select %p489, %s488, 31
        %s491 = smul.addr %s490, 4
        %s492 = scalar_lea.vmem %s0, %s491
        %p493 = pneg %p62
        %p494 = pneg %p59
        %p495 = scmp.lt.s32.totalorder %s33, 1
        %s496 = scalar_select %p495, %s33, 1
        %s497 = smul.addr %s496, 4
        %s498 = scalar_lea.vmem %s1, %s497
        %p499 = pneg %p88
        %p500 = pneg %p85
        %p501 = scmp.lt.s32.totalorder %s33, 1
        %s502 = scalar_select %p501, %s33, 1
        %s503 = smul.addr %s502, 8
        %s504 = scalar_lea.vmem %s2, %s503
        %p505 = pneg %p114
        %p506 = pneg %p111
        %p507 = scmp.lt.s32.totalorder %s33, 1
        %s508 = scalar_select %p507, %s33, 1
        %p509 = scmp.lt.s32.totalorder %s34, 0
        %s510 = scalar_select %p509, %s34, 0
        %s511 = sadd.s32 %s510, %s508
        %s512 = smul.addr %s511, 8
        %s513 = scalar_lea.vmem %s3, %s512
        %p514 = pneg %p142
        %p515 = pneg %p139
        %p516 = pneg %p163
        %p517 = pneg %p160
        %p518 = pneg %p184
        %p519 = pneg %p181
        %p520 = pneg %p205
        %p521 = pneg %p202
        %p522 = pneg %p226
        %p523 = pneg %p223
        %p524 = pneg %p247
        %p525 = pneg %p244
        %p526 = pneg %p268
        %p527 = pneg %p265
        %p528 = pneg %p289
        %p529 = pneg %p286
        %p530 = scmp.lt.s32.totalorder %s34, 0
        %s531 = scalar_select %p530, %s34, 0
        %s532 = smul.addr %s531, 4
        %s533 = scalar_lea.vmem %s11, %s532
        %p534 = pneg %p315
        %p535 = pneg %p312
        %p536 = scmp.lt.s32.totalorder %s34, 0
        %s537 = scalar_select %p536, %s34, 0
        %s538 = scalar_lea.vmem %s12, %s537
        %p539 = pneg %p341
        %p540 = pneg %p338
        %p541 = pneg %p367
        %p542 = pneg %p364
        %s543 = sand.u32 %s354, 1
        %s544 = scalar_lea.sflag [#allocation4], %s543
        %s545 = sand.u32 %s354, 1
        %s546 = smul.addr %s545, 8
        %s547 = scalar_lea.vmem [#allocation3], %s546
        %p548 = pneg %p395
        %p549 = pneg %p392
        %p550 = scmp.lt.s32.totalorder %s33, 1
        %s551 = scalar_select %p550, %s33, 1
        %p552 = scmp.lt.s32.totalorder %s34, 0
        %s553 = scalar_select %p552, %s34, 0
        %s554 = sadd.s32 %s553, %s551
        %s555 = smul.addr %s554, 8
        %s556 = scalar_lea.vmem %s14, %s555
        %s557 = smul.u32 16, %s33
        %p558 = scmp.lt.s32.totalorder %s557, 31
        %s559 = scalar_select %p558, %s557, 31
        %s560 = smul.addr %s559, 4
        %s561 = scalar_lea.vmem %s0, %s560
        %s562 = smul.u32 16, %s33
        %p563 = scmp.lt.s32.totalorder %s33, 1
        %s564 = scalar_select %p563, %s33, 1
        %s565 = smul.addr %s564, 4
        %s566 = scalar_lea.vmem %s1, %s565
        %p567 = scmp.lt.s32.totalorder %s33, 1
        %s568 = scalar_select %p567, %s33, 1
        %s569 = smul.addr %s568, 8
        %s570 = scalar_lea.vmem %s2, %s569
        %p571 = scmp.lt.s32.totalorder %s33, 1
        %s572 = scalar_select %p571, %s33, 1
        %p573 = scmp.lt.s32.totalorder %s34, 0
        %s574 = scalar_select %p573, %s34, 0
        %s575 = sadd.s32 %s574, %s572
        %s576 = smul.addr %s575, 8
        %s577 = scalar_lea.vmem %s3, %s576
        %p578 = scmp.lt.s32.totalorder %s34, 0
        %s579 = scalar_select %p578, %s34, 0
        %s580 = smul.addr %s579, 4
        %s581 = scalar_lea.vmem %s11, %s580
        %p582 = scmp.lt.s32.totalorder %s34, 0
        %s583 = scalar_select %p582, %s34, 0
        %s584 = scalar_lea.vmem %s12, %s583
        %p585 = scmp.lt.s32.totalorder %s33, 1
        %s586 = scalar_select %p585, %s33, 1
        %p587 = scmp.lt.s32.totalorder %s34, 0
        %s588 = scalar_select %p587, %s34, 0
        %s589 = sadd.s32 %s588, %s586
        %s590 = smul.addr %s589, 8
        %s591 = scalar_lea.vmem %s14, %s590
        %p593 = scmp.eq.s32.totalorder %s34, 0
        // Predicated region
        $region73: #{tpu_custom_call.1} parent=71 // pred_check
          %p594 = pneg %p593
        $region74: #{tpu_custom_call.1} parent=71 // pred_check_branch
          %596 = sbr.rel (%p594) target = $region76
        $region75: #{tpu_custom_call.1} parent=71 // pred_region
          %v597 = vld [vmem:[%s561] sm:$0xf]
          %v598 = vld [vmem:[%s561 + $0x4] sm:$0xf]
          %v599 = vld [vmem:[%s561 + $0x8] sm:$0xf]
          %v600 = vld [vmem:[%s561 + $0xc] sm:$0xf]
          %v601 = vld [vmem:[%s561 + $0x10] sm:$0xf]
          %v602 = vld [vmem:[%s561 + $0x14] sm:$0xf]
          %v603 = vld [vmem:[%s561 + $0x18] sm:$0xf]
          %v604 = vld [vmem:[%s561 + $0x1c] sm:$0xf]
          %v605 = vld [vmem:[%s561 + $0x20] sm:$0xf]
          %v606 = vld [vmem:[%s561 + $0x24] sm:$0xf]
          %v607 = vld [vmem:[%s561 + $0x28] sm:$0xf]
          %v608 = vld [vmem:[%s561 + $0x2c] sm:$0xf]
          %v609 = vld [vmem:[%s561 + $0x30] sm:$0xf]
          %v610 = vld [vmem:[%s561 + $0x34] sm:$0xf]
          %v611 = vld [vmem:[%s561 + $0x38] sm:$0xf]
          %v612 = vld [vmem:[%s561 + $0x3c] sm:$0xf]
          %v613 = vld [vmem:[%s566] sm:$0xf]
          %v614 = vld [vmem:[%s570] sm:$0xff]
          %v615 = vld [vmem:[%s4] sm:$0xf]
          %v616 = vld [vmem:[%s4 + $0x4] sm:$0xf]
          %v617 = vld [vmem:[%s4 + $0x8] sm:$0xf]
          %v618 = vld [vmem:[%s4 + $0xc] sm:$0xf]
          %v635 = vunpack.c.l.b16 %v597
          %v636 = vunpack.c.l.b16 %v598
          %v637 = vunpack.c.l.b16 %v599
          %v638 = vunpack.c.l.b16 %v600
          %v639 = vunpack.c.l.b16 %v601
          %v640 = vunpack.c.l.b16 %v602
          %v641 = vunpack.c.l.b16 %v603
          %v642 = vunpack.c.l.b16 %v604
          %v643 = vunpack.c.l.b16 %v605
          %v644 = vunpack.c.l.b16 %v606
          %v645 = vunpack.c.l.b16 %v607
          %v646 = vunpack.c.l.b16 %v608
          %v647 = vunpack.c.l.b16 %v609
          %v648 = vunpack.c.l.b16 %v610
          %v649 = vunpack.c.l.b16 %v611
          %v650 = vunpack.c.l.b16 %v612
          %v651 = vpack.c.b16 %v636, %v635
          %v652 = vpack.c.b16 %v638, %v637
          %v653 = vpack.c.b16 %v640, %v639
          %v654 = vpack.c.b16 %v642, %v641
          %v655 = vpack.c.b16 %v644, %v643
          %v656 = vpack.c.b16 %v646, %v645
          %v657 = vpack.c.b16 %v648, %v647
          %v658 = vpack.c.b16 %v650, %v649
          %v663 = vunpack.c.l.b16 %v615
          %v664 = vunpack.c.l.b16 %v616
          %v665 = vunpack.c.l.b16 %v617
          %v666 = vunpack.c.l.b16 %v618
          %v667 = vpack.c.b16 %v664, %v663
          %v668 = vpack.c.b16 %v666, %v665
          %vm671 = vcmask 261120
          %v673 = vsel %vm671, %v651, 0
          %v676 = vsel %vm671, %v652, 0
          %v679 = vsel %vm671, %v653, 0
          %v682 = vsel %vm671, %v654, 0
          %v685 = vsel %vm671, %v655, 0
          %v688 = vsel %vm671, %v656, 0
          %v691 = vsel %vm671, %v657, 0
          %v694 = vsel %vm671, %v658, 0
          %696 = vmatprep.subr.bf16.mxu0 0
          %697 = vmatpush1.bf16.msra.mxu0 0
          %698 = vmatprep.subr.bf16.mxu0 0
          %699 = vmatpush1.bf16.msra.mxu0 0
          %700 = vmatprep.subr.bf16.mxu0 0
          %701 = vmatpush1.bf16.msra.mxu0 0
          %702 = vmatprep.subr.bf16.mxu0 0
          %703 = vmatpush1.bf16.msra.mxu0 0
          %704 = vmatprep.subr.bf16.mxu0 0
          %705 = vmatpush1.bf16.msra.mxu0 0
          %706 = vmatprep.subr.bf16.mxu0 0
          %707 = vmatpush1.bf16.msra.mxu0 0
          %708 = vmatprep.subr.bf16.mxu0 0
          %709 = vmatpush1.bf16.msra.mxu0 %v668
          %710 = vmatprep.subr.bf16.mxu0 0
          %711 = vmatpush1.bf16.msra.mxu0 %v667
          %712 = vmatprep.subr.bf16.mxu0 0
          %713 = vmatpush2.bf16.msra.mxu0 0
          %714 = vmatprep.subr.bf16.mxu0 0
          %715 = vmatpush2.bf16.msra.mxu0 0
          %716 = vmatprep.subr.bf16.mxu0 0
          %717 = vmatpush2.bf16.msra.mxu0 0
          %718 = vmatprep.subr.bf16.mxu0 0
          %719 = vmatpush2.bf16.msra.mxu0 0
          %720 = vmatprep.subr.bf16.mxu0 0
          %721 = vmatpush2.bf16.msra.mxu0 0
          %722 = vmatprep.subr.bf16.mxu0 0
          %723 = vmatpush2.bf16.msra.mxu0 0
          %724 = vmatprep.subr.bf16.mxu0 0
          %725 = vmatpush2.bf16.msra.mxu0 0
          %726 = vmatprep.subr.bf16.mxu0 0
          %727 = vmatpush2.bf16.msra.mxu0 0
          %728 = vmatprep.mubr.bf16.mxu0 0
          %729 = vmatmul.mubr.bf16.gmra.mxu0 %v673
          %v730 = vpop.f32.mrf.mxu0
          %v731 = vadd.f32 0.0, %v730
          %v732 = vpop.f32.mrf.mxu0
          %v733 = vpop.f32.mrf.mxu0
          %v734 = vadd.f32 0.0, %v733
          %v735 = vpop.f32.mrf.mxu0
          %736 = vmatprep.mubr.bf16.mxu0 0
          %737 = vmatmul.mubr.bf16.gmra.mxu0 %v676
          %v738 = vpop.f32.mrf.mxu0
          %v739 = vadd.f32 0.0, %v738
          %v740 = vpop.f32.mrf.mxu0
          %v741 = vpop.f32.mrf.mxu0
          %v742 = vadd.f32 0.0, %v741
          %v743 = vpop.f32.mrf.mxu0
          %744 = vmatprep.mubr.bf16.mxu0 0
          %745 = vmatmul.mubr.bf16.gmra.mxu0 %v679
          %v746 = vpop.f32.mrf.mxu0
          %v747 = vadd.f32 0.0, %v746
          %v748 = vpop.f32.mrf.mxu0
          %v749 = vpop.f32.mrf.mxu0
          %v750 = vadd.f32 0.0, %v749
          %v751 = vpop.f32.mrf.mxu0
          %752 = vmatprep.mubr.bf16.mxu0 0
          %753 = vmatmul.mubr.bf16.gmra.mxu0 %v682
          %v754 = vpop.f32.mrf.mxu0
          %v755 = vadd.f32 0.0, %v754
          %v756 = vpop.f32.mrf.mxu0
          %v757 = vpop.f32.mrf.mxu0
          %v758 = vadd.f32 0.0, %v757
          %v759 = vpop.f32.mrf.mxu0
          %760 = vmatprep.mubr.bf16.mxu0 0
          %761 = vmatmul.mubr.bf16.gmra.mxu0 %v685
          %v762 = vpop.f32.mrf.mxu0
          %v763 = vadd.f32 0.0, %v762
          %v764 = vpop.f32.mrf.mxu0
          %v765 = vpop.f32.mrf.mxu0
          %v766 = vadd.f32 0.0, %v765
          %v767 = vpop.f32.mrf.mxu0
          %768 = vmatprep.mubr.bf16.mxu0 0
          %769 = vmatmul.mubr.bf16.gmra.mxu0 %v688
          %v770 = vpop.f32.mrf.mxu0
          %v771 = vadd.f32 0.0, %v770
          %v772 = vpop.f32.mrf.mxu0
          %v773 = vpop.f32.mrf.mxu0
          %v774 = vadd.f32 0.0, %v773
          %v775 = vpop.f32.mrf.mxu0
          %776 = vmatprep.mubr.bf16.mxu0 0
          %777 = vmatmul.mubr.bf16.gmra.mxu0 %v691
          %v778 = vpop.f32.mrf.mxu0
          %v779 = vadd.f32 0.0, %v778
          %v780 = vpop.f32.mrf.mxu0
          %v781 = vpop.f32.mrf.mxu0
          %v782 = vadd.f32 0.0, %v781
          %v783 = vpop.f32.mrf.mxu0
          %784 = vmatprep.mubr.bf16.mxu0 0
          %785 = vmatmul.mubr.bf16.gmra.mxu0 %v694
          %v786 = vpop.f32.mrf.mxu0
          %v787 = vadd.f32 0.0, %v786
          %v788 = vpop.f32.mrf.mxu0
          %v789 = vpop.f32.mrf.mxu0
          %v790 = vadd.f32 0.0, %v789
          %v791 = vpop.f32.mrf.mxu0
          %792 = vdwg.mxu0
          %v793 = vld [vmem:[%s5] sm:$0xf]
          %v794 = vld [vmem:[%s5 + $0x4] sm:$0xf]
          %v795 = vld [vmem:[%s5 + $0x8] sm:$0xf]
          %v796 = vld [vmem:[%s5 + $0xc] sm:$0xf]
          %v801 = vunpack.c.l.b16 %v793
          %v802 = vunpack.c.l.b16 %v794
          %v803 = vunpack.c.l.b16 %v795
          %v804 = vunpack.c.l.b16 %v796
          %v805 = vpack.c.b16 %v802, %v801
          %v806 = vpack.c.b16 %v804, %v803
          %v810 = vsel %vm671, %v613, 0
          %812 = vmatprep.subr.bf16.mxu0 0
          %813 = vmatpush1.bf16.msra.mxu0 0
          %814 = vmatprep.subr.bf16.mxu0 0
          %815 = vmatpush1.bf16.msra.mxu0 0
          %816 = vmatprep.subr.bf16.mxu0 0
          %817 = vmatpush1.bf16.msra.mxu0 0
          %818 = vmatprep.subr.bf16.mxu0 0
          %819 = vmatpush1.bf16.msra.mxu0 0
          %820 = vmatprep.subr.bf16.mxu0 0
          %821 = vmatpush1.bf16.msra.mxu0 0
          %822 = vmatprep.subr.bf16.mxu0 0
          %823 = vmatpush1.bf16.msra.mxu0 0
          %824 = vmatprep.subr.bf16.mxu0 0
          %825 = vmatpush1.bf16.msra.mxu0 %v806
          %826 = vmatprep.subr.bf16.mxu0 0
          %827 = vmatpush1.bf16.msra.mxu0 %v805
          %828 = vmatprep.subr.bf16.mxu0 0
          %829 = vmatpush2.bf16.msra.mxu0 0
          %830 = vmatprep.subr.bf16.mxu0 0
          %831 = vmatpush2.bf16.msra.mxu0 0
          %832 = vmatprep.subr.bf16.mxu0 0
          %833 = vmatpush2.bf16.msra.mxu0 0
          %834 = vmatprep.subr.bf16.mxu0 0
          %835 = vmatpush2.bf16.msra.mxu0 0
          %836 = vmatprep.subr.bf16.mxu0 0
          %837 = vmatpush2.bf16.msra.mxu0 0
          %838 = vmatprep.subr.bf16.mxu0 0
          %839 = vmatpush2.bf16.msra.mxu0 0
          %840 = vmatprep.subr.bf16.mxu0 0
          %841 = vmatpush2.bf16.msra.mxu0 0
          %842 = vmatprep.subr.bf16.mxu0 0
          %843 = vmatpush2.bf16.msra.mxu0 0
          %844 = vmatprep.mubr.bf16.mxu0 0
          %845 = vmatmul.mubr.bf16.gmra.mxu0 %v810
          %v846 = vpop.f32.mrf.mxu0
          %v847 = vadd.f32 0.0, %v846
          %v848 = vpop.f32.mrf.mxu0
          %v849 = vpop.f32.mrf.mxu0
          %v850 = vpop.f32.mrf.mxu0
          %851 = vdwg.mxu0
          %v853 = vcombine.high %v847, %v847
          %v855 = vunpack.c.l.s4 1966171168
          %v856 = vunpack.c.0.s8 %v855
          %v857 = vlaneseq
          %v858 = vshrl.u32 %v857, 7
          %v859 = vsub.s32 %v856, %v858
          %v860 = vrot.slane %v847, %v859
          %v862 = vunpack.c.l.s4 1966171168
          %v863 = vunpack.c.0.s8 %v862
          %v864 = vlaneseq
          %v865 = vshrl.u32 %v864, 7
          %v866 = vsub.s32 %v863, %v865
          %v867 = vrot.slane %v853, %v866
          %v868 = vcombine.high %v860, %v860
          %v869 = vcombine.high %v867, %v867
          %v871 = vunpack.c.l.s4 1966171168
          %v872 = vunpack.c.0.s8 %v871
          %v873 = vlaneseq
          %v874 = vshrl.u32 %v873, 7
          %v875 = vsub.s32 %v872, %v874
          %v876 = vrot.slane %v860, %v875
          %v878 = vunpack.c.l.s4 1966171168
          %v879 = vunpack.c.0.s8 %v878
          %v880 = vlaneseq
          %v881 = vshrl.u32 %v880, 7
          %v882 = vsub.s32 %v879, %v881
          %v883 = vrot.slane %v867, %v882
          %v885 = vunpack.c.l.s4 1966171168
          %v886 = vunpack.c.0.s8 %v885
          %v887 = vlaneseq
          %v888 = vshrl.u32 %v887, 7
          %v889 = vsub.s32 %v886, %v888
          %v890 = vrot.slane %v868, %v889
          %v892 = vunpack.c.l.s4 1966171168
          %v893 = vunpack.c.0.s8 %v892
          %v894 = vlaneseq
          %v895 = vshrl.u32 %v894, 7
          %v896 = vsub.s32 %v893, %v895
          %v897 = vrot.slane %v869, %v896
          %v898 = vcombine.high %v876, %v876
          %v899 = vcombine.high %v883, %v883
          %v900 = vcombine.high %v890, %v890
          %v901 = vcombine.high %v897, %v897
          %v902 = vlaneseq
          %v903 = vshrl.u32 %v902, 7
          %v904 = vsub.s32 0, %v903
          %v905 = vrot.slane %v876, %v904
          %v906 = vlaneseq
          %v907 = vshrl.u32 %v906, 7
          %v908 = vsub.s32 0, %v907
          %v909 = vrot.slane %v890, %v908
          %v910 = vlaneseq
          %v911 = vshrl.u32 %v910, 7
          %v912 = vsub.s32 0, %v911
          %v913 = vrot.slane %v898, %v912
          %v914 = vlaneseq
          %v915 = vshrl.u32 %v914, 7
          %v916 = vsub.s32 0, %v915
          %v917 = vrot.slane %v900, %v916
          %v918 = vlaneseq
          %v919 = vshrl.u32 %v918, 7
          %v920 = vsub.s32 0, %v919
          %v921 = vrot.slane %v883, %v920
          %v922 = vlaneseq
          %v923 = vshrl.u32 %v922, 7
          %v924 = vsub.s32 0, %v923
          %v925 = vrot.slane %v897, %v924
          %v926 = vlaneseq
          %v927 = vshrl.u32 %v926, 7
          %v928 = vsub.s32 0, %v927
          %v929 = vrot.slane %v899, %v928
          %v930 = vlaneseq
          %v931 = vshrl.u32 %v930, 7
          %v932 = vsub.s32 0, %v931
          %v933 = vrot.slane %v901, %v932
          %v942 = vadd.f32 %v731, %v905
          %v943 = vadd.f32 %v734, %v905
          %v944 = vadd.f32 %v739, %v909
          %v945 = vadd.f32 %v742, %v909
          %v946 = vadd.f32 %v747, %v913
          %v947 = vadd.f32 %v750, %v913
          %v948 = vadd.f32 %v755, %v917
          %v949 = vadd.f32 %v758, %v917
          %v950 = vadd.f32 %v763, %v921
          %v951 = vadd.f32 %v766, %v921
          %v952 = vadd.f32 %v771, %v925
          %v953 = vadd.f32 %v774, %v925
          %v954 = vadd.f32 %v779, %v929
          %v955 = vadd.f32 %v782, %v929
          %v956 = vadd.f32 %v787, %v933
          %v957 = vadd.f32 %v790, %v933
          %v958 = vld [vmem:[%s6] sm:$0x1]
          %v960 = vlaneseq
          %v961 = vshrl.u32 %v960, 7
          %v962 = vsub.s32 0, %v961
          %v963 = vrot.slane %v958, %v962
          %v965 = vadd.f32 %v942, %v963
          %v966 = vadd.f32 %v943, %v963
          %v967 = vadd.f32 %v944, %v963
          %v968 = vadd.f32 %v945, %v963
          %v969 = vadd.f32 %v946, %v963
          %v970 = vadd.f32 %v947, %v963
          %v971 = vadd.f32 %v948, %v963
          %v972 = vadd.f32 %v949, %v963
          %v973 = vadd.f32 %v950, %v963
          %v974 = vadd.f32 %v951, %v963
          %v975 = vadd.f32 %v952, %v963
          %v976 = vadd.f32 %v953, %v963
          %v977 = vadd.f32 %v954, %v963
          %v978 = vadd.f32 %v955, %v963
          %v979 = vadd.f32 %v956, %v963
          %v980 = vadd.f32 %v957, %v963
          %v981 = vtanh.pop %v965
          %v982 = vtanh.pop %v966
          %v983 = vtanh.pop %v967
          %v984 = vtanh.pop %v968
          %v985 = vtanh.pop %v969
          %v986 = vtanh.pop %v970
          %v987 = vtanh.pop %v971
          %v988 = vtanh.pop %v972
          %v989 = vtanh.pop %v973
          %v990 = vtanh.pop %v974
          %v991 = vtanh.pop %v975
          %v992 = vtanh.pop %v976
          %v993 = vtanh.pop %v977
          %v994 = vtanh.pop %v978
          %v995 = vtanh.pop %v979
          %v996 = vtanh.pop %v980
          %v997 = vld [vmem:[%s7] sm:$0x1]
          %v999 = vlaneseq
          %v1000 = vshrl.u32 %v999, 7
          %v1001 = vsub.s32 0, %v1000
          %v1002 = vrot.slane %v997, %v1001
          %v1004 = vmul.f32 %v981, %v1002
          %v1005 = vmul.f32 %v982, %v1002
          %v1006 = vmul.f32 %v983, %v1002
          %v1007 = vmul.f32 %v984, %v1002
          %v1008 = vmul.f32 %v985, %v1002
          %v1009 = vmul.f32 %v986, %v1002
          %v1010 = vmul.f32 %v987, %v1002
          %v1011 = vmul.f32 %v988, %v1002
          %v1012 = vmul.f32 %v989, %v1002
          %v1013 = vmul.f32 %v990, %v1002
          %v1014 = vmul.f32 %v991, %v1002
          %v1015 = vmul.f32 %v992, %v1002
          %v1016 = vmul.f32 %v993, %v1002
          %v1017 = vmul.f32 %v994, %v1002
          %v1018 = vmul.f32 %v995, %v1002
          %v1019 = vmul.f32 %v996, %v1002
          %vm1020 = vcmask 130048
          %v1021 = vsel %vm1020, %v1004, 0.0
          %1022 = vadd.xlane.f32.xlu0 %v1021
          %v1023 = vpop.xlane.xlu0 %1022
          %v1024 = vsel %vm1020, %v1005, 0.0
          %1025 = vadd.xlane.f32.xlu0 %v1024
          %v1026 = vpop.xlane.xlu0 %1025
          %v1027 = vsel %vm1020, %v1006, 0.0
          %1028 = vadd.xlane.f32.xlu0 %v1027
          %v1029 = vpop.xlane.xlu0 %1028
          %v1030 = vsel %vm1020, %v1007, 0.0
          %1031 = vadd.xlane.f32.xlu0 %v1030
          %v1032 = vpop.xlane.xlu0 %1031
          %v1033 = vsel %vm1020, %v1008, 0.0
          %1034 = vadd.xlane.f32.xlu0 %v1033
          %v1035 = vpop.xlane.xlu0 %1034
          %v1036 = vsel %vm1020, %v1009, 0.0
          %1037 = vadd.xlane.f32.xlu0 %v1036
          %v1038 = vpop.xlane.xlu0 %1037
          %v1039 = vsel %vm1020, %v1010, 0.0
          %1040 = vadd.xlane.f32.xlu0 %v1039
          %v1041 = vpop.xlane.xlu0 %1040
          %v1042 = vsel %vm1020, %v1011, 0.0
          %1043 = vadd.xlane.f32.xlu0 %v1042
          %v1044 = vpop.xlane.xlu0 %1043
          %v1045 = vsel %vm1020, %v1012, 0.0
          %1046 = vadd.xlane.f32.xlu0 %v1045
          %v1047 = vpop.xlane.xlu0 %1046
          %v1048 = vsel %vm1020, %v1013, 0.0
          %1049 = vadd.xlane.f32.xlu0 %v1048
          %v1050 = vpop.xlane.xlu0 %1049
          %v1051 = vsel %vm1020, %v1014, 0.0
          %1052 = vadd.xlane.f32.xlu0 %v1051
          %v1053 = vpop.xlane.xlu0 %1052
          %v1054 = vsel %vm1020, %v1015, 0.0
          %1055 = vadd.xlane.f32.xlu0 %v1054
          %v1056 = vpop.xlane.xlu0 %1055
          %v1057 = vsel %vm1020, %v1016, 0.0
          %1058 = vadd.xlane.f32.xlu0 %v1057
          %v1059 = vpop.xlane.xlu0 %1058
          %v1060 = vsel %vm1020, %v1017, 0.0
          %1061 = vadd.xlane.f32.xlu0 %v1060
          %v1062 = vpop.xlane.xlu0 %1061
          %v1063 = vsel %vm1020, %v1018, 0.0
          %1064 = vadd.xlane.f32.xlu0 %v1063
          %v1065 = vpop.xlane.xlu0 %1064
          %v1066 = vsel %vm1020, %v1019, 0.0
          %1067 = vadd.xlane.f32.xlu0 %v1066
          %v1068 = vpop.xlane.xlu0 %1067
          %vm1069 = vcmp.gt.f32.partialorder %v614, 0.0
          %v1086 = vlaneseq
          %v1087 = vand.u32 %v1086, 127
          %v1088 = vlaneseq
          %v1089 = vshrl.u32 %v1088, 7
          %v1090 = vsub.s32 %v1087, %v1089
          %v1091 = vrot.slane %v1023, %v1090
          %v1092 = vadd.s32 %v1087, 4294967288
          %v1093 = vlaneseq
          %v1094 = vshrl.u32 %v1093, 7
          %v1095 = vsub.s32 %v1092, %v1094
          %v1096 = vrot.slane %v1026, %v1095
          %vm1097 = vcmask 130112
          %v1098 = vsel %vm1097, %v1096, %v1091
          %v1099 = vlaneseq
          %v1100 = vshrl.u32 %v1099, 7
          %v1101 = vsub.s32 %v1087, %v1100
          %v1102 = vrot.slane %v1029, %v1101
          %v1103 = vlaneseq
          %v1104 = vshrl.u32 %v1103, 7
          %v1105 = vsub.s32 %v1092, %v1104
          %v1106 = vrot.slane %v1032, %v1105
          %v1107 = vsel %vm1097, %v1106, %v1102
          %v1108 = vlaneseq
          %v1109 = vshrl.u32 %v1108, 7
          %v1110 = vsub.s32 %v1087, %v1109
          %v1111 = vrot.slane %v1035, %v1110
          %v1112 = vlaneseq
          %v1113 = vshrl.u32 %v1112, 7
          %v1114 = vsub.s32 %v1092, %v1113
          %v1115 = vrot.slane %v1038, %v1114
          %v1116 = vsel %vm1097, %v1115, %v1111
          %v1117 = vlaneseq
          %v1118 = vshrl.u32 %v1117, 7
          %v1119 = vsub.s32 %v1087, %v1118
          %v1120 = vrot.slane %v1041, %v1119
          %v1121 = vlaneseq
          %v1122 = vshrl.u32 %v1121, 7
          %v1123 = vsub.s32 %v1092, %v1122
          %v1124 = vrot.slane %v1044, %v1123
          %v1125 = vsel %vm1097, %v1124, %v1120
          %v1126 = vlaneseq
          %v1127 = vshrl.u32 %v1126, 7
          %v1128 = vsub.s32 %v1087, %v1127
          %v1129 = vrot.slane %v1047, %v1128
          %v1130 = vlaneseq
          %v1131 = vshrl.u32 %v1130, 7
          %v1132 = vsub.s32 %v1092, %v1131
          %v1133 = vrot.slane %v1050, %v1132
          %v1134 = vsel %vm1097, %v1133, %v1129
          %v1135 = vlaneseq
          %v1136 = vshrl.u32 %v1135, 7
          %v1137 = vsub.s32 %v1087, %v1136
          %v1138 = vrot.slane %v1053, %v1137
          %v1139 = vlaneseq
          %v1140 = vshrl.u32 %v1139, 7
          %v1141 = vsub.s32 %v1092, %v1140
          %v1142 = vrot.slane %v1056, %v1141
          %v1143 = vsel %vm1097, %v1142, %v1138
          %v1144 = vlaneseq
          %v1145 = vshrl.u32 %v1144, 7
          %v1146 = vsub.s32 %v1087, %v1145
          %v1147 = vrot.slane %v1059, %v1146
          %v1148 = vlaneseq
          %v1149 = vshrl.u32 %v1148, 7
          %v1150 = vsub.s32 %v1092, %v1149
          %v1151 = vrot.slane %v1062, %v1150
          %v1152 = vsel %vm1097, %v1151, %v1147
          %v1153 = vlaneseq
          %v1154 = vshrl.u32 %v1153, 7
          %v1155 = vsub.s32 %v1087, %v1154
          %v1156 = vrot.slane %v1065, %v1155
          %v1157 = vlaneseq
          %v1158 = vshrl.u32 %v1157, 7
          %v1159 = vsub.s32 %v1092, %v1158
          %v1160 = vrot.slane %v1068, %v1159
          %v1161 = vsel %vm1097, %v1160, %v1156
          %vm1162 = vcmask 1041409
          %v1163 = vsel %vm1162, %v1107, %v1098
          %vm1164 = vcmask 1042434
          %v1165 = vsel %vm1164, %v1116, %v1163
          %vm1166 = vcmask 1043459
          %v1167 = vsel %vm1166, %v1125, %v1165
          %vm1168 = vcmask 1044484
          %v1169 = vsel %vm1168, %v1134, %v1167
          %vm1170 = vcmask 1045509
          %v1171 = vsel %vm1170, %v1143, %v1169
          %vm1172 = vcmask 1046534
          %v1173 = vsel %vm1172, %v1152, %v1171
          %vm1174 = vcmask 1047559
          %v1175 = vsel %vm1174, %v1161, %v1173
          %v1177 = vsel %vm1069, -inf, %v1175
          %v1178 = vsel %vm1020, %v1177, -inf
          %1179 = vmax.xlane.f32.xlu0 %v1178
          %v1180 = vpop.xlane.xlu0 %1179
          %v1181 = vsub.f32 %v1177, %v1180
          %v1182 = vmul.f32 %v1181, 1.442695
          %v1183 = vpow.pop %v1182
          %v1184 = vsel %vm1020, %v1183, 0.0
          %1185 = vadd.xlane.f32.xlu0 %v1184
          %v1186 = vpop.xlane.xlu0 %1185
          %v1187 = vrcp.pop %v1186
          %v1188 = vmul.f32 %v1183, %v1187
          %1189 = vst.msk [vmem:[%s547] sm:$0xff] %vm1020, %v1188
          %v1190 = vlaneseq
          %v1191 = vshrl.u32 %v1190, 7
          %v1192 = vsub.s32 0, %v1191
          %v1193 = vrot.slane %v1188, %v1192
          %1195 = vbcast.lane.b32.xlu0 %v1193, 256
          %v1196 = vpop.permute.xlu0 %1195
          %s1198 = sor.u32 256, 8
          %1199 = vbcast.lane.b32.xlu0 %v1193, %s1198
          %v1200 = vpop.permute.xlu0 %1199
          %v1201 = vlaneseq
          %v1202 = vshrl.u32 %v1201, 7
          %v1203 = vsub.s32 1, %v1202
          %v1204 = vrot.slane %v1188, %v1203
          %1206 = vbcast.lane.b32.xlu0 %v1204, 256
          %v1207 = vpop.permute.xlu0 %1206
          %s1209 = sor.u32 256, 8
          %1210 = vbcast.lane.b32.xlu0 %v1204, %s1209
          %v1211 = vpop.permute.xlu0 %1210
          %v1212 = vlaneseq
          %v1213 = vshrl.u32 %v1212, 7
          %v1214 = vsub.s32 2, %v1213
          %v1215 = vrot.slane %v1188, %v1214
          %1217 = vbcast.lane.b32.xlu0 %v1215, 256
          %v1218 = vpop.permute.xlu0 %1217
          %s1220 = sor.u32 256, 8
          %1221 = vbcast.lane.b32.xlu0 %v1215, %s1220
          %v1222 = vpop.permute.xlu0 %1221
          %v1223 = vlaneseq
          %v1224 = vshrl.u32 %v1223, 7
          %v1225 = vsub.s32 3, %v1224
          %v1226 = vrot.slane %v1188, %v1225
          %1228 = vbcast.lane.b32.xlu0 %v1226, 256
          %v1229 = vpop.permute.xlu0 %1228
          %s1231 = sor.u32 256, 8
          %1232 = vbcast.lane.b32.xlu0 %v1226, %s1231
          %v1233 = vpop.permute.xlu0 %1232
          %v1234 = vlaneseq
          %v1235 = vshrl.u32 %v1234, 7
          %v1236 = vsub.s32 4, %v1235
          %v1237 = vrot.slane %v1188, %v1236
          %1239 = vbcast.lane.b32.xlu0 %v1237, 256
          %v1240 = vpop.permute.xlu0 %1239
          %s1242 = sor.u32 256, 8
          %1243 = vbcast.lane.b32.xlu0 %v1237, %s1242
          %v1244 = vpop.permute.xlu0 %1243
          %v1245 = vlaneseq
          %v1246 = vshrl.u32 %v1245, 7
          %v1247 = vsub.s32 5, %v1246
          %v1248 = vrot.slane %v1188, %v1247
          %1250 = vbcast.lane.b32.xlu0 %v1248, 256
          %v1251 = vpop.permute.xlu0 %1250
          %s1253 = sor.u32 256, 8
          %1254 = vbcast.lane.b32.xlu0 %v1248, %s1253
          %v1255 = vpop.permute.xlu0 %1254
          %v1256 = vlaneseq
          %v1257 = vshrl.u32 %v1256, 7
          %v1258 = vsub.s32 6, %v1257
          %v1259 = vrot.slane %v1188, %v1258
          %1261 = vbcast.lane.b32.xlu0 %v1259, 256
          %v1262 = vpop.permute.xlu0 %1261
          %s1264 = sor.u32 256, 8
          %1265 = vbcast.lane.b32.xlu0 %v1259, %s1264
          %v1266 = vpop.permute.xlu0 %1265
          %v1267 = vlaneseq
          %v1268 = vshrl.u32 %v1267, 7
          %v1269 = vsub.s32 7, %v1268
          %v1270 = vrot.slane %v1188, %v1269
          %1272 = vbcast.lane.b32.xlu0 %v1270, 256
          %v1273 = vpop.permute.xlu0 %1272
          %s1275 = sor.u32 256, 8
          %1276 = vbcast.lane.b32.xlu0 %v1270, %s1275
          %v1277 = vpop.permute.xlu0 %1276
          %v1278 = vunpack.c.l.bf16 %v597
          %v1279 = vunpack.c.l.bf16 %v598
          %v1280 = vunpack.c.l.bf16 %v599
          %v1281 = vunpack.c.l.bf16 %v600
          %v1282 = vunpack.c.l.bf16 %v601
          %v1283 = vunpack.c.l.bf16 %v602
          %v1284 = vunpack.c.l.bf16 %v603
          %v1285 = vunpack.c.l.bf16 %v604
          %v1286 = vunpack.c.l.bf16 %v605
          %v1287 = vunpack.c.l.bf16 %v606
          %v1288 = vunpack.c.l.bf16 %v607
          %v1289 = vunpack.c.l.bf16 %v608
          %v1290 = vunpack.c.l.bf16 %v609
          %v1291 = vunpack.c.l.bf16 %v610
          %v1292 = vunpack.c.l.bf16 %v611
          %v1293 = vunpack.c.l.bf16 %v612
          %v1294 = vmul.f32 %v1196, %v1278
          %v1295 = vmul.f32 %v1200, %v1279
          %v1296 = vmul.f32 %v1207, %v1280
          %v1297 = vmul.f32 %v1211, %v1281
          %v1298 = vmul.f32 %v1218, %v1282
          %v1299 = vmul.f32 %v1222, %v1283
          %v1300 = vmul.f32 %v1229, %v1284
          %v1301 = vmul.f32 %v1233, %v1285
          %v1302 = vmul.f32 %v1240, %v1286
          %v1303 = vmul.f32 %v1244, %v1287
          %v1304 = vmul.f32 %v1251, %v1288
          %v1305 = vmul.f32 %v1255, %v1289
          %v1306 = vmul.f32 %v1262, %v1290
          %v1307 = vmul.f32 %v1266, %v1291
          %v1308 = vmul.f32 %v1273, %v1292
          %v1309 = vmul.f32 %v1277, %v1293
          %v1310 = vsel %vm671, %v1294, 0.0
          %v1311 = vsel %vm671, %v1295, 0.0
          %v1312 = vadd.f32 %v1310, %v1311
          %v1313 = vrot.slane %v1312, 4
          %v1314 = vadd.f32 %v1312, %v1313
          %v1315 = vrot.slane %v1314, 2
          %v1316 = vadd.f32 %v1314, %v1315
          %v1317 = vrot.slane %v1316, 1
          %v1318 = vadd.f32 %v1316, %v1317
          %v1319 = vsel %vm671, %v1296, 0.0
          %v1320 = vsel %vm671, %v1297, 0.0
          %v1321 = vadd.f32 %v1319, %v1320
          %v1322 = vrot.slane %v1321, 4
          %v1323 = vadd.f32 %v1321, %v1322
          %v1324 = vrot.slane %v1323, 2
          %v1325 = vadd.f32 %v1323, %v1324
          %v1326 = vrot.slane %v1325, 1
          %v1327 = vadd.f32 %v1325, %v1326
          %v1328 = vsel %vm671, %v1298, 0.0
          %v1329 = vsel %vm671, %v1299, 0.0
          %v1330 = vadd.f32 %v1328, %v1329
          %v1331 = vrot.slane %v1330, 4
          %v1332 = vadd.f32 %v1330, %v1331
          %v1333 = vrot.slane %v1332, 2
          %v1334 = vadd.f32 %v1332, %v1333
          %v1335 = vrot.slane %v1334, 1
          %v1336 = vadd.f32 %v1334, %v1335
          %v1337 = vsel %vm671, %v1300, 0.0
          %v1338 = vsel %vm671, %v1301, 0.0
          %v1339 = vadd.f32 %v1337, %v1338
          %v1340 = vrot.slane %v1339, 4
          %v1341 = vadd.f32 %v1339, %v1340
          %v1342 = vrot.slane %v1341, 2
          %v1343 = vadd.f32 %v1341, %v1342
          %v1344 = vrot.slane %v1343, 1
          %v1345 = vadd.f32 %v1343, %v1344
          %v1346 = vsel %vm671, %v1302, 0.0
          %v1347 = vsel %vm671, %v1303, 0.0
          %v1348 = vadd.f32 %v1346, %v1347
          %v1349 = vrot.slane %v1348, 4
          %v1350 = vadd.f32 %v1348, %v1349
          %v1351 = vrot.slane %v1350, 2
          %v1352 = vadd.f32 %v1350, %v1351
          %v1353 = vrot.slane %v1352, 1
          %v1354 = vadd.f32 %v1352, %v1353
          %v1355 = vsel %vm671, %v1304, 0.0
          %v1356 = vsel %vm671, %v1305, 0.0
          %v1357 = vadd.f32 %v1355, %v1356
          %v1358 = vrot.slane %v1357, 4
          %v1359 = vadd.f32 %v1357, %v1358
          %v1360 = vrot.slane %v1359, 2
          %v1361 = vadd.f32 %v1359, %v1360
          %v1362 = vrot.slane %v1361, 1
          %v1363 = vadd.f32 %v1361, %v1362
          %v1364 = vsel %vm671, %v1306, 0.0
          %v1365 = vsel %vm671, %v1307, 0.0
          %v1366 = vadd.f32 %v1364, %v1365
          %v1367 = vrot.slane %v1366, 4
          %v1368 = vadd.f32 %v1366, %v1367
          %v1369 = vrot.slane %v1368, 2
          %v1370 = vadd.f32 %v1368, %v1369
          %v1371 = vrot.slane %v1370, 1
          %v1372 = vadd.f32 %v1370, %v1371
          %v1373 = vsel %vm671, %v1308, 0.0
          %v1374 = vsel %vm671, %v1309, 0.0
          %v1375 = vadd.f32 %v1373, %v1374
          %v1376 = vrot.slane %v1375, 4
          %v1377 = vadd.f32 %v1375, %v1376
          %v1378 = vrot.slane %v1377, 2
          %v1379 = vadd.f32 %v1377, %v1378
          %v1380 = vrot.slane %v1379, 1
          %v1381 = vadd.f32 %v1379, %v1380
          %v1382 = vpack.c.bf16 %v1318, %v1318
          %v1383 = vpack.c.bf16 %v1327, %v1327
          %v1384 = vpack.c.bf16 %v1336, %v1336
          %v1385 = vpack.c.bf16 %v1345, %v1345
          %v1386 = vpack.c.bf16 %v1354, %v1354
          %v1387 = vpack.c.bf16 %v1363, %v1363
          %v1388 = vpack.c.bf16 %v1372, %v1372
          %v1389 = vpack.c.bf16 %v1381, %v1381
          %v1390 = vld [vmem:[%s8] sm:$0xf]
          %v1391 = vld [vmem:[%s8 + $0x4] sm:$0xf]
          %v1392 = vld [vmem:[%s8 + $0x8] sm:$0xf]
          %v1393 = vld [vmem:[%s8 + $0xc] sm:$0xf]
          %v1394 = vld [vmem:[%s9] sm:$0xf]
          %v1395 = vld [vmem:[%s9 + $0x4] sm:$0xf]
          %v1396 = vld [vmem:[%s9 + $0x8] sm:$0xf]
          %v1397 = vld [vmem:[%s9 + $0xc] sm:$0xf]
          %v1402 = vunpack.c.l.b16 %v1394
          %v1403 = vunpack.c.l.b16 %v1395
          %v1404 = vunpack.c.l.b16 %v1396
          %v1405 = vunpack.c.l.b16 %v1397
          %v1406 = vpack.c.b16 %v1403, %v1402
          %v1407 = vpack.c.b16 %v1405, %v1404
          %1410 = vmatprep.subr.bf16.mxu0 0
          %1411 = vmatpush1.bf16.msra.mxu0 0
          %1412 = vmatprep.subr.bf16.mxu0 0
          %1413 = vmatpush1.bf16.msra.mxu0 0
          %1414 = vmatprep.subr.bf16.mxu0 0
          %1415 = vmatpush1.bf16.msra.mxu0 0
          %1416 = vmatprep.subr.bf16.mxu0 0
          %1417 = vmatpush1.bf16.msra.mxu0 0
          %1418 = vmatprep.subr.bf16.mxu0 0
          %1419 = vmatpush1.bf16.msra.mxu0 0
          %1420 = vmatprep.subr.bf16.mxu0 0
          %1421 = vmatpush1.bf16.msra.mxu0 0
          %1422 = vmatprep.subr.bf16.mxu0 0
          %1423 = vmatpush1.bf16.msra.mxu0 %v1407
          %1424 = vmatprep.subr.bf16.mxu0 0
          %1425 = vmatpush1.bf16.msra.mxu0 %v1406
          %1426 = vmatprep.subr.bf16.mxu0 0
          %1427 = vmatpush2.bf16.msra.mxu0 0
          %1428 = vmatprep.subr.bf16.mxu0 0
          %1429 = vmatpush2.bf16.msra.mxu0 0
          %1430 = vmatprep.subr.bf16.mxu0 0
          %1431 = vmatpush2.bf16.msra.mxu0 0
          %1432 = vmatprep.subr.bf16.mxu0 0
          %1433 = vmatpush2.bf16.msra.mxu0 0
          %1434 = vmatprep.subr.bf16.mxu0 0
          %1435 = vmatpush2.bf16.msra.mxu0 0
          %1436 = vmatprep.subr.bf16.mxu0 0
          %1437 = vmatpush2.bf16.msra.mxu0 0
          %1438 = vmatprep.subr.bf16.mxu0 0
          %1439 = vmatpush2.bf16.msra.mxu0 0
          %1440 = vmatprep.subr.bf16.mxu0 0
          %1441 = vmatpush2.bf16.msra.mxu0 0
          %1442 = vmatprep.mubr.bf16.mxu0 0
          %1443 = vmatmul.mubr.bf16.gmra.mxu0 %v810
          %v1444 = vpop.f32.mrf.mxu0
          %v1445 = vadd.f32 0.0, %v1444
          %v1446 = vpop.f32.mrf.mxu0
          %v1447 = vpop.f32.mrf.mxu0
          %v1448 = vpop.f32.mrf.mxu0
          %1449 = vdwg.mxu0
          %v1458 = vunpack.c.l.b16 %v1382
          %v1459 = vunpack.c.l.b16 %v1383
          %v1460 = vunpack.c.l.b16 %v1384
          %v1461 = vunpack.c.l.b16 %v1385
          %v1462 = vunpack.c.l.b16 %v1386
          %v1463 = vunpack.c.l.b16 %v1387
          %v1464 = vunpack.c.l.b16 %v1388
          %v1465 = vunpack.c.l.b16 %v1389
          %v1466 = vsel %vm1162, %v1459, %v1458
          %v1467 = vsel %vm1164, %v1460, %v1466
          %v1468 = vsel %vm1166, %v1461, %v1467
          %v1469 = vsel %vm1168, %v1462, %v1468
          %v1470 = vsel %vm1170, %v1463, %v1469
          %v1471 = vsel %vm1172, %v1464, %v1470
          %v1472 = vsel %vm1174, %v1465, %v1471
          %v1473 = vpack.c.b16 %v1472, %v1472
          %v1478 = vunpack.c.l.b16 %v1390
          %v1479 = vunpack.c.l.b16 %v1391
          %v1480 = vunpack.c.l.b16 %v1392
          %v1481 = vunpack.c.l.b16 %v1393
          %v1482 = vpack.c.b16 %v1479, %v1478
          %v1483 = vpack.c.b16 %v1481, %v1480
          %v1487 = vsel %vm671, %v1473, 0
          %1489 = vmatprep.subr.bf16.mxu0 0
          %1490 = vmatpush1.bf16.msra.mxu0 0
          %1491 = vmatprep.subr.bf16.mxu0 0
          %1492 = vmatpush1.bf16.msra.mxu0 0
          %1493 = vmatprep.subr.bf16.mxu0 0
          %1494 = vmatpush1.bf16.msra.mxu0 0
          %1495 = vmatprep.subr.bf16.mxu0 0
          %1496 = vmatpush1.bf16.msra.mxu0 0
          %1497 = vmatprep.subr.bf16.mxu0 0
          %1498 = vmatpush1.bf16.msra.mxu0 0
          %1499 = vmatprep.subr.bf16.mxu0 0
          %1500 = vmatpush1.bf16.msra.mxu0 0
          %1501 = vmatprep.subr.bf16.mxu0 0
          %1502 = vmatpush1.bf16.msra.mxu0 %v1483
          %1503 = vmatprep.subr.bf16.mxu0 0
          %1504 = vmatpush1.bf16.msra.mxu0 %v1482
          %1505 = vmatprep.subr.bf16.mxu0 0
          %1506 = vmatpush2.bf16.msra.mxu0 0
          %1507 = vmatprep.subr.bf16.mxu0 0
          %1508 = vmatpush2.bf16.msra.mxu0 0
          %1509 = vmatprep.subr.bf16.mxu0 0
          %1510 = vmatpush2.bf16.msra.mxu0 0
          %1511 = vmatprep.subr.bf16.mxu0 0
          %1512 = vmatpush2.bf16.msra.mxu0 0
          %1513 = vmatprep.subr.bf16.mxu0 0
          %1514 = vmatpush2.bf16.msra.mxu0 0
          %1515 = vmatprep.subr.bf16.mxu0 0
          %1516 = vmatpush2.bf16.msra.mxu0 0
          %1517 = vmatprep.subr.bf16.mxu0 0
          %1518 = vmatpush2.bf16.msra.mxu0 0
          %1519 = vmatprep.subr.bf16.mxu0 0
          %1520 = vmatpush2.bf16.msra.mxu0 0
          %1521 = vmatprep.mubr.bf16.mxu0 0
          %1522 = vmatmul.mubr.bf16.gmra.mxu0 %v1487
          %v1523 = vpop.f32.mrf.mxu0
          %v1524 = vadd.f32 %v1445, %v1523
          %v1525 = vpop.f32.mrf.mxu0
          %v1526 = vpop.f32.mrf.mxu0
          %v1527 = vpop.f32.mrf.mxu0
          %1528 = vdwg.mxu0
          %v1529 = vld [vmem:[%s10] sm:$0x1]
          %v1531 = vlaneseq
          %v1532 = vshrl.u32 %v1531, 7
          %v1533 = vsub.s32 0, %v1532
          %v1534 = vrot.slane %v1529, %v1533
          %v1536 = vadd.f32 %v1524, %v1534
          %v1537 = vtanh.pop %v1536
          %v1538 = vpack.c.bf16 %v1537, %v1537
          %vm1539 = vcmask 125952
          %1540 = vst.msk [vmem:[#allocation2] sm:$0xf] %vm1539, %v1538
        $region76: #{tpu_custom_call.1} parent=71 // pred_fallthru
          _
        %v1541 = vld [vmem:[#allocation2] sm:$0xf]
        %v1542 = vld [vmem:[%s581] sm:$0xf]
        %v1543 = vld [vmem:[%s581 + $0x4] sm:$0xf]
        %v1544 = vld [vmem:[%s584] sm:$0x1]
        %v1546 = vlaneseq
        %v1547 = vshrl.u32 %v1546, 7
        %v1548 = vsub.s32 0, %v1547
        %v1549 = vrot.slane %v1544, %v1548
        %v1553 = vunpack.c.l.b16 %v1542
        %v1554 = vunpack.c.l.b16 %v1543
        %v1555 = vpack.c.b16 %v1554, %v1553
        %vm1557 = vcmask 130048
        %v1559 = vsel %vm1557, %v1541, 0
        %1561 = vmatprep.subr.bf16.mxu0 0
        %1562 = vmatpush1.bf16.msra.mxu0 0
        %1563 = vmatprep.subr.bf16.mxu0 0
        %1564 = vmatpush1.bf16.msra.mxu0 0
        %1565 = vmatprep.subr.bf16.mxu0 0
        %1566 = vmatpush1.bf16.msra.mxu0 0
        %1567 = vmatprep.subr.bf16.mxu0 0
        %1568 = vmatpush1.bf16.msra.mxu0 0
        %1569 = vmatprep.subr.bf16.mxu0 0
        %1570 = vmatpush1.bf16.msra.mxu0 0
        %1571 = vmatprep.subr.bf16.mxu0 0
        %1572 = vmatpush1.bf16.msra.mxu0 0
        %1573 = vmatprep.subr.bf16.mxu0 0
        %1574 = vmatpush1.bf16.msra.mxu0 0
        %1575 = vmatprep.subr.bf16.mxu0 0
        %1576 = vmatpush1.bf16.msra.mxu0 %v1555
        %1577 = vmatprep.subr.bf16.mxu0 0
        %1578 = vmatpush2.bf16.msra.mxu0 0
        %1579 = vmatprep.subr.bf16.mxu0 0
        %1580 = vmatpush2.bf16.msra.mxu0 0
        %1581 = vmatprep.subr.bf16.mxu0 0
        %1582 = vmatpush2.bf16.msra.mxu0 0
        %1583 = vmatprep.subr.bf16.mxu0 0
        %1584 = vmatpush2.bf16.msra.mxu0 0
        %1585 = vmatprep.subr.bf16.mxu0 0
        %1586 = vmatpush2.bf16.msra.mxu0 0
        %1587 = vmatprep.subr.bf16.mxu0 0
        %1588 = vmatpush2.bf16.msra.mxu0 0
        %1589 = vmatprep.subr.bf16.mxu0 0
        %1590 = vmatpush2.bf16.msra.mxu0 0
        %1591 = vmatprep.subr.bf16.mxu0 0
        %1592 = vmatpush2.bf16.msra.mxu0 0
        %1593 = vmatprep.mubr.bf16.mxu0 0
        %1594 = vmatmul.mubr.bf16.gmra.mxu0 %v1559
        %v1595 = vpop.f32.mrf.mxu0
        %v1596 = vadd.f32 %v1549, %v1595
        %v1597 = vpop.f32.mrf.mxu0
        %v1598 = vpop.f32.mrf.mxu0
        %v1599 = vpop.f32.mrf.mxu0
        %1600 = vdwg.mxu0
        %v1601 = vld [vmem:[%s577] sm:$0xff]
        %vm1602 = vcmp.gt.f32.partialorder %v1601, 0.0
        %v1603 = vsel %vm1602, %v1596, -inf
        %vm1604 = vcmask 64512
        %1605 = vst.msk [vmem:[%s591] sm:$0xff] %vm1604, %v1603
        %s1606 = sand.u32 %s354, 1
        %s1607 = scalar_lea.sflag [#allocation4], %s1606
        %s1608 = sand.u32 %s354, 1
        %s1609 = smul.addr %s1608, 8
        %s1610 = scalar_lea.vmem [#allocation3], %s1609
        %p1611 = scmp.lt.s32.totalorder %s33, 1
        %s1612 = scalar_select %p1611, %s33, 1
        %p1613 = scmp.lt.s32.totalorder %s34, 0
        %s1614 = scalar_select %p1613, %s34, 0
        %s1615 = sadd.s32 %s1614, %s1612
        %s1616 = smul.addr %s1615, 8
        %s1617 = scalar_lea.vmem %s14, %s1616
        // Predicated region
        $region77: #{tpu_custom_call.1} parent=71 // pred_check
          %p1618 = pneg %p364
        $region78: #{tpu_custom_call.1} parent=71 // pred_check_branch
          %1620 = sbr.rel (%p1618) target = $region80
        $region79: #{tpu_custom_call.1} parent=71 // pred_region
          %s1622 = ssub.s32 128, 128
          %1623 = vsyncadd %s1607, %s1622
          %s1624 = smul.addr %s33, 128
          %s1625 = scalar_lea.hbm %s13, %s1624
          %s1627 = sshll.u32 %s1610, 4
          %s1628 = int_to_ptr.vmem [resolvable:$true] %s1627
          %1630 = dma.vmem_to_hbm [thread:$0]  %s1628, 128, %s1625, %s1607
        $region80: #{tpu_custom_call.1} parent=71 // pred_fallthru
          _
        // Predicated region
        $region81: #{tpu_custom_call.1} parent=71 // pred_check
          %p1631 = pneg %p392
        $region82: #{tpu_custom_call.1} parent=71 // pred_check_branch
          %1633 = sbr.rel (%p1631) target = $region84
        $region83: #{tpu_custom_call.1} parent=71 // pred_region
          _
        $region84: #{tpu_custom_call.1} parent=71 // pred_fallthru
          _
      $region72: #{tpu_custom_call.1} parent=5 // pred_fallthru
        _
      %p1634 = scmp.le.s32.totalorder 2, %s24
      // Predicated region
      $region85: #{tpu_custom_call.1} parent=5 // pred_check
        %p1635 = pneg %p1634
      $region86: #{tpu_custom_call.1} parent=5 // pred_check_branch
        %1637 = sbr.rel (%p1635) target = $region88
      $region87: #{tpu_custom_call.1} parent=5 // pred_region
        %s1638 = ssub.s32 %s24, 2
        // Predicated region
        $region89: #{tpu_custom_call.1} parent=87 // pred_check
          %p1639 = pneg %p370
        $region90: #{tpu_custom_call.1} parent=87 // pred_check_branch
          %1641 = sbr.rel (%p1639) target = $region92
        $region91: #{tpu_custom_call.1} parent=87 // pred_region
          %s1642 = sand.u32 %s355, 1
          %s1643 = scalar_lea.sflag [#allocation4], %s1642
          %s1644 = sand.u32 %s355, 1
          %s1645 = smul.addr %s1644, 8
          %s1646 = scalar_lea.vmem [#allocation3], %s1645
          %1647 = dma.done %s1643, 128
        $region92: #{tpu_custom_call.1} parent=87 // pred_fallthru
          _
        // Predicated region
        $region93: #{tpu_custom_call.1} parent=87 // pred_check
          %p1648 = pneg %p398
        $region94: #{tpu_custom_call.1} parent=87 // pred_check_branch
          %1650 = sbr.rel (%p1648) target = $region96
        $region95: #{tpu_custom_call.1} parent=87 // pred_region
          %p1651 = scmp.lt.s32.totalorder %s35, 1
          %s1652 = scalar_select %p1651, %s35, 1
          %p1653 = scmp.lt.s32.totalorder %s36, 0
          %s1654 = scalar_select %p1653, %s36, 0
          %s1655 = sadd.s32 %s1654, %s1652
          %s1656 = smul.addr %s1655, 8
          %s1657 = scalar_lea.vmem %s14, %s1656
        $region96: #{tpu_custom_call.1} parent=87 // pred_fallthru
          _
      $region88: #{tpu_custom_call.1} parent=5 // pred_fallthru
        _
    $region6: #{tpu_custom_call.1} parent=1 // loop_footer
      %s28 = sadd.s32 1, %s24
    $region7: #{tpu_custom_call.1} parent=1 // loop_footer_branch
      %23 = sbr.rel target = $region3
    $region8: #{tpu_custom_call.1} parent=1 // loop_exit
      _
    %1658 = vsyncpa [#allocation4], 1
    %s1659 = scalar_lea.sflag [#allocation4], 1
    %1660 = vsyncpa %s1659, 1

// kernel: tpu_custom_call.1
$region0: #{tpu_custom_call.1}
  #allocation0 [shape = 'u32[]', space=smem, size = 0x4, offset = 0x4, fixed_abs, tag = 'smem constant byte address 0x4 - core index']
  #allocation1 [shape = 'u32[144,128]{1,0:T(1,128)}', space=vmem, size = 0x12000, scoped, tag = 'internal scratch']
  #allocation2 [shape = 'bf16[8,16]{1,0:T(8,128)(2,1)}', space=vmem, size = 0x800, scoped, tag = 'scratch operand']
  %s0 = inlined_call_operand.vmem [shape: bf16[256,32], index: 0, kind: input, shape index: {}]
  %s1 = inlined_call_operand.vmem [shape: bf16[16,32], index: 1, kind: input, shape index: {}]
  %s2 = inlined_call_operand.vmem [shape: f32[16,16], index: 2, kind: input, shape index: {}]
  %s3 = inlined_call_operand.vmem [shape: f32[16,8], index: 3, kind: input, shape index: {}]
  %s4 = inlined_call_operand.vmem [shape: bf16[32,16], index: 4, kind: input, shape index: {}]
  %s5 = inlined_call_operand.vmem [shape: bf16[32,16], index: 5, kind: input, shape index: {}]
  %s6 = inlined_call_operand.vmem [shape: f32[1,16], index: 6, kind: input, shape index: {}]
  %s7 = inlined_call_operand.vmem [shape: f32[1,16], index: 7, kind: input, shape index: {}]
  %s8 = inlined_call_operand.vmem [shape: bf16[32,16], index: 8, kind: input, shape index: {}]
  %s9 = inlined_call_operand.vmem [shape: bf16[32,16], index: 9, kind: input, shape index: {}]
  %s10 = inlined_call_operand.vmem [shape: f32[1,16], index: 10, kind: input, shape index: {}]
  %s11 = inlined_call_operand.vmem [shape: bf16[16,8], index: 11, kind: input, shape index: {}]
  %s12 = inlined_call_operand.vmem [shape: f32[1,8], index: 12, kind: input, shape index: {}]
  %s13 = inlined_call_operand.hbm [shape: f32[16,16], index: 13, kind: output, shape index: {0}]
  %s14 = inlined_call_operand.vmem [shape: f32[16,8], index: 14, kind: output, shape index: {1}]
  %15 = xla_tuple %s13, %s14
  %s16 = sld [smem:[#allocation0]]
  $region97: #{tpu_custom_call.1} parent=0
    _
  %s18 = ssub.s32 1, %s16
  %s19 = scalar_select 0, %s18, %s16
  $region1: #{tpu_custom_call.1} parent=0
    #allocation3 [shape = 'u8[8192]{0}', space=vmem, size = 0x2000, scoped, tag = 'output window, operand 0']
    #allocation4 [shape = 's32[2]{0}', space=sflag, size = 0x8, scoped, tag = 'scoped memory for tpu_custom_call.1']
    %20 = vsyncpa [#allocation4], 0
    %s21 = scalar_lea.sflag [#allocation4], 1
    %22 = vsyncpa %s21, 0
    loop: start=0, step=1, limit=4
    $region2: #{tpu_custom_call.1} parent=1 // loop_pre_header
      _
    $region3: #{tpu_custom_call.1} parent=1 // loop_header
      %s24 = sphi 0, %s28
      %p25 = scmp.ge.s32.totalorder %s24, 4
      %s31 = sphi 0, %s43
      %s32 = sphi 0, %s39
      %s33 = sphi 0, %s31
      %s34 = sphi 0, %s32
      %s35 = sphi 0, %s33
      %s36 = sphi 0, %s34
      %s46 = sphi 0, %s48
      %s49 = sphi 0, %s46
      %s50 = sphi 0, %s49
      %s66 = sphi 0, %s50
      %s72 = sphi 0, %s74
      %s75 = sphi 0, %s72
      %s76 = sphi 0, %s75
      %s92 = sphi 0, %s76
      %s98 = sphi 0, %s100
      %s101 = sphi 0, %s98
      %s102 = sphi 0, %s101
      %s118 = sphi 0, %s102
      %s126 = sphi 0, %s128
      %s129 = sphi 0, %s126
      %s130 = sphi 0, %s129
      %s146 = sphi 0, %s130
      %s150 = sphi 0, %s150
      %s152 = sphi 0, %s150
      %s153 = sphi 0, %s152
      %s167 = sphi 0, %s153
      %s171 = sphi 0, %s171
      %s173 = sphi 0, %s171
      %s174 = sphi 0, %s173
      %s188 = sphi 0, %s174
      %s192 = sphi 0, %s192
      %s194 = sphi 0, %s192
      %s195 = sphi 0, %s194
      %s209 = sphi 0, %s195
      %s213 = sphi 0, %s213
      %s215 = sphi 0, %s213
      %s216 = sphi 0, %s215
      %s230 = sphi 0, %s216
      %s234 = sphi 0, %s234
      %s236 = sphi 0, %s234
      %s237 = sphi 0, %s236
      %s251 = sphi 0, %s237
      %s255 = sphi 0, %s255
      %s257 = sphi 0, %s255
      %s258 = sphi 0, %s257
      %s272 = sphi 0, %s258
      %s276 = sphi 0, %s276
      %s278 = sphi 0, %s276
      %s279 = sphi 0, %s278
      %s293 = sphi 0, %s279
      %s299 = sphi 0, %s301
      %s302 = sphi 0, %s299
      %s303 = sphi 0, %s302
      %s319 = sphi 0, %s303
      %s325 = sphi 0, %s327
      %s328 = sphi 0, %s325
      %s329 = sphi 0, %s328
      %s345 = sphi 0, %s329
      %s351 = sphi 0, %s353
      %s354 = sphi 0, %s351
      %s355 = sphi 0, %s354
      %s371 = sphi 0, %s355
      %s379 = sphi 0, %s381
      %s382 = sphi 0, %s379
      %s383 = sphi 0, %s382
      %s399 = sphi 0, %s383
    $region4: #{tpu_custom_call.1} parent=1 // loop_header_branch
      %27 = sbr.rel (%p25) target = $region8
    $region5: #{tpu_custom_call.1} parent=1 // loop_body
      %s29 = ssub.s32 %s24, 1
      %s30 = ssub.s32 %s24, 2
      %s37 = sadd.s32 1, %s32
      %p38 = scmp.ge.s32.totalorder %s37, 1
      %s39 = scalar_select %p38, 0, %s37
      %s40 = sadd.s32 1, %s31
      %s41 = scalar_select %p38, %s40, %s31
      %p42 = scmp.ge.s32.totalorder %s41, 2
      %s43 = scalar_select %p42, 0, %s41
      %s44 = ssub.s32 %s31, %s43
      %p45 = scmp.eq.s32.totalorder %s44, 0
      %s47 = sadd.s32 %s46, 1
      %s48 = scalar_select %p45, %s46, %s47
      %p51 = pneg %p45
      %p52 = scmp.eq.s32.totalorder %s24, 1
      %p53 = por %p51, %p52
      %p54 = scmp.ne.s32.totalorder %s46, %s49
      %p55 = scmp.eq.s32.totalorder %s24, 0
      %p56 = por %p54, %p55
      %p57 = scmp.ne.s32.totalorder %s46, %s49
      %p58 = scmp.eq.s32.totalorder %s29, 1
      %p59 = por %p57, %p58
      %p60 = scmp.ne.s32.totalorder %s49, %s50
      %p61 = scmp.eq.s32.totalorder %s29, 0
      %p62 = por %p60, %p61
      %p63 = scmp.ne.s32.totalorder %s49, %s50
      %p64 = scmp.eq.s32.totalorder %s30, 1
      %p65 = por %p63, %p64
      %p67 = scmp.ne.s32.totalorder %s50, %s66
      %p68 = scmp.eq.s32.totalorder %s30, 0
      %p69 = por %p67, %p68
      %s70 = ssub.s32 %s31, %s43
      %p71 = scmp.eq.s32.totalorder %s70, 0
      %s73 = sadd.s32 %s72, 1
      %s74 = scalar_select %p71, %s72, %s73
      %p77 = pneg %p71
      %p78 = scmp.eq.s32.totalorder %s24, 1
      %p79 = por %p77, %p78
      %p80 = scmp.ne.s32.totalorder %s72, %s75
      %p81 = scmp.eq.s32.totalorder %s24, 0
      %p82 = por %p80, %p81
      %p83 = scmp.ne.s32.totalorder %s72, %s75
      %p84 = scmp.eq.s32.totalorder %s29, 1
      %p85 = por %p83, %p84
      %p86 = scmp.ne.s32.totalorder %s75, %s76
      %p87 = scmp.eq.s32.totalorder %s29, 0
      %p88 = por %p86, %p87
      %p89 = scmp.ne.s32.totalorder %s75, %s76
      %p90 = scmp.eq.s32.totalorder %s30, 1
      %p91 = por %p89, %p90
      %p93 = scmp.ne.s32.totalorder %s76, %s92
      %p94 = scmp.eq.s32.totalorder %s30, 0
      %p95 = por %p93, %p94
      %s96 = ssub.s32 %s31, %s43
      %p97 = scmp.eq.s32.totalorder %s96, 0
      %s99 = sadd.s32 %s98, 1
      %s100 = scalar_select %p97, %s98, %s99
      %p103 = pneg %p97
      %p104 = scmp.eq.s32.totalorder %s24, 1
      %p105 = por %p103, %p104
      %p106 = scmp.ne.s32.totalorder %s98, %s101
      %p107 = scmp.eq.s32.totalorder %s24, 0
      %p108 = por %p106, %p107
      %p109 = scmp.ne.s32.totalorder %s98, %s101
      %p110 = scmp.eq.s32.totalorder %s29, 1
      %p111 = por %p109, %p110
      %p112 = scmp.ne.s32.totalorder %s101, %s102
      %p113 = scmp.eq.s32.totalorder %s29, 0
      %p114 = por %p112, %p113
      %p115 = scmp.ne.s32.totalorder %s101, %s102
      %p116 = scmp.eq.s32.totalorder %s30, 1
      %p117 = por %p115, %p116
      %p119 = scmp.ne.s32.totalorder %s102, %s118
      %p120 = scmp.eq.s32.totalorder %s30, 0
      %p121 = por %p119, %p120
      %s122 = ssub.s32 %s31, %s43
      %s123 = ssub.s32 %s32, %s39
      %s124 = sor.u32 %s122, %s123
      %p125 = scmp.eq.s32.totalorder %s124, 0
      %s127 = sadd.s32 %s126, 1
      %s128 = scalar_select %p125, %s126, %s127
      %p131 = pneg %p125
      %p132 = scmp.eq.s32.totalorder %s24, 1
      %p133 = por %p131, %p132
      %p134 = scmp.ne.s32.totalorder %s126, %s129
      %p135 = scmp.eq.s32.totalorder %s24, 0
      %p136 = por %p134, %p135
      %p137 = scmp.ne.s32.totalorder %s126, %s129
      %p138 = scmp.eq.s32.totalorder %s29, 1
      %p139 = por %p137, %p138
      %p140 = scmp.ne.s32.totalorder %s129, %s130
      %p141 = scmp.eq.s32.totalorder %s29, 0
      %p142 = por %p140, %p141
      %p143 = scmp.ne.s32.totalorder %s129, %s130
      %p144 = scmp.eq.s32.totalorder %s30, 1
      %p145 = por %p143, %p144
      %p147 = scmp.ne.s32.totalorder %s130, %s146
      %p148 = scmp.eq.s32.totalorder %s30, 0
      %p149 = por %p147, %p148
      %s151 = sadd.s32 %s150, 1
      %p154 = scmp.eq.s32.totalorder %s24, 1
      %p155 = scmp.ne.s32.totalorder %s150, %s152
      %p156 = scmp.eq.s32.totalorder %s24, 0
      %p157 = por %p155, %p156
      %p158 = scmp.ne.s32.totalorder %s150, %s152
      %p159 = scmp.eq.s32.totalorder %s29, 1
      %p160 = por %p158, %p159
      %p161 = scmp.ne.s32.totalorder %s152, %s153
      %p162 = scmp.eq.s32.totalorder %s29, 0
      %p163 = por %p161, %p162
      %p164 = scmp.ne.s32.totalorder %s152, %s153
      %p165 = scmp.eq.s32.totalorder %s30, 1
      %p166 = por %p164, %p165
      %p168 = scmp.ne.s32.totalorder %s153, %s167
      %p169 = scmp.eq.s32.totalorder %s30, 0
      %p170 = por %p168, %p169
      %s172 = sadd.s32 %s171, 1
      %p175 = scmp.eq.s32.totalorder %s24, 1
      %p176 = scmp.ne.s32.totalorder %s171, %s173
      %p177 = scmp.eq.s32.totalorder %s24, 0
      %p178 = por %p176, %p177
      %p179 = scmp.ne.s32.totalorder %s171, %s173
      %p180 = scmp.eq.s32.totalorder %s29, 1
      %p181 = por %p179, %p180
      %p182 = scmp.ne.s32.totalorder %s173, %s174
      %p183 = scmp.eq.s32.totalorder %s29, 0
      %p184 = por %p182, %p183
      %p185 = scmp.ne.s32.totalorder %s173, %s174
      %p186 = scmp.eq.s32.totalorder %s30, 1
      %p187 = por %p185, %p186
      %p189 = scmp.ne.s32.totalorder %s174, %s188
      %p190 = scmp.eq.s32.totalorder %s30, 0
      %p191 = por %p189, %p190
      %s193 = sadd.s32 %s192, 1
      %p196 = scmp.eq.s32.totalorder %s24, 1
      %p197 = scmp.ne.s32.totalorder %s192, %s194
      %p198 = scmp.eq.s32.totalorder %s24, 0
      %p199 = por %p197, %p198
      %p200 = scmp.ne.s32.totalorder %s192, %s194
      %p201 = scmp.eq.s32.totalorder %s29, 1
      %p202 = por %p200, %p201
      %p203 = scmp.ne.s32.totalorder %s194, %s195
      %p204 = scmp.eq.s32.totalorder %s29, 0
      %p205 = por %p203, %p204
      %p206 = scmp.ne.s32.totalorder %s194, %s195
      %p207 = scmp.eq.s32.totalorder %s30, 1
      %p208 = por %p206, %p207
      %p210 = scmp.ne.s32.totalorder %s195, %s209
      %p211 = scmp.eq.s32.totalorder %s30, 0
      %p212 = por %p210, %p211
      %s214 = sadd.s32 %s213, 1
      %p217 = scmp.eq.s32.totalorder %s24, 1
      %p218 = scmp.ne.s32.totalorder %s213, %s215
      %p219 = scmp.eq.s32.totalorder %s24, 0
      %p220 = por %p218, %p219
      %p221 = scmp.ne.s32.totalorder %s213, %s215
      %p222 = scmp.eq.s32.totalorder %s29, 1
      %p223 = por %p221, %p222
      %p224 = scmp.ne.s32.totalorder %s215, %s216
      %p225 = scmp.eq.s32.totalorder %s29, 0
      %p226 = por %p224, %p225
      %p227 = scmp.ne.s32.totalorder %s215, %s216
      %p228 = scmp.eq.s32.totalorder %s30, 1
      %p229 = por %p227, %p228
      %p231 = scmp.ne.s32.totalorder %s216, %s230
      %p232 = scmp.eq.s32.totalorder %s30, 0
      %p233 = por %p231, %p232
      %s235 = sadd.s32 %s234, 1
      %p238 = scmp.eq.s32.totalorder %s24, 1
      %p239 = scmp.ne.s32.totalorder %s234, %s236
      %p240 = scmp.eq.s32.totalorder %s24, 0
      %p241 = por %p239, %p240
      %p242 = scmp.ne.s32.totalorder %s234, %s236
      %p243 = scmp.eq.s32.totalorder %s29, 1
      %p244 = por %p242, %p243
      %p245 = scmp.ne.s32.totalorder %s236, %s237
      %p246 = scmp.eq.s32.totalorder %s29, 0
      %p247 = por %p245, %p246
      %p248 = scmp.ne.s32.totalorder %s236, %s237
      %p249 = scmp.eq.s32.totalorder %s30, 1
      %p250 = por %p248, %p249
      %p252 = scmp.ne.s32.totalorder %s237, %s251
      %p253 = scmp.eq.s32.totalorder %s30, 0
      %p254 = por %p252, %p253
      %s256 = sadd.s32 %s255, 1
      %p259 = scmp.eq.s32.totalorder %s24, 1
      %p260 = scmp.ne.s32.totalorder %s255, %s257
      %p261 = scmp.eq.s32.totalorder %s24, 0
      %p262 = por %p260, %p261
      %p263 = scmp.ne.s32.totalorder %s255, %s257
      %p264 = scmp.eq.s32.totalorder %s29, 1
      %p265 = por %p263, %p264
      %p266 = scmp.ne.s32.totalorder %s257, %s258
      %p267 = scmp.eq.s32.totalorder %s29, 0
      %p268 = por %p266, %p267
      %p269 = scmp.ne.s32.totalorder %s257, %s258
      %p270 = scmp.eq.s32.totalorder %s30, 1
      %p271 = por %p269, %p270
      %p273 = scmp.ne.s32.totalorder %s258, %s272
      %p274 = scmp.eq.s32.totalorder %s30, 0
      %p275 = por %p273, %p274
      %s277 = sadd.s32 %s276, 1
      %p280 = scmp.eq.s32.totalorder %s24, 1
      %p281 = scmp.ne.s32.totalorder %s276, %s278
      %p282 = scmp.eq.s32.totalorder %s24, 0
      %p283 = por %p281, %p282
      %p284 = scmp.ne.s32.totalorder %s276, %s278
      %p285 = scmp.eq.s32.totalorder %s29, 1
      %p286 = por %p284, %p285
      %p287 = scmp.ne.s32.totalorder %s278, %s279
      %p288 = scmp.eq.s32.totalorder %s29, 0
      %p289 = por %p287, %p288
      %p290 = scmp.ne.s32.totalorder %s278, %s279
      %p291 = scmp.eq.s32.totalorder %s30, 1
      %p292 = por %p290, %p291
      %p294 = scmp.ne.s32.totalorder %s279, %s293
      %p295 = scmp.eq.s32.totalorder %s30, 0
      %p296 = por %p294, %p295
      %s297 = ssub.s32 %s32, %s39
      %p298 = scmp.eq.s32.totalorder %s297, 0
      %s300 = sadd.s32 %s299, 1
      %s301 = scalar_select %p298, %s299, %s300
      %p304 = pneg %p298
      %p305 = scmp.eq.s32.totalorder %s24, 1
      %p306 = por %p304, %p305
      %p307 = scmp.ne.s32.totalorder %s299, %s302
      %p308 = scmp.eq.s32.totalorder %s24, 0
      %p309 = por %p307, %p308
      %p310 = scmp.ne.s32.totalorder %s299, %s302
      %p311 = scmp.eq.s32.totalorder %s29, 1
      %p312 = por %p310, %p311
      %p313 = scmp.ne.s32.totalorder %s302, %s303
      %p314 = scmp.eq.s32.totalorder %s29, 0
      %p315 = por %p313, %p314
      %p316 = scmp.ne.s32.totalorder %s302, %s303
      %p317 = scmp.eq.s32.totalorder %s30, 1
      %p318 = por %p316, %p317
      %p320 = scmp.ne.s32.totalorder %s303, %s319
      %p321 = scmp.eq.s32.totalorder %s30, 0
      %p322 = por %p320, %p321
      %s323 = ssub.s32 %s32, %s39
      %p324 = scmp.eq.s32.totalorder %s323, 0
      %s326 = sadd.s32 %s325, 1
      %s327 = scalar_select %p324, %s325, %s326
      %p330 = pneg %p324
      %p331 = scmp.eq.s32.totalorder %s24, 1
      %p332 = por %p330, %p331
      %p333 = scmp.ne.s32.totalorder %s325, %s328
      %p334 = scmp.eq.s32.totalorder %s24, 0
      %p335 = por %p333, %p334
      %p336 = scmp.ne.s32.totalorder %s325, %s328
      %p337 = scmp.eq.s32.totalorder %s29, 1
      %p338 = por %p336, %p337
      %p339 = scmp.ne.s32.totalorder %s328, %s329
      %p340 = scmp.eq.s32.totalorder %s29, 0
      %p341 = por %p339, %p340
      %p342 = scmp.ne.s32.totalorder %s328, %s329
      %p343 = scmp.eq.s32.totalorder %s30, 1
      %p344 = por %p342, %p343
      %p346 = scmp.ne.s32.totalorder %s329, %s345
      %p347 = scmp.eq.s32.totalorder %s30, 0
      %p348 = por %p346, %p347
      %s349 = ssub.s32 %s31, %s43
      %p350 = scmp.eq.s32.totalorder %s349, 0
      %s352 = sadd.s32 %s351, 1
      %s353 = scalar_select %p350, %s351, %s352
      %p356 = pneg %p350
      %p357 = scmp.eq.s32.totalorder %s24, 1
      %p358 = por %p356, %p357
      %p359 = scmp.ne.s32.totalorder %s351, %s354
      %p360 = scmp.eq.s32.totalorder %s24, 0
      %p361 = por %p359, %p360
      %p362 = scmp.ne.s32.totalorder %s351, %s354
      %p363 = scmp.eq.s32.totalorder %s29, 1
      %p364 = por %p362, %p363
      %p365 = scmp.ne.s32.totalorder %s354, %s355
      %p366 = scmp.eq.s32.totalorder %s29, 0
      %p367 = por %p365, %p366
      %p368 = scmp.ne.s32.totalorder %s354, %s355
      %p369 = scmp.eq.s32.totalorder %s30, 1
      %p370 = por %p368, %p369
      %p372 = scmp.ne.s32.totalorder %s355, %s371
      %p373 = scmp.eq.s32.totalorder %s30, 0
      %p374 = por %p372, %p373
      %s375 = ssub.s32 %s31, %s43
      %s376 = ssub.s32 %s32, %s39
      %s377 = sor.u32 %s375, %s376
      %p378 = scmp.eq.s32.totalorder %s377, 0
      %s380 = sadd.s32 %s379, 1
      %s381 = scalar_select %p378, %s379, %s380
      %p384 = pneg %p378
      %p385 = scmp.eq.s32.totalorder %s24, 1
      %p386 = por %p384, %p385
      %p387 = scmp.ne.s32.totalorder %s379, %s382
      %p388 = scmp.eq.s32.totalorder %s24, 0
      %p389 = por %p387, %p388
      %p390 = scmp.ne.s32.totalorder %s379, %s382
      %p391 = scmp.eq.s32.totalorder %s29, 1
      %p392 = por %p390, %p391
      %p393 = scmp.ne.s32.totalorder %s382, %s383
      %p394 = scmp.eq.s32.totalorder %s29, 0
      %p395 = por %p393, %p394
      %p396 = scmp.ne.s32.totalorder %s382, %s383
      %p397 = scmp.eq.s32.totalorder %s30, 1
      %p398 = por %p396, %p397
      %p400 = scmp.ne.s32.totalorder %s383, %s399
      %p401 = scmp.eq.s32.totalorder %s30, 0
      %p402 = por %p400, %p401
      %p403 = scmp.le.s32.totalorder 1, %s24
      %p404 = scmp.lt.s32.totalorder %s24, 3
      %p405 = pnand %p403, %p404
      %p406 = pneg %p405
      // Predicated region
      $region9: #{tpu_custom_call.1} parent=5 // pred_check
        _
      $region10: #{tpu_custom_call.1} parent=5 // pred_check_branch
        %408 = sbr.rel (%p405) target = $region12
      $region11: #{tpu_custom_call.1} parent=5 // pred_region
        %s409 = ssub.s32 %s24, 1
        // Predicated region
        $region13: #{tpu_custom_call.1} parent=11 // pred_check
          %p410 = pneg %p163
        $region14: #{tpu_custom_call.1} parent=11 // pred_check_branch
          %412 = sbr.rel (%p410) target = $region16
        $region15: #{tpu_custom_call.1} parent=11 // pred_region
          _
        $region16: #{tpu_custom_call.1} parent=11 // pred_fallthru
          _
        // Predicated region
        $region17: #{tpu_custom_call.1} parent=11 // pred_check
          %p413 = pneg %p184
        $region18: #{tpu_custom_call.1} parent=11 // pred_check_branch
          %415 = sbr.rel (%p413) target = $region20
        $region19: #{tpu_custom_call.1} parent=11 // pred_region
          _
        $region20: #{tpu_custom_call.1} parent=11 // pred_fallthru
          _
        // Predicated region
        $region21: #{tpu_custom_call.1} parent=11 // pred_check
          %p416 = pneg %p205
        $region22: #{tpu_custom_call.1} parent=11 // pred_check_branch
          %418 = sbr.rel (%p416) target = $region24
        $region23: #{tpu_custom_call.1} parent=11 // pred_region
          _
        $region24: #{tpu_custom_call.1} parent=11 // pred_fallthru
          _
        // Predicated region
        $region25: #{tpu_custom_call.1} parent=11 // pred_check
          %p419 = pneg %p226
        $region26: #{tpu_custom_call.1} parent=11 // pred_check_branch
          %421 = sbr.rel (%p419) target = $region28
        $region27: #{tpu_custom_call.1} parent=11 // pred_region
          _
        $region28: #{tpu_custom_call.1} parent=11 // pred_fallthru
          _
        // Predicated region
        $region29: #{tpu_custom_call.1} parent=11 // pred_check
          %p422 = pneg %p247
        $region30: #{tpu_custom_call.1} parent=11 // pred_check_branch
          %424 = sbr.rel (%p422) target = $region32
        $region31: #{tpu_custom_call.1} parent=11 // pred_region
          _
        $region32: #{tpu_custom_call.1} parent=11 // pred_fallthru
          _
        // Predicated region
        $region33: #{tpu_custom_call.1} parent=11 // pred_check
          %p425 = pneg %p268
        $region34: #{tpu_custom_call.1} parent=11 // pred_check_branch
          %427 = sbr.rel (%p425) target = $region36
        $region35: #{tpu_custom_call.1} parent=11 // pred_region
          _
        $region36: #{tpu_custom_call.1} parent=11 // pred_fallthru
          _
        // Predicated region
        $region37: #{tpu_custom_call.1} parent=11 // pred_check
          %p428 = pneg %p289
        $region38: #{tpu_custom_call.1} parent=11 // pred_check_branch
          %430 = sbr.rel (%p428) target = $region40
        $region39: #{tpu_custom_call.1} parent=11 // pred_region
          _
        $region40: #{tpu_custom_call.1} parent=11 // pred_fallthru
          _
        // Predicated region
        $region41: #{tpu_custom_call.1} parent=11 // pred_check
          %p431 = pneg %p315
        $region42: #{tpu_custom_call.1} parent=11 // pred_check_branch
          %433 = sbr.rel (%p431) target = $region44
        $region43: #{tpu_custom_call.1} parent=11 // pred_region
          %p434 = scmp.lt.s32.totalorder %s34, 0
          %s435 = scalar_select %p434, %s34, 0
          %s436 = smul.addr %s435, 4
          %s437 = scalar_lea.vmem %s11, %s436
        $region44: #{tpu_custom_call.1} parent=11 // pred_fallthru
          _
        // Predicated region
        $region45: #{tpu_custom_call.1} parent=11 // pred_check
          %p438 = pneg %p341
        $region46: #{tpu_custom_call.1} parent=11 // pred_check_branch
          %440 = sbr.rel (%p438) target = $region48
        $region47: #{tpu_custom_call.1} parent=11 // pred_region
          %p441 = scmp.lt.s32.totalorder %s34, 0
          %s442 = scalar_select %p441, %s34, 0
          %s443 = scalar_lea.vmem %s12, %s442
        $region48: #{tpu_custom_call.1} parent=11 // pred_fallthru
          _
      $region12: #{tpu_custom_call.1} parent=5 // pred_fallthru
        _
      %p444 = scmp.lt.s32.totalorder %s24, 2
      // Predicated region
      $region49: #{tpu_custom_call.1} parent=5 // pred_check
        %p445 = pneg %p444
      $region50: #{tpu_custom_call.1} parent=5 // pred_check_branch
        %447 = sbr.rel (%p445) target = $region52
      $region51: #{tpu_custom_call.1} parent=5 // pred_region
        // Predicated region
        $region53: #{tpu_custom_call.1} parent=51 // pred_check
          %p448 = pneg %p56
        $region54: #{tpu_custom_call.1} parent=51 // pred_check_branch
          %450 = sbr.rel (%p448) target = $region56
        $region55: #{tpu_custom_call.1} parent=51 // pred_region
          %s451 = smul.u32 16, %s31
          %p452 = scmp.lt.s32.totalorder %s451, 31
          %s453 = scalar_select %p452, %s451, 31
          %s454 = smul.addr %s453, 4
          %s455 = scalar_lea.vmem %s0, %s454
          %s456 = smul.u32 16, %s31
        $region56: #{tpu_custom_call.1} parent=51 // pred_fallthru
          _
        // Predicated region
        $region57: #{tpu_custom_call.1} parent=51 // pred_check
          %p457 = pneg %p82
        $region58: #{tpu_custom_call.1} parent=51 // pred_check_branch
          %459 = sbr.rel (%p457) target = $region60
        $region59: #{tpu_custom_call.1} parent=51 // pred_region
          %p460 = scmp.lt.s32.totalorder %s31, 1
          %s461 = scalar_select %p460, %s31, 1
          %s462 = smul.addr %s461, 4
          %s463 = scalar_lea.vmem %s1, %s462
        $region60: #{tpu_custom_call.1} parent=51 // pred_fallthru
          _
        // Predicated region
        $region61: #{tpu_custom_call.1} parent=51 // pred_check
          %p464 = pneg %p108
        $region62: #{tpu_custom_call.1} parent=51 // pred_check_branch
          %466 = sbr.rel (%p464) target = $region64
        $region63: #{tpu_custom_call.1} parent=51 // pred_region
          %p467 = scmp.lt.s32.totalorder %s31, 1
          %s468 = scalar_select %p467, %s31, 1
          %s469 = smul.addr %s468, 8
          %s470 = scalar_lea.vmem %s2, %s469
        $region64: #{tpu_custom_call.1} parent=51 // pred_fallthru
          _
        // Predicated region
        $region65: #{tpu_custom_call.1} parent=51 // pred_check
          %p471 = pneg %p136
        $region66: #{tpu_custom_call.1} parent=51 // pred_check_branch
          %473 = sbr.rel (%p471) target = $region68
        $region67: #{tpu_custom_call.1} parent=51 // pred_region
          %p474 = scmp.lt.s32.totalorder %s31, 1
          %s475 = scalar_select %p474, %s31, 1
          %p476 = scmp.lt.s32.totalorder %s32, 0
          %s477 = scalar_select %p476, %s32, 0
          %s478 = sadd.s32 %s477, %s475
          %s479 = smul.addr %s478, 8
          %s480 = scalar_lea.vmem %s3, %s479
        $region68: #{tpu_custom_call.1} parent=51 // pred_fallthru
          _
      $region52: #{tpu_custom_call.1} parent=5 // pred_fallthru
        _
      %p481 = scmp.le.s32.totalorder 1, %s24
      %p482 = scmp.lt.s32.totalorder %s24, 3
      %p483 = pnand %p481, %p482
      %p484 = pneg %p483
      // Predicated region
      $region69: #{tpu_custom_call.1} parent=5 // pred_check
        _
      $region70: #{tpu_custom_call.1} parent=5 // pred_check_branch
        %486 = sbr.rel (%p483) target = $region72
      $region71: #{tpu_custom_call.1} parent=5 // pred_region
        %s487 = ssub.s32 %s24, 1
        %s488 = smul.u32 16, %s33
        %p489 = scmp.lt.s32.totalorder %s488, 31
        %s490 = scalar_select %p489, %s488, 31
        %s491 = smul.addr %s490, 4
        %s492 = scalar_lea.vmem %s0, %s491
        %p493 = pneg %p62
        %p494 = pneg %p59
        %p495 = scmp.lt.s32.totalorder %s33, 1
        %s496 = scalar_select %p495, %s33, 1
        %s497 = smul.addr %s496, 4
        %s498 = scalar_lea.vmem %s1, %s497
        %p499 = pneg %p88
        %p500 = pneg %p85
        %p501 = scmp.lt.s32.totalorder %s33, 1
        %s502 = scalar_select %p501, %s33, 1
        %s503 = smul.addr %s502, 8
        %s504 = scalar_lea.vmem %s2, %s503
        %p505 = pneg %p114
        %p506 = pneg %p111
        %p507 = scmp.lt.s32.totalorder %s33, 1
        %s508 = scalar_select %p507, %s33, 1
        %p509 = scmp.lt.s32.totalorder %s34, 0
        %s510 = scalar_select %p509, %s34, 0
        %s511 = sadd.s32 %s510, %s508
        %s512 = smul.addr %s511, 8
        %s513 = scalar_lea.vmem %s3, %s512
        %p514 = pneg %p142
        %p515 = pneg %p139
        %p516 = pneg %p163
        %p517 = pneg %p160
        %p518 = pneg %p184
        %p519 = pneg %p181
        %p520 = pneg %p205
        %p521 = pneg %p202
        %p522 = pneg %p226
        %p523 = pneg %p223
        %p524 = pneg %p247
        %p525 = pneg %p244
        %p526 = pneg %p268
        %p527 = pneg %p265
        %p528 = pneg %p289
        %p529 = pneg %p286
        %p530 = scmp.lt.s32.totalorder %s34, 0
        %s531 = scalar_select %p530, %s34, 0
        %s532 = smul.addr %s531, 4
        %s533 = scalar_lea.vmem %s11, %s532
        %p534 = pneg %p315
        %p535 = pneg %p312
        %p536 = scmp.lt.s32.totalorder %s34, 0
        %s537 = scalar_select %p536, %s34, 0
        %s538 = scalar_lea.vmem %s12, %s537
        %p539 = pneg %p341
        %p540 = pneg %p338
        %p541 = pneg %p367
        %p542 = pneg %p364
        %s543 = sand.u32 %s354, 1
        %s544 = scalar_lea.sflag [#allocation4], %s543
        %s545 = sand.u32 %s354, 1
        %s546 = smul.addr %s545, 8
        %s547 = scalar_lea.vmem [#allocation3], %s546
        %p548 = pneg %p395
        %p549 = pneg %p392
        %p550 = scmp.lt.s32.totalorder %s33, 1
        %s551 = scalar_select %p550, %s33, 1
        %p552 = scmp.lt.s32.totalorder %s34, 0
        %s553 = scalar_select %p552, %s34, 0
        %s554 = sadd.s32 %s553, %s551
        %s555 = smul.addr %s554, 8
        %s556 = scalar_lea.vmem %s14, %s555
        %s557 = smul.u32 16, %s33
        %p558 = scmp.lt.s32.totalorder %s557, 31
        %s559 = scalar_select %p558, %s557, 31
        %s560 = smul.addr %s559, 4
        %s561 = scalar_lea.vmem %s0, %s560
        %s562 = smul.u32 16, %s33
        %p563 = scmp.lt.s32.totalorder %s33, 1
        %s564 = scalar_select %p563, %s33, 1
        %s565 = smul.addr %s564, 4
        %s566 = scalar_lea.vmem %s1, %s565
        %p567 = scmp.lt.s32.totalorder %s33, 1
        %s568 = scalar_select %p567, %s33, 1
        %s569 = smul.addr %s568, 8
        %s570 = scalar_lea.vmem %s2, %s569
        %p571 = scmp.lt.s32.totalorder %s33, 1
        %s572 = scalar_select %p571, %s33, 1
        %p573 = scmp.lt.s32.totalorder %s34, 0
        %s574 = scalar_select %p573, %s34, 0
        %s575 = sadd.s32 %s574, %s572
        %s576 = smul.addr %s575, 8
        %s577 = scalar_lea.vmem %s3, %s576
        %p578 = scmp.lt.s32.totalorder %s34, 0
        %s579 = scalar_select %p578, %s34, 0
        %s580 = smul.addr %s579, 4
        %s581 = scalar_lea.vmem %s11, %s580
        %p582 = scmp.lt.s32.totalorder %s34, 0
        %s583 = scalar_select %p582, %s34, 0
        %s584 = scalar_lea.vmem %s12, %s583
        %p585 = scmp.lt.s32.totalorder %s33, 1
        %s586 = scalar_select %p585, %s33, 1
        %p587 = scmp.lt.s32.totalorder %s34, 0
        %s588 = scalar_select %p587, %s34, 0
        %s589 = sadd.s32 %s588, %s586
        %s590 = smul.addr %s589, 8
        %s591 = scalar_lea.vmem %s14, %s590
        %p593 = scmp.eq.s32.totalorder %s34, 0
        // Predicated region
        $region73: #{tpu_custom_call.1} parent=71 // pred_check
          %p594 = pneg %p593
        $region74: #{tpu_custom_call.1} parent=71 // pred_check_branch
          %596 = sbr.rel (%p594) target = $region76
        $region75: #{tpu_custom_call.1} parent=71 // pred_region
          %v597 = vld [vmem:[%s561] sm:$0xf]
          %v598 = vld [vmem:[%s561 + $0x4] sm:$0xf]
          %v599 = vld [vmem:[%s561 + $0x8] sm:$0xf]
          %v600 = vld [vmem:[%s561 + $0xc] sm:$0xf]
          %v601 = vld [vmem:[%s561 + $0x10] sm:$0xf]
          %v602 = vld [vmem:[%s561 + $0x14] sm:$0xf]
          %v603 = vld [vmem:[%s561 + $0x18] sm:$0xf]
          %v604 = vld [vmem:[%s561 + $0x1c] sm:$0xf]
          %v605 = vld [vmem:[%s561 + $0x20] sm:$0xf]
          %v606 = vld [vmem:[%s561 + $0x24] sm:$0xf]
          %v607 = vld [vmem:[%s561 + $0x28] sm:$0xf]
          %v608 = vld [vmem:[%s561 + $0x2c] sm:$0xf]
          %v609 = vld [vmem:[%s561 + $0x30] sm:$0xf]
          %v610 = vld [vmem:[%s561 + $0x34] sm:$0xf]
          %v611 = vld [vmem:[%s561 + $0x38] sm:$0xf]
          %v612 = vld [vmem:[%s561 + $0x3c] sm:$0xf]
          %v613 = vld [vmem:[%s566] sm:$0xf]
          %v614 = vld [vmem:[%s570] sm:$0xff]
          %v615 = vld [vmem:[%s4] sm:$0xf]
          %v616 = vld [vmem:[%s4 + $0x4] sm:$0xf]
          %v617 = vld [vmem:[%s4 + $0x8] sm:$0xf]
          %v618 = vld [vmem:[%s4 + $0xc] sm:$0xf]
          %v635 = vunpack.c.l.b16 %v597
          %v636 = vunpack.c.l.b16 %v598
          %v637 = vunpack.c.l.b16 %v599
          %v638 = vunpack.c.l.b16 %v600
          %v639 = vunpack.c.l.b16 %v601
          %v640 = vunpack.c.l.b16 %v602
          %v641 = vunpack.c.l.b16 %v603
          %v642 = vunpack.c.l.b16 %v604
          %v643 = vunpack.c.l.b16 %v605
          %v644 = vunpack.c.l.b16 %v606
          %v645 = vunpack.c.l.b16 %v607
          %v646 = vunpack.c.l.b16 %v608
          %v647 = vunpack.c.l.b16 %v609
          %v648 = vunpack.c.l.b16 %v610
          %v649 = vunpack.c.l.b16 %v611
          %v650 = vunpack.c.l.b16 %v612
          %v651 = vpack.c.b16 %v636, %v635
          %v652 = vpack.c.b16 %v638, %v637
          %v653 = vpack.c.b16 %v640, %v639
          %v654 = vpack.c.b16 %v642, %v641
          %v655 = vpack.c.b16 %v644, %v643
          %v656 = vpack.c.b16 %v646, %v645
          %v657 = vpack.c.b16 %v648, %v647
          %v658 = vpack.c.b16 %v650, %v649
          %v663 = vunpack.c.l.b16 %v615
          %v664 = vunpack.c.l.b16 %v616
          %v665 = vunpack.c.l.b16 %v617
          %v666 = vunpack.c.l.b16 %v618
          %v667 = vpack.c.b16 %v664, %v663
          %v668 = vpack.c.b16 %v666, %v665
          %vm671 = vcmask 261120
          %v673 = vsel %vm671, %v651, 0
          %v676 = vsel %vm671, %v652, 0
          %v679 = vsel %vm671, %v653, 0
          %v682 = vsel %vm671, %v654, 0
          %v685 = vsel %vm671, %v655, 0
          %v688 = vsel %vm671, %v656, 0
          %v691 = vsel %vm671, %v657, 0
          %v694 = vsel %vm671, %v658, 0
          %696 = vmatprep.subr.bf16.mxu0 0
          %697 = vmatpush1.bf16.msra.mxu0 0
          %698 = vmatprep.subr.bf16.mxu0 0
          %699 = vmatpush1.bf16.msra.mxu0 0
          %700 = vmatprep.subr.bf16.mxu0 0
          %701 = vmatpush1.bf16.msra.mxu0 0
          %702 = vmatprep.subr.bf16.mxu0 0
          %703 = vmatpush1.bf16.msra.mxu0 0
          %704 = vmatprep.subr.bf16.mxu0 0
          %705 = vmatpush1.bf16.msra.mxu0 0
          %706 = vmatprep.subr.bf16.mxu0 0
          %707 = vmatpush1.bf16.msra.mxu0 0
          %708 = vmatprep.subr.bf16.mxu0 0
          %709 = vmatpush1.bf16.msra.mxu0 %v668
          %710 = vmatprep.subr.bf16.mxu0 0
          %711 = vmatpush1.bf16.msra.mxu0 %v667
          %712 = vmatprep.subr.bf16.mxu0 0
          %713 = vmatpush2.bf16.msra.mxu0 0
          %714 = vmatprep.subr.bf16.mxu0 0
          %715 = vmatpush2.bf16.msra.mxu0 0
          %716 = vmatprep.subr.bf16.mxu0 0
          %717 = vmatpush2.bf16.msra.mxu0 0
          %718 = vmatprep.subr.bf16.mxu0 0
          %719 = vmatpush2.bf16.msra.mxu0 0
          %720 = vmatprep.subr.bf16.mxu0 0
          %721 = vmatpush2.bf16.msra.mxu0 0
          %722 = vmatprep.subr.bf16.mxu0 0
          %723 = vmatpush2.bf16.msra.mxu0 0
          %724 = vmatprep.subr.bf16.mxu0 0
          %725 = vmatpush2.bf16.msra.mxu0 0
          %726 = vmatprep.subr.bf16.mxu0 0
          %727 = vmatpush2.bf16.msra.mxu0 0
          %728 = vmatprep.mubr.bf16.mxu0 0
          %729 = vmatmul.mubr.bf16.gmra.mxu0 %v673
          %v730 = vpop.f32.mrf.mxu0
          %v731 = vadd.f32 0.0, %v730
          %v732 = vpop.f32.mrf.mxu0
          %v733 = vpop.f32.mrf.mxu0
          %v734 = vadd.f32 0.0, %v733
          %v735 = vpop.f32.mrf.mxu0
          %736 = vmatprep.mubr.bf16.mxu0 0
          %737 = vmatmul.mubr.bf16.gmra.mxu0 %v676
          %v738 = vpop.f32.mrf.mxu0
          %v739 = vadd.f32 0.0, %v738
          %v740 = vpop.f32.mrf.mxu0
          %v741 = vpop.f32.mrf.mxu0
          %v742 = vadd.f32 0.0, %v741
          %v743 = vpop.f32.mrf.mxu0
          %744 = vmatprep.mubr.bf16.mxu0 0
          %745 = vmatmul.mubr.bf16.gmra.mxu0 %v679
          %v746 = vpop.f32.mrf.mxu0
          %v747 = vadd.f32 0.0, %v746
          %v748 = vpop.f32.mrf.mxu0
          %v749 = vpop.f32.mrf.mxu0
          %v750 = vadd.f32 0.0, %v749
          %v751 = vpop.f32.mrf.mxu0
          %752 = vmatprep.mubr.bf16.mxu0 0
          %753 = vmatmul.mubr.bf16.gmra.mxu0 %v682
          %v754 = vpop.f32.mrf.mxu0
          %v755 = vadd.f32 0.0, %v754
          %v756 = vpop.f32.mrf.mxu0
          %v757 = vpop.f32.mrf.mxu0
          %v758 = vadd.f32 0.0, %v757
          %v759 = vpop.f32.mrf.mxu0
          %760 = vmatprep.mubr.bf16.mxu0 0
          %761 = vmatmul.mubr.bf16.gmra.mxu0 %v685
          %v762 = vpop.f32.mrf.mxu0
          %v763 = vadd.f32 0.0, %v762
          %v764 = vpop.f32.mrf.mxu0
          %v765 = vpop.f32.mrf.mxu0
          %v766 = vadd.f32 0.0, %v765
          %v767 = vpop.f32.mrf.mxu0
          %768 = vmatprep.mubr.bf16.mxu0 0
          %769 = vmatmul.mubr.bf16.gmra.mxu0 %v688
          %v770 = vpop.f32.mrf.mxu0
          %v771 = vadd.f32 0.0, %v770
          %v772 = vpop.f32.mrf.mxu0
          %v773 = vpop.f32.mrf.mxu0
          %v774 = vadd.f32 0.0, %v773
          %v775 = vpop.f32.mrf.mxu0
          %776 = vmatprep.mubr.bf16.mxu0 0
          %777 = vmatmul.mubr.bf16.gmra.mxu0 %v691
          %v778 = vpop.f32.mrf.mxu0
          %v779 = vadd.f32 0.0, %v778
          %v780 = vpop.f32.mrf.mxu0
          %v781 = vpop.f32.mrf.mxu0
          %v782 = vadd.f32 0.0, %v781
          %v783 = vpop.f32.mrf.mxu0
          %784 = vmatprep.mubr.bf16.mxu0 0
          %785 = vmatmul.mubr.bf16.gmra.mxu0 %v694
          %v786 = vpop.f32.mrf.mxu0
          %v787 = vadd.f32 0.0, %v786
          %v788 = vpop.f32.mrf.mxu0
          %v789 = vpop.f32.mrf.mxu0
          %v790 = vadd.f32 0.0, %v789
          %v791 = vpop.f32.mrf.mxu0
          %792 = vdwg.mxu0
          %v793 = vld [vmem:[%s5] sm:$0xf]
          %v794 = vld [vmem:[%s5 + $0x4] sm:$0xf]
          %v795 = vld [vmem:[%s5 + $0x8] sm:$0xf]
          %v796 = vld [vmem:[%s5 + $0xc] sm:$0xf]
          %v801 = vunpack.c.l.b16 %v793
          %v802 = vunpack.c.l.b16 %v794
          %v803 = vunpack.c.l.b16 %v795
          %v804 = vunpack.c.l.b16 %v796
          %v805 = vpack.c.b16 %v802, %v801
          %v806 = vpack.c.b16 %v804, %v803
          %v810 = vsel %vm671, %v613, 0
          %812 = vmatprep.subr.bf16.mxu0 0
          %813 = vmatpush1.bf16.msra.mxu0 0
          %814 = vmatprep.subr.bf16.mxu0 0
          %815 = vmatpush1.bf16.msra.mxu0 0
          %816 = vmatprep.subr.bf16.mxu0 0
          %817 = vmatpush1.bf16.msra.mxu0 0
          %818 = vmatprep.subr.bf16.mxu0 0
          %819 = vmatpush1.bf16.msra.mxu0 0
          %820 = vmatprep.subr.bf16.mxu0 0
          %821 = vmatpush1.bf16.msra.mxu0 0
          %822 = vmatprep.subr.bf16.mxu0 0
          %823 = vmatpush1.bf16.msra.mxu0 0
          %824 = vmatprep.subr.bf16.mxu0 0
          %825 = vmatpush1.bf16.msra.mxu0 %v806
          %826 = vmatprep.subr.bf16.mxu0 0
          %827 = vmatpush1.bf16.msra.mxu0 %v805
          %828 = vmatprep.subr.bf16.mxu0 0
          %829 = vmatpush2.bf16.msra.mxu0 0
          %830 = vmatprep.subr.bf16.mxu0 0
          %831 = vmatpush2.bf16.msra.mxu0 0
          %832 = vmatprep.subr.bf16.mxu0 0
          %833 = vmatpush2.bf16.msra.mxu0 0
          %834 = vmatprep.subr.bf16.mxu0 0
          %835 = vmatpush2.bf16.msra.mxu0 0
          %836 = vmatprep.subr.bf16.mxu0 0
          %837 = vmatpush2.bf16.msra.mxu0 0
          %838 = vmatprep.subr.bf16.mxu0 0
          %839 = vmatpush2.bf16.msra.mxu0 0
          %840 = vmatprep.subr.bf16.mxu0 0
          %841 = vmatpush2.bf16.msra.mxu0 0
          %842 = vmatprep.subr.bf16.mxu0 0
          %843 = vmatpush2.bf16.msra.mxu0 0
          %844 = vmatprep.mubr.bf16.mxu0 0
          %845 = vmatmul.mubr.bf16.gmra.mxu0 %v810
          %v846 = vpop.f32.mrf.mxu0
          %v847 = vadd.f32 0.0, %v846
          %v848 = vpop.f32.mrf.mxu0
          %v849 = vpop.f32.mrf.mxu0
          %v850 = vpop.f32.mrf.mxu0
          %851 = vdwg.mxu0
          %v853 = vcombine.high %v847, %v847
          %v855 = vunpack.c.l.s4 1966171168
          %v856 = vunpack.c.0.s8 %v855
          %v857 = vlaneseq
          %v858 = vshrl.u32 %v857, 7
          %v859 = vsub.s32 %v856, %v858
          %v860 = vrot.slane %v847, %v859
          %v862 = vunpack.c.l.s4 1966171168
          %v863 = vunpack.c.0.s8 %v862
          %v864 = vlaneseq
          %v865 = vshrl.u32 %v864, 7
          %v866 = vsub.s32 %v863, %v865
          %v867 = vrot.slane %v853, %v866
          %v868 = vcombine.high %v860, %v860
          %v869 = vcombine.high %v867, %v867
          %v871 = vunpack.c.l.s4 1966171168
          %v872 = vunpack.c.0.s8 %v871
          %v873 = vlaneseq
          %v874 = vshrl.u32 %v873, 7
          %v875 = vsub.s32 %v872, %v874
          %v876 = vrot.slane %v860, %v875
          %v878 = vunpack.c.l.s4 1966171168
          %v879 = vunpack.c.0.s8 %v878
          %v880 = vlaneseq
          %v881 = vshrl.u32 %v880, 7
          %v882 = vsub.s32 %v879, %v881
          %v883 = vrot.slane %v867, %v882
          %v885 = vunpack.c.l.s4 1966171168
          %v886 = vunpack.c.0.s8 %v885
          %v887 = vlaneseq
          %v888 = vshrl.u32 %v887, 7
          %v889 = vsub.s32 %v886, %v888
          %v890 = vrot.slane %v868, %v889
          %v892 = vunpack.c.l.s4 1966171168
          %v893 = vunpack.c.0.s8 %v892
          %v894 = vlaneseq
          %v895 = vshrl.u32 %v894, 7
          %v896 = vsub.s32 %v893, %v895
          %v897 = vrot.slane %v869, %v896
          %v898 = vcombine.high %v876, %v876
          %v899 = vcombine.high %v883, %v883
          %v900 = vcombine.high %v890, %v890
          %v901 = vcombine.high %v897, %v897
          %v902 = vlaneseq
          %v903 = vshrl.u32 %v902, 7
          %v904 = vsub.s32 0, %v903
          %v905 = vrot.slane %v876, %v904
          %v906 = vlaneseq
          %v907 = vshrl.u32 %v906, 7
          %v908 = vsub.s32 0, %v907
          %v909 = vrot.slane %v890, %v908
          %v910 = vlaneseq
          %v911 = vshrl.u32 %v910, 7
          %v912 = vsub.s32 0, %v911
          %v913 = vrot.slane %v898, %v912
          %v914 = vlaneseq
          %v915 = vshrl.u32 %v914, 7
          %v916 = vsub.s32 0, %v915
          %v917 = vrot.slane %v900, %v916
          %v918 = vlaneseq
          %v919 = vshrl.u32 %v918, 7
          %v920 = vsub.s32 0, %v919
          %v921 = vrot.slane %v883, %v920
          %v922 = vlaneseq
          %v923 = vshrl.u32 %v922, 7
          %v924 = vsub.s32 0, %v923
          %v925 = vrot.slane %v897, %v924
          %v926 = vlaneseq
          %v927 = vshrl.u32 %v926, 7
          %v928 = vsub.s32 0, %v927
          %v929 = vrot.slane %v899, %v928
          %v930 = vlaneseq
          %v931 = vshrl.u32 %v930, 7
          %v932 = vsub.s32 0, %v931
          %v933 = vrot.slane %v901, %v932
          %v942 = vadd.f32 %v731, %v905
          %v943 = vadd.f32 %v734, %v905
          %v944 = vadd.f32 %v739, %v909
          %v945 = vadd.f32 %v742, %v909
          %v946 = vadd.f32 %v747, %v913
          %v947 = vadd.f32 %v750, %v913
          %v948 = vadd.f32 %v755, %v917
          %v949 = vadd.f32 %v758, %v917
          %v950 = vadd.f32 %v763, %v921
          %v951 = vadd.f32 %v766, %v921
          %v952 = vadd.f32 %v771, %v925
          %v953 = vadd.f32 %v774, %v925
          %v954 = vadd.f32 %v779, %v929
          %v955 = vadd.f32 %v782, %v929
          %v956 = vadd.f32 %v787, %v933
          %v957 = vadd.f32 %v790, %v933
          %v958 = vld [vmem:[%s6] sm:$0x1]
          %v960 = vlaneseq
          %v961 = vshrl.u32 %v960, 7
          %v962 = vsub.s32 0, %v961
          %v963 = vrot.slane %v958, %v962
          %v965 = vadd.f32 %v942, %v963
          %v966 = vadd.f32 %v943, %v963
          %v967 = vadd.f32 %v944, %v963
          %v968 = vadd.f32 %v945, %v963
          %v969 = vadd.f32 %v946, %v963
          %v970 = vadd.f32 %v947, %v963
          %v971 = vadd.f32 %v948, %v963
          %v972 = vadd.f32 %v949, %v963
          %v973 = vadd.f32 %v950, %v963
          %v974 = vadd.f32 %v951, %v963
          %v975 = vadd.f32 %v952, %v963
          %v976 = vadd.f32 %v953, %v963
          %v977 = vadd.f32 %v954, %v963
          %v978 = vadd.f32 %v955, %v963
          %v979 = vadd.f32 %v956, %v963
          %v980 = vadd.f32 %v957, %v963
          %v981 = vtanh.pop %v965
          %v982 = vtanh.pop %v966
          %v983 = vtanh.pop %v967
          %v984 = vtanh.pop %v968
          %v985 = vtanh.pop %v969
          %v986 = vtanh.pop %v970
          %v987 = vtanh.pop %v971
          %v988 = vtanh.pop %v972
          %v989 = vtanh.pop %v973
          %v990 = vtanh.pop %v974
          %v991 = vtanh.pop %v975
          %v992 = vtanh.pop %v976
          %v993 = vtanh.pop %v977
          %v994 = vtanh.pop %v978
          %v995 = vtanh.pop %v979
          %v996 = vtanh.pop %v980
          %v997 = vld [vmem:[%s7] sm:$0x1]
          %v999 = vlaneseq
          %v1000 = vshrl.u32 %v999, 7
          %v1001 = vsub.s32 0, %v1000
          %v1002 = vrot.slane %v997, %v1001
          %v1004 = vmul.f32 %v981, %v1002
          %v1005 = vmul.f32 %v982, %v1002
          %v1006 = vmul.f32 %v983, %v1002
          %v1007 = vmul.f32 %v984, %v1002
          %v1008 = vmul.f32 %v985, %v1002
          %v1009 = vmul.f32 %v986, %v1002
          %v1010 = vmul.f32 %v987, %v1002
          %v1011 = vmul.f32 %v988, %v1002
          %v1012 = vmul.f32 %v989, %v1002
          %v1013 = vmul.f32 %v990, %v1002
          %v1014 = vmul.f32 %v991, %v1002
          %v1015 = vmul.f32 %v992, %v1002
          %v1016 = vmul.f32 %v993, %v1002
          %v1017 = vmul.f32 %v994, %v1002
          %v1018 = vmul.f32 %v995, %v1002
          %v1019 = vmul.f32 %v996, %v1002
          %vm1020 = vcmask 130048
          %v1021 = vsel %vm1020, %v1004, 0.0
          %1022 = vadd.xlane.f32.xlu0 %v1021
          %v1023 = vpop.xlane.xlu0 %1022
          %v1024 = vsel %vm1020, %v1005, 0.0
          %1025 = vadd.xlane.f32.xlu0 %v1024
          %v1026 = vpop.xlane.xlu0 %1025
          %v1027 = vsel %vm1020, %v1006, 0.0
          %1028 = vadd.xlane.f32.xlu0 %v1027
          %v1029 = vpop.xlane.xlu0 %1028
          %v1030 = vsel %vm1020, %v1007, 0.0
          %1031 = vadd.xlane.f32.xlu0 %v1030
          %v1032 = vpop.xlane.xlu0 %1031
          %v1033 = vsel %vm1020, %v1008, 0.0
          %1034 = vadd.xlane.f32.xlu0 %v1033
          %v1035 = vpop.xlane.xlu0 %1034
          %v1036 = vsel %vm1020, %v1009, 0.0
          %1037 = vadd.xlane.f32.xlu0 %v1036
          %v1038 = vpop.xlane.xlu0 %1037
          %v1039 = vsel %vm1020, %v1010, 0.0
          %1040 = vadd.xlane.f32.xlu0 %v1039
          %v1041 = vpop.xlane.xlu0 %1040
          %v1042 = vsel %vm1020, %v1011, 0.0
          %1043 = vadd.xlane.f32.xlu0 %v1042
          %v1044 = vpop.xlane.xlu0 %1043
          %v1045 = vsel %vm1020, %v1012, 0.0
          %1046 = vadd.xlane.f32.xlu0 %v1045
          %v1047 = vpop.xlane.xlu0 %1046
          %v1048 = vsel %vm1020, %v1013, 0.0
          %1049 = vadd.xlane.f32.xlu0 %v1048
          %v1050 = vpop.xlane.xlu0 %1049
          %v1051 = vsel %vm1020, %v1014, 0.0
          %1052 = vadd.xlane.f32.xlu0 %v1051
          %v1053 = vpop.xlane.xlu0 %1052
          %v1054 = vsel %vm1020, %v1015, 0.0
          %1055 = vadd.xlane.f32.xlu0 %v1054
          %v1056 = vpop.xlane.xlu0 %1055
          %v1057 = vsel %vm1020, %v1016, 0.0
          %1058 = vadd.xlane.f32.xlu0 %v1057
          %v1059 = vpop.xlane.xlu0 %1058
          %v1060 = vsel %vm1020, %v1017, 0.0
          %1061 = vadd.xlane.f32.xlu0 %v1060
          %v1062 = vpop.xlane.xlu0 %1061
          %v1063 = vsel %vm1020, %v1018, 0.0
          %1064 = vadd.xlane.f32.xlu0 %v1063
          %v1065 = vpop.xlane.xlu0 %1064
          %v1066 = vsel %vm1020, %v1019, 0.0
          %1067 = vadd.xlane.f32.xlu0 %v1066
          %v1068 = vpop.xlane.xlu0 %1067
          %vm1069 = vcmp.gt.f32.partialorder %v614, 0.0
          %v1086 = vlaneseq
          %v1087 = vand.u32 %v1086, 127
          %v1088 = vlaneseq
          %v1089 = vshrl.u32 %v1088, 7
          %v1090 = vsub.s32 %v1087, %v1089
          %v1091 = vrot.slane %v1023, %v1090
          %v1092 = vadd.s32 %v1087, 4294967288
          %v1093 = vlaneseq
          %v1094 = vshrl.u32 %v1093, 7
          %v1095 = vsub.s32 %v1092, %v1094
          %v1096 = vrot.slane %v1026, %v1095
          %vm1097 = vcmask 130112
          %v1098 = vsel %vm1097, %v1096, %v1091
          %v1099 = vlaneseq
          %v1100 = vshrl.u32 %v1099, 7
          %v1101 = vsub.s32 %v1087, %v1100
          %v1102 = vrot.slane %v1029, %v1101
          %v1103 = vlaneseq
          %v1104 = vshrl.u32 %v1103, 7
          %v1105 = vsub.s32 %v1092, %v1104
          %v1106 = vrot.slane %v1032, %v1105
          %v1107 = vsel %vm1097, %v1106, %v1102
          %v1108 = vlaneseq
          %v1109 = vshrl.u32 %v1108, 7
          %v1110 = vsub.s32 %v1087, %v1109
          %v1111 = vrot.slane %v1035, %v1110
          %v1112 = vlaneseq
          %v1113 = vshrl.u32 %v1112, 7
          %v1114 = vsub.s32 %v1092, %v1113
          %v1115 = vrot.slane %v1038, %v1114
          %v1116 = vsel %vm1097, %v1115, %v1111
          %v1117 = vlaneseq
          %v1118 = vshrl.u32 %v1117, 7
          %v1119 = vsub.s32 %v1087, %v1118
          %v1120 = vrot.slane %v1041, %v1119
          %v1121 = vlaneseq
          %v1122 = vshrl.u32 %v1121, 7
          %v1123 = vsub.s32 %v1092, %v1122
          %v1124 = vrot.slane %v1044, %v1123
          %v1125 = vsel %vm1097, %v1124, %v1120
          %v1126 = vlaneseq
          %v1127 = vshrl.u32 %v1126, 7
          %v1128 = vsub.s32 %v1087, %v1127
          %v1129 = vrot.slane %v1047, %v1128
          %v1130 = vlaneseq
          %v1131 = vshrl.u32 %v1130, 7
          %v1132 = vsub.s32 %v1092, %v1131
          %v1133 = vrot.slane %v1050, %v1132
          %v1134 = vsel %vm1097, %v1133, %v1129
          %v1135 = vlaneseq
          %v1136 = vshrl.u32 %v1135, 7
          %v1137 = vsub.s32 %v1087, %v1136
          %v1138 = vrot.slane %v1053, %v1137
          %v1139 = vlaneseq
          %v1140 = vshrl.u32 %v1139, 7
          %v1141 = vsub.s32 %v1092, %v1140
          %v1142 = vrot.slane %v1056, %v1141
          %v1143 = vsel %vm1097, %v1142, %v1138
          %v1144 = vlaneseq
          %v1145 = vshrl.u32 %v1144, 7
          %v1146 = vsub.s32 %v1087, %v1145
          %v1147 = vrot.slane %v1059, %v1146
          %v1148 = vlaneseq
          %v1149 = vshrl.u32 %v1148, 7
          %v1150 = vsub.s32 %v1092, %v1149
          %v1151 = vrot.slane %v1062, %v1150
          %v1152 = vsel %vm1097, %v1151, %v1147
          %v1153 = vlaneseq
          %v1154 = vshrl.u32 %v1153, 7
          %v1155 = vsub.s32 %v1087, %v1154
          %v1156 = vrot.slane %v1065, %v1155
          %v1157 = vlaneseq
          %v1158 = vshrl.u32 %v1157, 7
          %v1159 = vsub.s32 %v1092, %v1158
          %v1160 = vrot.slane %v1068, %v1159
          %v1161 = vsel %vm1097, %v1160, %v1156
          %vm1162 = vcmask 1041409
          %v1163 = vsel %vm1162, %v1107, %v1098
          %vm1164 = vcmask 1042434
          %v1165 = vsel %vm1164, %v1116, %v1163
          %vm1166 = vcmask 1043459
          %v1167 = vsel %vm1166, %v1125, %v1165
          %vm1168 = vcmask 1044484
          %v1169 = vsel %vm1168, %v1134, %v1167
          %vm1170 = vcmask 1045509
          %v1171 = vsel %vm1170, %v1143, %v1169
          %vm1172 = vcmask 1046534
          %v1173 = vsel %vm1172, %v1152, %v1171
          %vm1174 = vcmask 1047559
          %v1175 = vsel %vm1174, %v1161, %v1173
          %v1177 = vsel %vm1069, -inf, %v1175
          %v1178 = vsel %vm1020, %v1177, -inf
          %1179 = vmax.xlane.f32.xlu0 %v1178
          %v1180 = vpop.xlane.xlu0 %1179
          %v1181 = vsub.f32 %v1177, %v1180
          %v1182 = vmul.f32 %v1181, 1.442695
          %v1183 = vpow.pop %v1182
          %v1184 = vsel %vm1020, %v1183, 0.0
          %1185 = vadd.xlane.f32.xlu0 %v1184
          %v1186 = vpop.xlane.xlu0 %1185
          %v1187 = vrcp.pop %v1186
          %v1188 = vmul.f32 %v1183, %v1187
          %1189 = vst.msk [vmem:[%s547] sm:$0xff] %vm1020, %v1188
          %v1190 = vlaneseq
          %v1191 = vshrl.u32 %v1190, 7
          %v1192 = vsub.s32 0, %v1191
          %v1193 = vrot.slane %v1188, %v1192
          %1195 = vbcast.lane.b32.xlu0 %v1193, 256
          %v1196 = vpop.permute.xlu0 %1195
          %s1198 = sor.u32 256, 8
          %1199 = vbcast.lane.b32.xlu0 %v1193, %s1198
          %v1200 = vpop.permute.xlu0 %1199
          %v1201 = vlaneseq
          %v1202 = vshrl.u32 %v1201, 7
          %v1203 = vsub.s32 1, %v1202
          %v1204 = vrot.slane %v1188, %v1203
          %1206 = vbcast.lane.b32.xlu0 %v1204, 256
          %v1207 = vpop.permute.xlu0 %1206
          %s1209 = sor.u32 256, 8
          %1210 = vbcast.lane.b32.xlu0 %v1204, %s1209
          %v1211 = vpop.permute.xlu0 %1210
          %v1212 = vlaneseq
          %v1213 = vshrl.u32 %v1212, 7
          %v1214 = vsub.s32 2, %v1213
          %v1215 = vrot.slane %v1188, %v1214
          %1217 = vbcast.lane.b32.xlu0 %v1215, 256
          %v1218 = vpop.permute.xlu0 %1217
          %s1220 = sor.u32 256, 8
          %1221 = vbcast.lane.b32.xlu0 %v1215, %s1220
          %v1222 = vpop.permute.xlu0 %1221
          %v1223 = vlaneseq
          %v1224 = vshrl.u32 %v1223, 7
          %v1225 = vsub.s32 3, %v1224
          %v1226 = vrot.slane %v1188, %v1225
          %1228 = vbcast.lane.b32.xlu0 %v1226, 256
          %v1229 = vpop.permute.xlu0 %1228
          %s1231 = sor.u32 256, 8
          %1232 = vbcast.lane.b32.xlu0 %v1226, %s1231
          %v1233 = vpop.permute.xlu0 %1232
          %v1234 = vlaneseq
          %v1235 = vshrl.u32 %v1234, 7
          %v1236 = vsub.s32 4, %v1235
          %v1237 = vrot.slane %v1188, %v1236
          %1239 = vbcast.lane.b32.xlu0 %v1237, 256
          %v1240 = vpop.permute.xlu0 %1239
          %s1242 = sor.u32 256, 8
          %1243 = vbcast.lane.b32.xlu0 %v1237, %s1242
          %v1244 = vpop.permute.xlu0 %1243
          %v1245 = vlaneseq
          %v1246 = vshrl.u32 %v1245, 7
          %v1247 = vsub.s32 5, %v1246
          %v1248 = vrot.slane %v1188, %v1247
          %1250 = vbcast.lane.b32.xlu0 %v1248, 256
          %v1251 = vpop.permute.xlu0 %1250
          %s1253 = sor.u32 256, 8
          %1254 = vbcast.lane.b32.xlu0 %v1248, %s1253
          %v1255 = vpop.permute.xlu0 %1254
          %v1256 = vlaneseq
          %v1257 = vshrl.u32 %v1256, 7
          %v1258 = vsub.s32 6, %v1257
          %v1259 = vrot.slane %v1188, %v1258
          %1261 = vbcast.lane.b32.xlu0 %v1259, 256
          %v1262 = vpop.permute.xlu0 %1261
          %s1264 = sor.u32 256, 8
          %1265 = vbcast.lane.b32.xlu0 %v1259, %s1264
          %v1266 = vpop.permute.xlu0 %1265
          %v1267 = vlaneseq
          %v1268 = vshrl.u32 %v1267, 7
          %v1269 = vsub.s32 7, %v1268
          %v1270 = vrot.slane %v1188, %v1269
          %1272 = vbcast.lane.b32.xlu0 %v1270, 256
          %v1273 = vpop.permute.xlu0 %1272
          %s1275 = sor.u32 256, 8
          %1276 = vbcast.lane.b32.xlu0 %v1270, %s1275
          %v1277 = vpop.permute.xlu0 %1276
          %v1278 = vunpack.c.l.bf16 %v597
          %v1279 = vunpack.c.l.bf16 %v598
          %v1280 = vunpack.c.l.bf16 %v599
          %v1281 = vunpack.c.l.bf16 %v600
          %v1282 = vunpack.c.l.bf16 %v601
          %v1283 = vunpack.c.l.bf16 %v602
          %v1284 = vunpack.c.l.bf16 %v603
          %v1285 = vunpack.c.l.bf16 %v604
          %v1286 = vunpack.c.l.bf16 %v605
          %v1287 = vunpack.c.l.bf16 %v606
          %v1288 = vunpack.c.l.bf16 %v607
          %v1289 = vunpack.c.l.bf16 %v608
          %v1290 = vunpack.c.l.bf16 %v609
          %v1291 = vunpack.c.l.bf16 %v610
          %v1292 = vunpack.c.l.bf16 %v611
          %v1293 = vunpack.c.l.bf16 %v612
          %v1294 = vmul.f32 %v1196, %v1278
          %v1295 = vmul.f32 %v1200, %v1279
          %v1296 = vmul.f32 %v1207, %v1280
          %v1297 = vmul.f32 %v1211, %v1281
          %v1298 = vmul.f32 %v1218, %v1282
          %v1299 = vmul.f32 %v1222, %v1283
          %v1300 = vmul.f32 %v1229, %v1284
          %v1301 = vmul.f32 %v1233, %v1285
          %v1302 = vmul.f32 %v1240, %v1286
          %v1303 = vmul.f32 %v1244, %v1287
          %v1304 = vmul.f32 %v1251, %v1288
          %v1305 = vmul.f32 %v1255, %v1289
          %v1306 = vmul.f32 %v1262, %v1290
          %v1307 = vmul.f32 %v1266, %v1291
          %v1308 = vmul.f32 %v1273, %v1292
          %v1309 = vmul.f32 %v1277, %v1293
          %v1310 = vsel %vm671, %v1294, 0.0
          %v1311 = vsel %vm671, %v1295, 0.0
          %v1312 = vadd.f32 %v1310, %v1311
          %v1313 = vrot.slane %v1312, 4
          %v1314 = vadd.f32 %v1312, %v1313
          %v1315 = vrot.slane %v1314, 2
          %v1316 = vadd.f32 %v1314, %v1315
          %v1317 = vrot.slane %v1316, 1
          %v1318 = vadd.f32 %v1316, %v1317
          %v1319 = vsel %vm671, %v1296, 0.0
          %v1320 = vsel %vm671, %v1297, 0.0
          %v1321 = vadd.f32 %v1319, %v1320
          %v1322 = vrot.slane %v1321, 4
          %v1323 = vadd.f32 %v1321, %v1322
          %v1324 = vrot.slane %v1323, 2
          %v1325 = vadd.f32 %v1323, %v1324
          %v1326 = vrot.slane %v1325, 1
          %v1327 = vadd.f32 %v1325, %v1326
          %v1328 = vsel %vm671, %v1298, 0.0
          %v1329 = vsel %vm671, %v1299, 0.0
          %v1330 = vadd.f32 %v1328, %v1329
          %v1331 = vrot.slane %v1330, 4
          %v1332 = vadd.f32 %v1330, %v1331
          %v1333 = vrot.slane %v1332, 2
          %v1334 = vadd.f32 %v1332, %v1333
          %v1335 = vrot.slane %v1334, 1
          %v1336 = vadd.f32 %v1334, %v1335
          %v1337 = vsel %vm671, %v1300, 0.0
          %v1338 = vsel %vm671, %v1301, 0.0
          %v1339 = vadd.f32 %v1337, %v1338
          %v1340 = vrot.slane %v1339, 4
          %v1341 = vadd.f32 %v1339, %v1340
          %v1342 = vrot.slane %v1341, 2
          %v1343 = vadd.f32 %v1341, %v1342
          %v1344 = vrot.slane %v1343, 1
          %v1345 = vadd.f32 %v1343, %v1344
          %v1346 = vsel %vm671, %v1302, 0.0
          %v1347 = vsel %vm671, %v1303, 0.0
          %v1348 = vadd.f32 %v1346, %v1347
          %v1349 = vrot.slane %v1348, 4
          %v1350 = vadd.f32 %v1348, %v1349
          %v1351 = vrot.slane %v1350, 2
          %v1352 = vadd.f32 %v1350, %v1351
          %v1353 = vrot.slane %v1352, 1
          %v1354 = vadd.f32 %v1352, %v1353
          %v1355 = vsel %vm671, %v1304, 0.0
          %v1356 = vsel %vm671, %v1305, 0.0
          %v1357 = vadd.f32 %v1355, %v1356
          %v1358 = vrot.slane %v1357, 4
          %v1359 = vadd.f32 %v1357, %v1358
          %v1360 = vrot.slane %v1359, 2
          %v1361 = vadd.f32 %v1359, %v1360
          %v1362 = vrot.slane %v1361, 1
          %v1363 = vadd.f32 %v1361, %v1362
          %v1364 = vsel %vm671, %v1306, 0.0
          %v1365 = vsel %vm671, %v1307, 0.0
          %v1366 = vadd.f32 %v1364, %v1365
          %v1367 = vrot.slane %v1366, 4
          %v1368 = vadd.f32 %v1366, %v1367
          %v1369 = vrot.slane %v1368, 2
          %v1370 = vadd.f32 %v1368, %v1369
          %v1371 = vrot.slane %v1370, 1
          %v1372 = vadd.f32 %v1370, %v1371
          %v1373 = vsel %vm671, %v1308, 0.0
          %v1374 = vsel %vm671, %v1309, 0.0
          %v1375 = vadd.f32 %v1373, %v1374
          %v1376 = vrot.slane %v1375, 4
          %v1377 = vadd.f32 %v1375, %v1376
          %v1378 = vrot.slane %v1377, 2
          %v1379 = vadd.f32 %v1377, %v1378
          %v1380 = vrot.slane %v1379, 1
          %v1381 = vadd.f32 %v1379, %v1380
          %v1382 = vpack.c.bf16 %v1318, %v1318
          %v1383 = vpack.c.bf16 %v1327, %v1327
          %v1384 = vpack.c.bf16 %v1336, %v1336
          %v1385 = vpack.c.bf16 %v1345, %v1345
          %v1386 = vpack.c.bf16 %v1354, %v1354
          %v1387 = vpack.c.bf16 %v1363, %v1363
          %v1388 = vpack.c.bf16 %v1372, %v1372
          %v1389 = vpack.c.bf16 %v1381, %v1381
          %v1390 = vld [vmem:[%s8] sm:$0xf]
          %v1391 = vld [vmem:[%s8 + $0x4] sm:$0xf]
          %v1392 = vld [vmem:[%s8 + $0x8] sm:$0xf]
          %v1393 = vld [vmem:[%s8 + $0xc] sm:$0xf]
          %v1394 = vld [vmem:[%s9] sm:$0xf]
          %v1395 = vld [vmem:[%s9 + $0x4] sm:$0xf]
          %v1396 = vld [vmem:[%s9 + $0x8] sm:$0xf]
          %v1397 = vld [vmem:[%s9 + $0xc] sm:$0xf]
          %v1402 = vunpack.c.l.b16 %v1394
          %v1403 = vunpack.c.l.b16 %v1395
          %v1404 = vunpack.c.l.b16 %v1396
          %v1405 = vunpack.c.l.b16 %v1397
          %v1406 = vpack.c.b16 %v1403, %v1402
          %v1407 = vpack.c.b16 %v1405, %v1404
          %1410 = vmatprep.subr.bf16.mxu0 0
          %1411 = vmatpush1.bf16.msra.mxu0 0
          %1412 = vmatprep.subr.bf16.mxu0 0
          %1413 = vmatpush1.bf16.msra.mxu0 0
          %1414 = vmatprep.subr.bf16.mxu0 0
          %1415 = vmatpush1.bf16.msra.mxu0 0
          %1416 = vmatprep.subr.bf16.mxu0 0
          %1417 = vmatpush1.bf16.msra.mxu0 0
          %1418 = vmatprep.subr.bf16.mxu0 0
          %1419 = vmatpush1.bf16.msra.mxu0 0
          %1420 = vmatprep.subr.bf16.mxu0 0
          %1421 = vmatpush1.bf16.msra.mxu0 0
          %1422 = vmatprep.subr.bf16.mxu0 0
          %1423 = vmatpush1.bf16.msra.mxu0 %v1407
          %1424 = vmatprep.subr.bf16.mxu0 0
          %1425 = vmatpush1.bf16.msra.mxu0 %v1406
          %1426 = vmatprep.subr.bf16.mxu0 0
          %1427 = vmatpush2.bf16.msra.mxu0 0
          %1428 = vmatprep.subr.bf16.mxu0 0
          %1429 = vmatpush2.bf16.msra.mxu0 0
          %1430 = vmatprep.subr.bf16.mxu0 0
          %1431 = vmatpush2.bf16.msra.mxu0 0
          %1432 = vmatprep.subr.bf16.mxu0 0
          %1433 = vmatpush2.bf16.msra.mxu0 0
          %1434 = vmatprep.subr.bf16.mxu0 0
          %1435 = vmatpush2.bf16.msra.mxu0 0
          %1436 = vmatprep.subr.bf16.mxu0 0
          %1437 = vmatpush2.bf16.msra.mxu0 0
          %1438 = vmatprep.subr.bf16.mxu0 0
          %1439 = vmatpush2.bf16.msra.mxu0 0
          %1440 = vmatprep.subr.bf16.mxu0 0
          %1441 = vmatpush2.bf16.msra.mxu0 0
          %1442 = vmatprep.mubr.bf16.mxu0 0
          %1443 = vmatmul.mubr.bf16.gmra.mxu0 %v810
          %v1444 = vpop.f32.mrf.mxu0
          %v1445 = vadd.f32 0.0, %v1444
          %v1446 = vpop.f32.mrf.mxu0
          %v1447 = vpop.f32.mrf.mxu0
          %v1448 = vpop.f32.mrf.mxu0
          %1449 = vdwg.mxu0
          %v1458 = vunpack.c.l.b16 %v1382
          %v1459 = vunpack.c.l.b16 %v1383
          %v1460 = vunpack.c.l.b16 %v1384
          %v1461 = vunpack.c.l.b16 %v1385
          %v1462 = vunpack.c.l.b16 %v1386
          %v1463 = vunpack.c.l.b16 %v1387
          %v1464 = vunpack.c.l.b16 %v1388
          %v1465 = vunpack.c.l.b16 %v1389
          %v1466 = vsel %vm1162, %v1459, %v1458
          %v1467 = vsel %vm1164, %v1460, %v1466
          %v1468 = vsel %vm1166, %v1461, %v1467
          %v1469 = vsel %vm1168, %v1462, %v1468
          %v1470 = vsel %vm1170, %v1463, %v1469
          %v1471 = vsel %vm1172, %v1464, %v1470
          %v1472 = vsel %vm1174, %v1465, %v1471
          %v1473 = vpack.c.b16 %v1472, %v1472
          %v1478 = vunpack.c.l.b16 %v1390
          %v1479 = vunpack.c.l.b16 %v1391
          %v1480 = vunpack.c.l.b16 %v1392
          %v1481 = vunpack.c.l.b16 %v1393
          %v1482 = vpack.c.b16 %v1479, %v1478
          %v1483 = vpack.c.b16 %v1481, %v1480
          %v1487 = vsel %vm671, %v1473, 0
          %1489 = vmatprep.subr.bf16.mxu0 0
          %1490 = vmatpush1.bf16.msra.mxu0 0
          %1491 = vmatprep.subr.bf16.mxu0 0
          %1492 = vmatpush1.bf16.msra.mxu0 0
          %1493 = vmatprep.subr.bf16.mxu0 0
          %1494 = vmatpush1.bf16.msra.mxu0 0
          %1495 = vmatprep.subr.bf16.mxu0 0
          %1496 = vmatpush1.bf16.msra.mxu0 0
          %1497 = vmatprep.subr.bf16.mxu0 0
          %1498 = vmatpush1.bf16.msra.mxu0 0
          %1499 = vmatprep.subr.bf16.mxu0 0
          %1500 = vmatpush1.bf16.msra.mxu0 0
          %1501 = vmatprep.subr.bf16.mxu0 0
          %1502 = vmatpush1.bf16.msra.mxu0 %v1483
          %1503 = vmatprep.subr.bf16.mxu0 0
          %1504 = vmatpush1.bf16.msra.mxu0 %v1482
          %1505 = vmatprep.subr.bf16.mxu0 0
          %1506 = vmatpush2.bf16.msra.mxu0 0
          %1507 = vmatprep.subr.bf16.mxu0 0
          %1508 = vmatpush2.bf16.msra.mxu0 0
          %1509 = vmatprep.subr.bf16.mxu0 0
          %1510 = vmatpush2.bf16.msra.mxu0 0
          %1511 = vmatprep.subr.bf16.mxu0 0
          %1512 = vmatpush2.bf16.msra.mxu0 0
          %1513 = vmatprep.subr.bf16.mxu0 0
          %1514 = vmatpush2.bf16.msra.mxu0 0
          %1515 = vmatprep.subr.bf16.mxu0 0
          %1516 = vmatpush2.bf16.msra.mxu0 0
          %1517 = vmatprep.subr.bf16.mxu0 0
          %1518 = vmatpush2.bf16.msra.mxu0 0
          %1519 = vmatprep.subr.bf16.mxu0 0
          %1520 = vmatpush2.bf16.msra.mxu0 0
          %1521 = vmatprep.mubr.bf16.mxu0 0
          %1522 = vmatmul.mubr.bf16.gmra.mxu0 %v1487
          %v1523 = vpop.f32.mrf.mxu0
          %v1524 = vadd.f32 %v1445, %v1523
          %v1525 = vpop.f32.mrf.mxu0
          %v1526 = vpop.f32.mrf.mxu0
          %v1527 = vpop.f32.mrf.mxu0
          %1528 = vdwg.mxu0
          %v1529 = vld [vmem:[%s10] sm:$0x1]
          %v1531 = vlaneseq
          %v1532 = vshrl.u32 %v1531, 7
          %v1533 = vsub.s32 0, %v1532
          %v1534 = vrot.slane %v1529, %v1533
          %v1536 = vadd.f32 %v1524, %v1534
          %v1537 = vtanh.pop %v1536
          %v1538 = vpack.c.bf16 %v1537, %v1537
          %vm1539 = vcmask 125952
          %1540 = vst.msk [vmem:[#allocation2] sm:$0xf] %vm1539, %v1538
        $region76: #{tpu_custom_call.1} parent=71 // pred_fallthru
          _
        %v1541 = vld [vmem:[#allocation2] sm:$0xf]
        %v1542 = vld [vmem:[%s581] sm:$0xf]
        %v1543 = vld [vmem:[%s581 + $0x4] sm:$0xf]
        %v1544 = vld [vmem:[%s584] sm:$0x1]
        %v1546 = vlaneseq
        %v1547 = vshrl.u32 %v1546, 7
        %v1548 = vsub.s32 0, %v1547
        %v1549 = vrot.slane %v1544, %v1548
        %v1553 = vunpack.c.l.b16 %v1542
        %v1554 = vunpack.c.l.b16 %v1543
        %v1555 = vpack.c.b16 %v1554, %v1553
        %vm1557 = vcmask 130048
        %v1559 = vsel %vm1557, %v1541, 0
        %1561 = vmatprep.subr.bf16.mxu0 0
        %1562 = vmatpush1.bf16.msra.mxu0 0
        %1563 = vmatprep.subr.bf16.mxu0 0
        %1564 = vmatpush1.bf16.msra.mxu0 0
        %1565 = vmatprep.subr.bf16.mxu0 0
        %1566 = vmatpush1.bf16.msra.mxu0 0
        %1567 = vmatprep.subr.bf16.mxu0 0
        %1568 = vmatpush1.bf16.msra.mxu0 0
        %1569 = vmatprep.subr.bf16.mxu0 0
        %1570 = vmatpush1.bf16.msra.mxu0 0
        %1571 = vmatprep.subr.bf16.mxu0 0
        %1572 = vmatpush1.bf16.msra.mxu0 0
        %1573 = vmatprep.subr.bf16.mxu0 0
        %1574 = vmatpush1.bf16.msra.mxu0 0
        %1575 = vmatprep.subr.bf16.mxu0 0
        %1576 = vmatpush1.bf16.msra.mxu0 %v1555
        %1577 = vmatprep.subr.bf16.mxu0 0
        %1578 = vmatpush2.bf16.msra.mxu0 0
        %1579 = vmatprep.subr.bf16.mxu0 0
        %1580 = vmatpush2.bf16.msra.mxu0 0
        %1581 = vmatprep.subr.bf16.mxu0 0
        %1582 = vmatpush2.bf16.msra.mxu0 0
        %1583 = vmatprep.subr.bf16.mxu0 0
        %1584 = vmatpush2.bf16.msra.mxu0 0
        %1585 = vmatprep.subr.bf16.mxu0 0
        %1586 = vmatpush2.bf16.msra.mxu0 0
        %1587 = vmatprep.subr.bf16.mxu0 0
        %1588 = vmatpush2.bf16.msra.mxu0 0
        %1589 = vmatprep.subr.bf16.mxu0 0
        %1590 = vmatpush2.bf16.msra.mxu0 0
        %1591 = vmatprep.subr.bf16.mxu0 0
        %1592 = vmatpush2.bf16.msra.mxu0 0
        %1593 = vmatprep.mubr.bf16.mxu0 0
        %1594 = vmatmul.mubr.bf16.gmra.mxu0 %v1559
        %v1595 = vpop.f32.mrf.mxu0
        %v1596 = vadd.f32 %v1549, %v1595
        %v1597 = vpop.f32.mrf.mxu0
        %v1598 = vpop.f32.mrf.mxu0
        %v1599 = vpop.f32.mrf.mxu0
        %1600 = vdwg.mxu0
        %v1601 = vld [vmem:[%s577] sm:$0xff]
        %vm1602 = vcmp.gt.f32.partialorder %v1601, 0.0
        %v1603 = vsel %vm1602, %v1596, -inf
        %vm1604 = vcmask 64512
        %1605 = vst.msk [vmem:[%s591] sm:$0xff] %vm1604, %v1603
        %s1606 = sand.u32 %s354, 1
        %s1607 = scalar_lea.sflag [#allocation4], %s1606
        %s1608 = sand.u32 %s354, 1
        %s1609 = smul.addr %s1608, 8
        %s1610 = scalar_lea.vmem [#allocation3], %s1609
        %p1611 = scmp.lt.s32.totalorder %s33, 1
        %s1612 = scalar_select %p1611, %s33, 1
        %p1613 = scmp.lt.s32.totalorder %s34, 0
        %s1614 = scalar_select %p1613, %s34, 0
        %s1615 = sadd.s32 %s1614, %s1612
        %s1616 = smul.addr %s1615, 8
        %s1617 = scalar_lea.vmem %s14, %s1616
        // Predicated region
        $region77: #{tpu_custom_call.1} parent=71 // pred_check
          %p1618 = pneg %p364
        $region78: #{tpu_custom_call.1} parent=71 // pred_check_branch
          %1620 = sbr.rel (%p1618) target = $region80
        $region79: #{tpu_custom_call.1} parent=71 // pred_region
          %s1622 = ssub.s32 128, 128
          %1623 = vsyncadd %s1607, %s1622
          %s1624 = smul.addr %s33, 128
          %s1625 = scalar_lea.hbm %s13, %s1624
          %s1627 = sshll.u32 %s1610, 4
          %s1628 = int_to_ptr.vmem [resolvable:$true] %s1627
          %1630 = dma.vmem_to_hbm [thread:$0]  %s1628, 128, %s1625, %s1607
        $region80: #{tpu_custom_call.1} parent=71 // pred_fallthru
          _
        // Predicated region
        $region81: #{tpu_custom_call.1} parent=71 // pred_check
          %p1631 = pneg %p392
        $region82: #{tpu_custom_call.1} parent=71 // pred_check_branch
          %1633 = sbr.rel (%p1631) target = $region84
        $region83: #{tpu_custom_call.1} parent=71 // pred_region
          _
        $region84: #{tpu_custom_call.1} parent=71 // pred_fallthru
          _
      $region72: #{tpu_custom_call.1} parent=5 // pred_fallthru
        _
      %p1634 = scmp.le.s32.totalorder 2, %s24
      // Predicated region
      $region85: #{tpu_custom_call.1} parent=5 // pred_check
        %p1635 = pneg %p1634
      $region86: #{tpu_custom_call.1} parent=5 // pred_check_branch
        %1637 = sbr.rel (%p1635) target = $region88
      $region87: #{tpu_custom_call.1} parent=5 // pred_region
        %s1638 = ssub.s32 %s24, 2
        // Predicated region
        $region89: #{tpu_custom_call.1} parent=87 // pred_check
          %p1639 = pneg %p370
        $region90: #{tpu_custom_call.1} parent=87 // pred_check_branch
          %1641 = sbr.rel (%p1639) target = $region92
        $region91: #{tpu_custom_call.1} parent=87 // pred_region
          %s1642 = sand.u32 %s355, 1
          %s1643 = scalar_lea.sflag [#allocation4], %s1642
          %s1644 = sand.u32 %s355, 1
          %s1645 = smul.addr %s1644, 8
          %s1646 = scalar_lea.vmem [#allocation3], %s1645
          %1647 = dma.done %s1643, 128
        $region92: #{tpu_custom_call.1} parent=87 // pred_fallthru
          _
        // Predicated region
        $region93: #{tpu_custom_call.1} parent=87 // pred_check
          %p1648 = pneg %p398
        $region94: #{tpu_custom_call.1} parent=87 // pred_check_branch
          %1650 = sbr.rel (%p1648) target = $region96
        $region95: #{tpu_custom_call.1} parent=87 // pred_region
          %p1651 = scmp.lt.s32.totalorder %s35, 1
          %s1652 = scalar_select %p1651, %s35, 1
          %p1653 = scmp.lt.s32.totalorder %s36, 0
          %s1654 = scalar_select %p1653, %s36, 0
          %s1655 = sadd.s32 %s1654, %s1652
          %s1656 = smul.addr %s1655, 8
          %s1657 = scalar_lea.vmem %s14, %s1656
        $region96: #{tpu_custom_call.1} parent=87 // pred_fallthru
          _
      $region88: #{tpu_custom_call.1} parent=5 // pred_fallthru
        _
    $region6: #{tpu_custom_call.1} parent=1 // loop_footer
      %s28 = sadd.s32 1, %s24
    $region7: #{tpu_custom_call.1} parent=1 // loop_footer_branch
      %23 = sbr.rel target = $region3
    $region8: #{tpu_custom_call.1} parent=1 // loop_exit
      _
    %1658 = vsyncpa [#allocation4], 1
    %s1659 = scalar_lea.sflag [#allocation4], 1
    %1660 = vsyncpa %s1659, 1

</llo_original>
